<compile_context>
chip_gen: v7x
topology: tpu7x:2x2x1
jax: 0.10.0
libtpu: 0.0.40
codegen_flags: <defaults>
</compile_context>

<pallas_src>
from functools import partial

import jax
import jax.numpy as jnp
from jax.experimental import pallas as pl
from jax.experimental.pallas import tpu as pltpu


def _round_up(x, m):
    return ((x + m - 1) // m) * m


# --------------------------- Pallas kernels ---------------------------------

def _conv_im2col_kernel(p_ref, w_ref, b_ref, onchw_ref, obf_ref):
    """One im2col matmul tile of the 3x3 conv + bias + ReLU.

    p_ref    : (1, TM, K9p) bf16    w_ref : (K9p, Cout) bf16   b_ref : (1, Cout) f32
    onchw_ref: (1, Cout, TM) f32    (NCHW layout folded into the store)
    obf_ref  : (TM, Cout)   bf16    (flattened head input)
    """
    y = jnp.dot(p_ref[0], w_ref[...], preferred_element_type=jnp.float32)
    y = jnp.maximum(y + b_ref[...], 0.0)
    onchw_ref[0] = y.T                       # fold the NCHW transpose in-kernel
    obf_ref[...] = y.astype(jnp.bfloat16)


def _pick_tm(hw_pad, k9_pad, cout, budget=24 * 1024 * 1024):
    """Largest 256-multiple row tile that divides hw_pad and fits VMEM budget."""
    for t in (1024, 512, 256):
        if hw_pad % t != 0:
            continue
        need = (2 * t * k9_pad * 2          # patch block, double-buffered, bf16
                + 2 * cout * t * 4          # f32 NCHW out block, double-buffered
                + 2 * t * cout * 2          # bf16 flat out block, double-buffered
                + k9_pad * cout * 2)        # weight
        if need <= budget:
            return t
    return 256


def conv3x3_relu_im2col(x_nhwc, w9_bf16, b_row, *, hw_pad, tm):
    """3x3 stride-1 pad-1 conv + ReLU as a tiled im2col matmul.

    Returns (feat_nchw f32 (B, Cout, hw_pad), feat_bf16 (B*hw_pad, Cout)).
    """
    B, H, W, Cin = x_nhwc.shape
    Cout = b_row.shape[-1]
    K9 = 9 * Cin
    K9_pad = w9_bf16.shape[0]
    HW = H * W
    m_blocks = hw_pad // tm

    # Wrapper-side im2col, built entirely in bf16 (cast before pad/concat).
    # TODO(synk): for non-toy image sizes, replace the materialized im2col with
    # an in-kernel haloed-row-band DMA (memory_space=pl.ANY + make_async_copy).
    x_bf = x_nhwc.astype(jnp.bfloat16)
    x_p = jnp.pad(x_bf, ((0, 0), (1, 1), (1, 1), (0, 0)))
    taps = [x_p[:, dy:dy + H, dx:dx + W, :] for dy in range(3) for dx in range(3)]
    patches = jnp.concatenate(taps, axis=-1).reshape(B, HW, K9)
    patches = jnp.pad(patches, ((0, 0), (0, hw_pad - HW), (0, K9_pad - K9)))

    out_nchw, out_bf = pl.pallas_call(
        _conv_im2col_kernel,
        out_shape=(jax.ShapeDtypeStruct((B, Cout, hw_pad), jnp.float32),
                   jax.ShapeDtypeStruct((B * hw_pad, Cout), jnp.bfloat16)),
        grid=(B, m_blocks),
        in_specs=[
            pl.BlockSpec((1, tm, K9_pad), lambda b, m: (b, m, 0)),
            pl.BlockSpec((K9_pad, Cout), lambda b, m: (0, 0)),
            pl.BlockSpec((1, Cout), lambda b, m: (0, 0)),
        ],
        out_specs=(
            pl.BlockSpec((1, Cout, tm), lambda b, m: (b, 0, m)),
            pl.BlockSpec((tm, Cout), lambda b, m: (b * m_blocks + m, 0)),
        ),
        compiler_params=pltpu.CompilerParams(
            dimension_semantics=("parallel", "parallel"),
            vmem_limit_bytes=40 * 1024 * 1024),
    )(patches, w9_bf16, b_row)
    return out_nchw, out_bf


def _fused_head_kernel(p_ref, feat_ref, boxf_ref, boxw_ref, boxb_ref,
                       cnnw_ref, cnnb_ref, fwb_ref, fwc_ref, fb_ref,
                       out_ref, rois_acc, *, k_pad):
    """Fused roi_align + cnn_emb + box_emb + fusion_linear, tiled over B*HW.

    p_ref   : (4*Kp, tn) bf16   interpolation-matrix column block (bin-major rows)
    feat_ref: (tn, Cdec) bf16   conv-feature row block
    rois_acc: (4*Kp, Cdec) f32  ROI-feature accumulator (VMEM scratch)
    """
    n = pl.program_id(0)

    @pl.when(n == 0)
    def _():
        rois_acc[...] = jnp.zeros_like(rois_acc)

    # roi_align(2x2) as one MXU matmul per contraction block, f32 accumulation.
    rois_acc[...] += jnp.dot(p_ref[...], feat_ref[...],
                             preferred_element_type=jnp.float32)

    @pl.when(n == pl.num_programs(0) - 1)
    def _():
        rois = rois_acc[...]                                    # (4*Kp, Cdec)
        # (Kp, 4*Cdec): 4 contiguous sublane slices concatenated along lanes,
        # matching the bin-major-reordered cnn_emb weight -> ONE 1024-deep matmul.
        rois_k = jnp.concatenate(
            [rois[s * k_pad:(s + 1) * k_pad, :] for s in range(4)],
            axis=1).astype(jnp.bfloat16)
        cnn_feat = jnp.maximum(
            jnp.dot(rois_k, cnnw_ref[...],
                    preferred_element_type=jnp.float32) + cnnb_ref[...], 0.0)

        # box_emb: Linear(4, Fb) + ReLU.
        box_h = jnp.maximum(
            jnp.dot(boxf_ref[...], boxw_ref[...],
                    preferred_element_type=jnp.float32) + boxb_ref[...], 0.0)

        # fusion_linear(concat([box_h, cnn_feat])) == row-split weight matmuls.
        out_ref[...] = (
            jnp.dot(box_h, fwb_ref[...], preferred_element_type=jnp.float32)
            + jnp.dot(cnn_feat, fwc_ref[...], preferred_element_type=jnp.float32)
            + fb_ref[...])


def fused_head(P_bf16, feat_bf16, box_feat, box_w, box_b_row,
               cnn_w_bin, cnn_b_row, fus_w_box, fus_w_cnn, fus_b_row, *, tn):
    R, M = P_bf16.shape                       # R = 4 * K_pad
    K_pad = R // 4
    Cdec = feat_bf16.shape[-1]
    Fout = fus_b_row.shape[-1]
    n_blocks = M // tn
    return pl.pallas_call(
        partial(_fused_head_kernel, k_pad=K_pad),
        out_shape=jax.ShapeDtypeStruct((K_pad, Fout), jnp.float32),
        grid=(n_blocks,),
        in_specs=[
            pl.BlockSpec((R, tn), lambda n: (0, n)),
            pl.BlockSpec((tn, Cdec), lambda n: (n, 0)),
            pl.BlockSpec(box_feat.shape, lambda n: (0, 0)),
            pl.BlockSpec(box_w.shape, lambda n: (0, 0)),
            pl.BlockSpec(box_b_row.shape, lambda n: (0, 0)),
            pl.BlockSpec(cnn_w_bin.shape, lambda n: (0, 0)),
            pl.BlockSpec(cnn_b_row.shape, lambda n: (0, 0)),
            pl.BlockSpec(fus_w_box.shape, lambda n: (0, 0)),
            pl.BlockSpec(fus_w_cnn.shape, lambda n: (0, 0)),
            pl.BlockSpec(fus_b_row.shape, lambda n: (0, 0)),
        ],
        out_specs=pl.BlockSpec((K_pad, Fout), lambda n: (0, 0)),
        scratch_shapes=[pltpu.VMEM((R, Cdec), jnp.float32)],
        compiler_params=pltpu.CompilerParams(
            dimension_semantics=("arbitrary",),
            vmem_limit_bytes=40 * 1024 * 1024),
    )(P_bf16, feat_bf16, box_feat, box_w, box_b_row,
      cnn_w_bin, cnn_b_row, fus_w_box, fus_w_cnn, fus_b_row)


# ----------------- ROI-align interpolation matrix (wrapper side) -------------

def build_roi_interp_matrix(boxes, box_batch, H, W, *, hw_stride, num_cols,
                            k_pad, pooled=2, sampling_ratio=2):
    """torchvision-style roi_align(output 2x2, spatial_scale=1, aligned=False)
    expressed as an interpolation matrix P (4*K_pad, num_cols), bin-major rows
    (row = (py*2+px)*K_pad + k), built via scatter-add (no one-hot matmuls).

    # TODO(synk): torchvision's default sampling_ratio=-1 adapts the sample grid
    # per-ROI (data-dependent shapes); a fixed sampling_ratio=2 is used instead.
    # TODO(synk): at production sizes pass the (index, weight) pairs via
    # SMEM/PrefetchScalarGridSpec and gather rows in-kernel instead of dense P.
    """
    K = boxes.shape[0]
    R = pooled * pooled * k_pad
    x1, y1, x2, y2 = boxes[:, 0], boxes[:, 1], boxes[:, 2], boxes[:, 3]
    roi_w = jnp.maximum(x2 - x1, 1.0)
    roi_h = jnp.maximum(y2 - y1, 1.0)
    bin_w = roi_w / pooled
    bin_h = roi_h / pooled
    pidx = jnp.arange(pooled, dtype=jnp.float32)
    sidx = jnp.arange(sampling_ratio, dtype=jnp.float32)
    ys = (y1[:, None, None] + pidx[None, :, None] * bin_h[:, None, None]
          + (sidx[None, None, :] + 0.5) * bin_h[:, None, None] / sampling_ratio)
    xs = (x1[:, None, None] + pidx[None, :, None] * bin_w[:, None, None]
          + (sidx[None, None, :] + 0.5) * bin_w[:, None, None] / sampling_ratio)
    shp = (K, pooled, pooled, sampling_ratio, sampling_ratio)
    y = jnp.broadcast_to(ys[:, :, None, :, None], shp)
    x = jnp.broadcast_to(xs[:, None, :, None, :], shp)

    valid = ((y >= -1.0) & (y <= H) & (x >= -1.0) & (x <= W)).astype(jnp.float32)
    yc = jnp.maximum(y, 0.0)
    xc = jnp.maximum(x, 0.0)
    y_low = jnp.minimum(jnp.floor(yc).astype(jnp.int32), H - 1)
    x_low = jnp.minimum(jnp.floor(xc).astype(jnp.int32), W - 1)
    y_high = jnp.minimum(y_low + 1, H - 1)
    x_high = jnp.minimum(x_low + 1, W - 1)
    yc = jnp.where(y_low >= H - 1, jnp.float32(H - 1), yc)
    xc = jnp.where(x_low >= W - 1, jnp.float32(W - 1), xc)
    ly = yc - y_low.astype(jnp.float32)
    lx = xc - x_low.astype(jnp.float32)
    hy, hx = 1.0 - ly, 1.0 - lx
    inv_count = 1.0 / float(sampling_ratio * sampling_ratio)
    w00 = hy * hx * valid * inv_count
    w01 = hy * lx * valid * inv_count
    w10 = ly * hx * valid * inv_count
    w11 = ly * lx * valid * inv_count

    base = box_batch[:, None, None, None, None].astype(jnp.int32) * hw_stride
    c00 = base + y_low * W + x_low
    c01 = base + y_low * W + x_high
    c10 = base + y_high * W + x_low
    c11 = base + y_high * W + x_high

    kk = jnp.arange(K, dtype=jnp.int32)
    sbin = (jnp.arange(pooled, dtype=jnp.int32)[:, None] * pooled
            + jnp.arange(pooled, dtype=jnp.int32)[None, :])          # (ph, pw)
    rows = sbin[None, :, :, None, None] * k_pad + kk[:, None, None, None, None]
    rows = jnp.broadcast_to(rows, shp)

    cols = jnp.stack([c00, c01, c10, c11], axis=-1).reshape(-1)
    vals = jnp.stack([w00, w01, w10, w11], axis=-1).reshape(-1)
    rows = jnp.broadcast_to(rows[..., None], shp + (4,)).reshape(-1)

    # Sparse build via scatter-add (duplicated corner indices sum, like roi_align).
    P = jnp.zeros((R, num_cols), jnp.float32).at[rows, cols].add(vals)
    return P


# --------------------------- GraphBase model ---------------------------------

class GraphBasePallas:
    def __init__(self, height, width, in_channels=32, cnn_emb_feat=128,
                 box_emb_feat=64, gcn_out_feat=128, key=None):
        self.height = float(height)
        self.width = float(width)
        dec_ch = 256  # hard-coded 256 in nn.Conv2d(in_channels, 256, ...)
        self.dec_ch = dec_ch
        k = jax.random.split(key, 4)

        def kaiming(kk, shape, fan_out):
            return jax.random.normal(kk, shape, jnp.float32) * jnp.sqrt(2.0 / fan_out)

        # decode_out: Conv2d(in_channels, 256, 3, 1, 1) + ReLU
        conv_w = kaiming(k[0], (3, 3, in_channels, dec_ch), dec_ch * 9)
        conv_b = jnp.zeros((dec_ch,), jnp.float32)
        # box_emb: Linear(4, box_emb_feat) + ReLU   (norm_box_flag=False)
        self.box_w = kaiming(k[1], (4, box_emb_feat), box_emb_feat)
        box_b = jnp.zeros((box_emb_feat,), jnp.float32)
        # cnn_emb: Linear(256*2*2, cnn_emb_feat) + ReLU (PyTorch rows: c*4 + s)
        cnn_w = kaiming(k[2], (dec_ch * 2 * 2, cnn_emb_feat), cnn_emb_feat)
        cnn_b = jnp.zeros((cnn_emb_feat,), jnp.float32)
        # fusion_linear: Linear(box_emb_feat + cnn_emb_feat, gcn_out_feat)
        emb_feat = cnn_emb_feat + box_emb_feat
        fus_w = kaiming(k[3], (emb_feat, gcn_out_feat), gcn_out_feat)
        fus_b = jnp.zeros((gcn_out_feat,), jnp.float32)

        # ----- derived kernel-friendly parameter forms (computed once) -----
        k9 = 9 * in_channels
        self.k9_pad = _round_up(k9, 128)           # 288 -> 384: clean MXU K tiles
        w9 = conv_w.reshape(k9, dec_ch)
        self.w9_bf16 = jnp.pad(
            w9, ((0, self.k9_pad - k9), (0, 0))).astype(jnp.bfloat16)
        self.conv_b_row = conv_b.reshape(1, dec_ch)
        # cnn weight reordered bin-major (rows s*Cdec + c) so the head does a
        # single (K, 4*Cdec) @ (4*Cdec, Fc) matmul.
        self.cnn_w_bin = (cnn_w.reshape(dec_ch, 4, cnn_emb_feat)
                          .transpose(1, 0, 2)
                          .reshape(4 * dec_ch, cnn_emb_feat)
                          .astype(jnp.bfloat16))
        self.cnn_b_row = cnn_b.reshape(1, cnn_emb_feat)
        self.box_b_row = box_b.reshape(1, box_emb_feat)
        # concat order in the reference is [box_emb_out, cnn_emb_out]
        self.fus_w_box = fus_w[:box_emb_feat]
        self.fus_w_cnn = fus_w[box_emb_feat:]
        self.fus_b_row = fus_b.reshape(1, gcn_out_feat)

    def get_box_feat(self, boxes):
        box_w = boxes[:, 2] - boxes[:, 0]
        box_h = boxes[:, 3] - boxes[:, 1]
        ctr_x = (boxes[:, 2] + boxes[:, 0]) / 2.0
        ctr_y = (boxes[:, 3] + boxes[:, 1]) / 2.0
        return jnp.stack((ctr_x / self.width, ctr_y / self.height,
                          box_w / self.width, box_h / self.height), axis=1)

    def __call__(self, input_nchw, cell_boxes):
        boxes = jnp.concatenate(cell_boxes, axis=0)
        box_batch = jnp.concatenate([
            jnp.full((cb.shape[0],), i, jnp.int32)
            for i, cb in enumerate(cell_boxes)])
        B, _, H, W = input_nchw.shape
        HW = H * W
        hw_pad = _round_up(HW, 256)                 # no single-tile fallback
        tm = _pick_tm(hw_pad, self.k9_pad, self.dec_ch)
        K = boxes.shape[0]
        K_pad = _round_up(K, 8)                     # sublane-aligned box count

        # CNN branch: conv as tiled im2col matmuls (Pallas kernel 1).
        x_nhwc = jnp.transpose(input_nchw.astype(jnp.bfloat16), (0, 2, 3, 1))
        feat_nchw, feat_bf = conv3x3_relu_im2col(
            x_nhwc, self.w9_bf16, self.conv_b_row, hw_pad=hw_pad, tm=tm)
        # NCHW layout was written by the kernel itself; this is a free reshape.
        cnn_decode_feat = feat_nchw[:, :, :HW].reshape(B, self.dec_ch, H, W)

        # roi_align as a sparse-built interpolation matrix (scatter-add).
        P = build_roi_interp_matrix(
            boxes, box_batch, H, W, hw_stride=hw_pad, num_cols=B * hw_pad,
            k_pad=K_pad).astype(jnp.bfloat16)

        # box branch features (tiny element-wise prep), padded to K_pad rows.
        box_feat = self.get_box_feat(boxes)
        box_feat_p = jnp.pad(box_feat, ((0, K_pad - K), (0, 0)))

        # Fused roi_align + cnn_emb + box_emb + fusion_linear (Pallas kernel 2),
        # tiled over the B*HW contraction dimension.
        tn = next(t for t in (2048, 1024, 512, 256) if (B * hw_pad) % t == 0)
        fused = fused_head(P, feat_bf, box_feat_p,
                           self.box_w, self.box_b_row,
                           self.cnn_w_bin, self.cnn_b_row,
                           self.fus_w_box, self.fus_w_cnn, self.fus_b_row,
                           tn=tn)
        fusion_feat = fused[:K]

        # TODO(synk): DGCNNModule / GravnetModule graph layers are not defined in
        # the provided source; graph propagation is skipped (feat := fusion_feat).
        feat = fusion_feat
        graphs = None
        return feat, graphs, fusion_feat, cnn_decode_feat


# --------------------------------- main --------------------------------------

if __name__ == "__main__":
    key = jax.random.PRNGKey(0)
    k_in, k_b1, k_b2, k_param = jax.random.split(key, 4)

    B, Cin, H, W = 2, 32, 16, 16
    height, width = 16.0, 16.0   # box coordinate space (same as feature map)

    x = jax.random.normal(k_in, (B, Cin, H, W), jnp.float32)

    def make_boxes(k, n):
        xy = jax.random.uniform(k, (n, 2), minval=0.0, maxval=width - 5.0)
        wh = jax.random.uniform(jax.random.fold_in(k, 1), (n, 2),
                                minval=1.0, maxval=4.0)
        return jnp.concatenate([xy, xy + wh], axis=1)   # (x1, y1, x2, y2)

    cell_boxes = [make_boxes(k_b1, 5), make_boxes(k_b2, 3)]

    model = GraphBasePallas(height, width, in_channels=Cin,
                            cnn_emb_feat=128, box_emb_feat=64,
                            gcn_out_feat=128, key=k_param)

    fwd = jax.jit(lambda inp, cbs: model(inp, cbs))
    feat, graphs, fusion_feat, cnn_decode_feat = fwd(x, cell_boxes)
    jax.block_until_ready((feat, fusion_feat, cnn_decode_feat))

    assert feat.shape == (8, 128)
    assert fusion_feat.shape == (8, 128)
    assert cnn_decode_feat.shape == (B, 256, H, W)
    assert bool(jnp.all(jnp.isfinite(feat)))
    assert bool(jnp.all(jnp.isfinite(cnn_decode_feat)))
    print("KERNEL_OK")
</pallas_src>

<mosaic_0001>
module attributes {stable_mosaic.version = 11 : i64} {
  func.func private @main(%arg0: i32) attributes {dimension_semantics = [#tpu.dimension_semantics<core_parallel>], iteration_bounds = array<i64: 2>, tpu.core_type = #tpu.core_type<sc_scalar_subcore>, window_params = []} {
    return
  }
}

module attributes {stable_mosaic.version = 11 : i64} {
  func.func private @main(%arg0: i32) attributes {dimension_semantics = [#tpu.dimension_semantics<core_parallel>], iteration_bounds = array<i64: 2>, tpu.core_type = #tpu.core_type<sc_scalar_subcore>, window_params = []} {
    return
  }
}

module attributes {stable_mosaic.version = 11 : i64} {
  func.func @_conv_im2col_kernel(%arg0: i32, %arg1: i32, %arg2: memref<1x256x384xbf16, #tpu.memory_space<vmem>>, %arg3: memref<384x256xbf16, #tpu.memory_space<vmem>>, %arg4: memref<1x256xf32, #tpu.memory_space<vmem>>, %arg5: memref<1x256x256xf32, #tpu.memory_space<vmem>>, %arg6: memref<256x256xbf16, #tpu.memory_space<vmem>>) attributes {dimension_semantics = [#tpu.dimension_semantics<parallel>, #tpu.dimension_semantics<parallel>], iteration_bounds = array<i64: 2, 1>, scalar_prefetch = 0 : i64, scratch_operands = 0 : i64, tpu.core_type = #tpu.core_type<tc>, window_params = [{transform_indices = @transform_0, window_bounds = array<i64: 1, 256, 384>}, {pipeline_mode = #tpu.pipeline_mode<synchronous>, transform_indices = @transform_1, window_bounds = array<i64: 384, 256>}, {pipeline_mode = #tpu.pipeline_mode<synchronous>, transform_indices = @transform_2, window_bounds = array<i64: 1, 256>}, {transform_indices = @transform_3, window_bounds = array<i64: 1, 256, 256>}, {transform_indices = @transform_4, window_bounds = array<i64: 256, 256>}]} {
    %c0 = arith.constant 0 : index
    %c0_0 = arith.constant 0 : index
    %c0_1 = arith.constant 0 : index
    %0 = vector.load %arg2[%c0, %c0_0, %c0_1] : memref<1x256x384xbf16, #tpu.memory_space<vmem>>, vector<1x256x384xbf16>
    %1 = vector.shape_cast %0 : vector<1x256x384xbf16> to vector<256x384xbf16>
    %c0_2 = arith.constant 0 : index
    %c0_3 = arith.constant 0 : index
    %2 = vector.load %arg3[%c0_2, %c0_3] : memref<384x256xbf16, #tpu.memory_space<vmem>>, vector<384x256xbf16>
    %cst = arith.constant dense<0.000000e+00> : vector<256x256xf32>
    %3 = tpu.matmul %1, %2, %cst {dimension_numbers = #tpu.dot_dimension_numbers<[1], [0], [0], [1], [0, 0, 1, 1], [], []>} : vector<256x384xbf16>, vector<384x256xbf16>, vector<256x256xf32> -> vector<256x256xf32>
    %c0_4 = arith.constant 0 : index
    %c0_5 = arith.constant 0 : index
    %4 = vector.load %arg4[%c0_4, %c0_5] : memref<1x256xf32, #tpu.memory_space<vmem>>, vector<1x256xf32>
    %5 = vector.broadcast %4 : vector<1x256xf32> to vector<256x256xf32>
    %6 = arith.addf %3, %5 : vector<256x256xf32>
    %cst_6 = arith.constant 0.000000e+00 : f32
    %7 = vector.broadcast %cst_6 : f32 to vector<256x256xf32>
    %8 = arith.maximumf %6, %7 : vector<256x256xf32>
    %9 = tpu.transpose %8, [1, 0] : vector<256x256xf32> -> vector<256x256xf32>
    %c0_7 = arith.constant 0 : index
    %c0_8 = arith.constant 0 : index
    %c0_9 = arith.constant 0 : index
    %10 = vector.load %arg5[%c0_7, %c0_8, %c0_9] : memref<1x256x256xf32, #tpu.memory_space<vmem>>, vector<1x256x256xf32>
    %11 = vector.shape_cast %10 : vector<1x256x256xf32> to vector<256x256xf32>
    %12 = vector.shape_cast %9 : vector<256x256xf32> to vector<1x256x256xf32>
    tpu.vector_store %arg5[%c0_7, %c0_8, %c0_9], %12 {strides = array<i32>} : memref<1x256x256xf32, #tpu.memory_space<vmem>>, vector<1x256x256xf32>,
    %13 = arith.truncf %8 : vector<256x256xf32> to vector<256x256xbf16>
    %c0_10 = arith.constant 0 : index
    %c0_11 = arith.constant 0 : index
    %14 = vector.load %arg6[%c0_10, %c0_11] : memref<256x256xbf16, #tpu.memory_space<vmem>>, vector<256x256xbf16>
    tpu.vector_store %arg6[%c0_10, %c0_11], %13 {strides = array<i32>} : memref<256x256xbf16, #tpu.memory_space<vmem>>, vector<256x256xbf16>,
    return
  }
  func.func @transform_0(%arg0: i32, %arg1: i32) -> (i32, i32, i32) {
    %c0_i32 = arith.constant 0 : i32
    %c0_i32_0 = arith.constant 0 : i32
    return %arg0, %arg1, %c0_i32 : i32, i32, i32
  }
  func.func @transform_1(%arg0: i32, %arg1: i32) -> (i32, i32) {
    %c0_i32 = arith.constant 0 : i32
    %c0_i32_0 = arith.constant 0 : i32
    %c0_i32_1 = arith.constant 0 : i32
    return %c0_i32, %c0_i32_0 : i32, i32
  }
  func.func @transform_2(%arg0: i32, %arg1: i32) -> (i32, i32) {
    %c0_i32 = arith.constant 0 : i32
    %c0_i32_0 = arith.constant 0 : i32
    %c0_i32_1 = arith.constant 0 : i32
    return %c0_i32, %c0_i32_0 : i32, i32
  }
  func.func @transform_3(%arg0: i32, %arg1: i32) -> (i32, i32, i32) {
    %c0_i32 = arith.constant 0 : i32
    %c0_i32_0 = arith.constant 0 : i32
    return %arg0, %c0_i32, %arg1 : i32, i32, i32
  }
  func.func @transform_4(%arg0: i32, %arg1: i32) -> (i32, i32) {
    %c1_i32 = arith.constant 1 : i32
    %0 = arith.muli %arg0, %c1_i32 : i32
    %1 = arith.addi %0, %arg1 : i32
    %c0_i32 = arith.constant 0 : i32
    %c0_i32_0 = arith.constant 0 : i32
    return %1, %c0_i32 : i32, i32
  }
}

module attributes {stable_mosaic.version = 11 : i64} {
  func.func @_fused_head_kernel(%arg0: i32, %arg1: memref<32x512xbf16, #tpu.memory_space<vmem>>, %arg2: memref<512x256xbf16, #tpu.memory_space<vmem>>, %arg3: memref<8x4xf32, #tpu.memory_space<vmem>>, %arg4: memref<4x64xf32, #tpu.memory_space<vmem>>, %arg5: memref<1x64xf32, #tpu.memory_space<vmem>>, %arg6: memref<1024x128xbf16, #tpu.memory_space<vmem>>, %arg7: memref<1x128xf32, #tpu.memory_space<vmem>>, %arg8: memref<64x128xf32, #tpu.memory_space<vmem>>, %arg9: memref<128x128xf32, #tpu.memory_space<vmem>>, %arg10: memref<1x128xf32, #tpu.memory_space<vmem>>, %arg11: memref<8x128xf32, #tpu.memory_space<vmem>>, %arg12: memref<32x256xf32, #tpu.memory_space<vmem>>) attributes {dimension_semantics = [#tpu.dimension_semantics<arbitrary>], iteration_bounds = array<i64: 1>, scalar_prefetch = 0 : i64, scratch_operands = 1 : i64, tpu.core_type = #tpu.core_type<tc>, window_params = [{transform_indices = @transform_0, window_bounds = array<i64: 32, 512>}, {transform_indices = @transform_1, window_bounds = array<i64: 512, 256>}, {pipeline_mode = #tpu.pipeline_mode<synchronous>, transform_indices = @transform_2, window_bounds = array<i64: 8, 4>}, {pipeline_mode = #tpu.pipeline_mode<synchronous>, transform_indices = @transform_3, window_bounds = array<i64: 4, 64>}, {pipeline_mode = #tpu.pipeline_mode<synchronous>, transform_indices = @transform_4, window_bounds = array<i64: 1, 64>}, {pipeline_mode = #tpu.pipeline_mode<synchronous>, transform_indices = @transform_5, window_bounds = array<i64: 1024, 128>}, {pipeline_mode = #tpu.pipeline_mode<synchronous>, transform_indices = @transform_6, window_bounds = array<i64: 1, 128>}, {pipeline_mode = #tpu.pipeline_mode<synchronous>, transform_indices = @transform_7, window_bounds = array<i64: 64, 128>}, {pipeline_mode = #tpu.pipeline_mode<synchronous>, transform_indices = @transform_8, window_bounds = array<i64: 128, 128>}, {pipeline_mode = #tpu.pipeline_mode<synchronous>, transform_indices = @transform_9, window_bounds = array<i64: 1, 128>}, {pipeline_mode = #tpu.pipeline_mode<synchronous>, transform_indices = @transform_10, window_bounds = array<i64: 8, 128>}]} {
    %c0_i32 = arith.constant 0 : i32
    %0 = arith.cmpi eq, %arg0, %c0_i32 : i32
    %1 = arith.extui %0 : i1 to i32
    %c0_i32_0 = arith.constant 0 : i32
    %2 = arith.cmpi ne, %1, %c0_i32_0 : i32
    scf.if %2 {
      %cst_10 = arith.constant 0.000000e+00 : f32
      %12 = vector.broadcast %cst_10 : f32 to vector<32x256xf32>
      %c0_11 = arith.constant 0 : index
      %c0_12 = arith.constant 0 : index
      %13 = vector.load %arg12[%c0_11, %c0_12] : memref<32x256xf32, #tpu.memory_space<vmem>>, vector<32x256xf32>
      tpu.vector_store %arg12[%c0_11, %c0_12], %12 {strides = array<i32>} : memref<32x256xf32, #tpu.memory_space<vmem>>, vector<32x256xf32>,
    } else {
    }
    %c0 = arith.constant 0 : index
    %c0_1 = arith.constant 0 : index
    %3 = vector.load %arg12[%c0, %c0_1] : memref<32x256xf32, #tpu.memory_space<vmem>>, vector<32x256xf32>
    %c0_2 = arith.constant 0 : index
    %c0_3 = arith.constant 0 : index
    %4 = vector.load %arg1[%c0_2, %c0_3] : memref<32x512xbf16, #tpu.memory_space<vmem>>, vector<32x512xbf16>
    %c0_4 = arith.constant 0 : index
    %c0_5 = arith.constant 0 : index
    %5 = vector.load %arg2[%c0_4, %c0_5] : memref<512x256xbf16, #tpu.memory_space<vmem>>, vector<512x256xbf16>
    %cst = arith.constant dense<0.000000e+00> : vector<32x256xf32>
    %6 = tpu.matmul %4, %5, %cst {dimension_numbers = #tpu.dot_dimension_numbers<[1], [0], [0], [1], [0, 0, 1, 1], [], []>} : vector<32x512xbf16>, vector<512x256xbf16>, vector<32x256xf32> -> vector<32x256xf32>
    %7 = arith.addf %3, %6 : vector<32x256xf32>
    %c0_6 = arith.constant 0 : index
    %c0_7 = arith.constant 0 : index
    %8 = vector.load %arg12[%c0_6, %c0_7] : memref<32x256xf32, #tpu.memory_space<vmem>>, vector<32x256xf32>
    tpu.vector_store %arg12[%c0_6, %c0_7], %7 {strides = array<i32>} : memref<32x256xf32, #tpu.memory_space<vmem>>, vector<32x256xf32>,
    %c0_i32_8 = arith.constant 0 : i32
    %9 = arith.cmpi eq, %arg0, %c0_i32_8 : i32
    %10 = arith.extui %9 : i1 to i32
    %c0_i32_9 = arith.constant 0 : i32
    %11 = arith.cmpi ne, %10, %c0_i32_9 : i32
    scf.if %11 {
      %c0_10 = arith.constant 0 : index
      %c0_11 = arith.constant 0 : index
      %12 = vector.load %arg12[%c0_10, %c0_11] : memref<32x256xf32, #tpu.memory_space<vmem>>, vector<32x256xf32>
      %13 = vector.extract_strided_slice %12 {offsets = [0, 0], sizes = [8, 256], strides = [1, 1]} : vector<32x256xf32> to vector<8x256xf32>
      %14 = vector.extract_strided_slice %12 {offsets = [8, 0], sizes = [8, 256], strides = [1, 1]} : vector<32x256xf32> to vector<8x256xf32>
      %15 = vector.extract_strided_slice %12 {offsets = [16, 0], sizes = [8, 256], strides = [1, 1]} : vector<32x256xf32> to vector<8x256xf32>
      %16 = vector.extract_strided_slice %12 {offsets = [24, 0], sizes = [8, 256], strides = [1, 1]} : vector<32x256xf32> to vector<8x256xf32>
      %17 = tpu.concatenate %13, %14, %15, %16 in 1 : vector<8x256xf32>, vector<8x256xf32>, vector<8x256xf32>, vector<8x256xf32> -> vector<8x1024xf32>
      %18 = arith.truncf %17 : vector<8x1024xf32> to vector<8x1024xbf16>
      %c0_12 = arith.constant 0 : index
      %c0_13 = arith.constant 0 : index
      %19 = vector.load %arg6[%c0_12, %c0_13] : memref<1024x128xbf16, #tpu.memory_space<vmem>>, vector<1024x128xbf16>
      %cst_14 = arith.constant dense<0.000000e+00> : vector<8x128xf32>
      %20 = tpu.matmul %18, %19, %cst_14 {dimension_numbers = #tpu.dot_dimension_numbers<[1], [0], [0], [1], [0, 0, 1, 1], [], []>} : vector<8x1024xbf16>, vector<1024x128xbf16>, vector<8x128xf32> -> vector<8x128xf32>
      %c0_15 = arith.constant 0 : index
      %c0_16 = arith.constant 0 : index
      %21 = vector.load %arg7[%c0_15, %c0_16] : memref<1x128xf32, #tpu.memory_space<vmem>>, vector<1x128xf32>
      %22 = vector.broadcast %21 : vector<1x128xf32> to vector<8x128xf32>
      %23 = arith.addf %20, %22 : vector<8x128xf32>
      %cst_17 = arith.constant 0.000000e+00 : f32
      %24 = vector.broadcast %cst_17 : f32 to vector<8x128xf32>
      %25 = arith.maximumf %23, %24 : vector<8x128xf32>
      %c0_18 = arith.constant 0 : index
      %c0_19 = arith.constant 0 : index
      %26 = vector.load %arg3[%c0_18, %c0_19] : memref<8x4xf32, #tpu.memory_space<vmem>>, vector<8x4xf32>
      %c0_20 = arith.constant 0 : index
      %c0_21 = arith.constant 0 : index
      %27 = vector.load %arg4[%c0_20, %c0_21] : memref<4x64xf32, #tpu.memory_space<vmem>>, vector<4x64xf32>
      %cst_22 = arith.constant dense<0.000000e+00> : vector<8x64xf32>
      %28 = tpu.matmul %26, %27, %cst_22 {dimension_numbers = #tpu.dot_dimension_numbers<[1], [0], [0], [1], [0, 0, 1, 1], [], []>} : vector<8x4xf32>, vector<4x64xf32>, vector<8x64xf32> -> vector<8x64xf32>
      %c0_23 = arith.constant 0 : index
      %c0_24 = arith.constant 0 : index
      %29 = vector.load %arg5[%c0_23, %c0_24] : memref<1x64xf32, #tpu.memory_space<vmem>>, vector<1x64xf32>
      %30 = vector.broadcast %29 : vector<1x64xf32> to vector<8x64xf32>
      %31 = arith.addf %28, %30 : vector<8x64xf32>
      %cst_25 = arith.constant 0.000000e+00 : f32
      %32 = vector.broadcast %cst_25 : f32 to vector<8x64xf32>
      %33 = arith.maximumf %31, %32 : vector<8x64xf32>
      %c0_26 = arith.constant 0 : index
      %c0_27 = arith.constant 0 : index
      %34 = vector.load %arg8[%c0_26, %c0_27] : memref<64x128xf32, #tpu.memory_space<vmem>>, vector<64x128xf32>
      %cst_28 = arith.constant dense<0.000000e+00> : vector<8x128xf32>
      %35 = tpu.matmul %33, %34, %cst_28 {dimension_numbers = #tpu.dot_dimension_numbers<[1], [0], [0], [1], [0, 0, 1, 1], [], []>} : vector<8x64xf32>, vector<64x128xf32>, vector<8x128xf32> -> vector<8x128xf32>
      %c0_29 = arith.constant 0 : index
      %c0_30 = arith.constant 0 : index
      %36 = vector.load %arg9[%c0_29, %c0_30] : memref<128x128xf32, #tpu.memory_space<vmem>>, vector<128x128xf32>
      %cst_31 = arith.constant dense<0.000000e+00> : vector<8x128xf32>
      %37 = tpu.matmul %25, %36, %cst_31 {dimension_numbers = #tpu.dot_dimension_numbers<[1], [0], [0], [1], [0, 0, 1, 1], [], []>} : vector<8x128xf32>, vector<128x128xf32>, vector<8x128xf32> -> vector<8x128xf32>
      %38 = arith.addf %35, %37 : vector<8x128xf32>
      %c0_32 = arith.constant 0 : index
      %c0_33 = arith.constant 0 : index
      %39 = vector.load %arg10[%c0_32, %c0_33] : memref<1x128xf32, #tpu.memory_space<vmem>>, vector<1x128xf32>
      %40 = vector.broadcast %39 : vector<1x128xf32> to vector<8x128xf32>
      %41 = arith.addf %38, %40 : vector<8x128xf32>
      %c0_34 = arith.constant 0 : index
      %c0_35 = arith.constant 0 : index
      %42 = vector.load %arg11[%c0_34, %c0_35] : memref<8x128xf32, #tpu.memory_space<vmem>>, vector<8x128xf32>
      tpu.vector_store %arg11[%c0_34, %c0_35], %41 {strides = array<i32>} : memref<8x128xf32, #tpu.memory_space<vmem>>, vector<8x128xf32>,
    } else {
    }
    return
  }
  func.func @transform_0(%arg0: i32) -> (i32, i32) {
    %c0_i32 = arith.constant 0 : i32
    %c0_i32_0 = arith.constant 0 : i32
    return %c0_i32, %arg0 : i32, i32
  }
  func.func @transform_1(%arg0: i32) -> (i32, i32) {
    %c0_i32 = arith.constant 0 : i32
    %c0_i32_0 = arith.constant 0 : i32
    return %arg0, %c0_i32 : i32, i32
  }
  func.func @transform_2(%arg0: i32) -> (i32, i32) {
    %c0_i32 = arith.constant 0 : i32
    %c0_i32_0 = arith.constant 0 : i32
    %c0_i32_1 = arith.constant 0 : i32
    return %c0_i32, %c0_i32_0 : i32, i32
  }
  func.func @transform_3(%arg0: i32) -> (i32, i32) {
    %c0_i32 = arith.constant 0 : i32
    %c0_i32_0 = arith.constant 0 : i32
    %c0_i32_1 = arith.constant 0 : i32
    return %c0_i32, %c0_i32_0 : i32, i32
  }
  func.func @transform_4(%arg0: i32) -> (i32, i32) {
    %c0_i32 = arith.constant 0 : i32
    %c0_i32_0 = arith.constant 0 : i32
    %c0_i32_1 = arith.constant 0 : i32
    return %c0_i32, %c0_i32_0 : i32, i32
  }
  func.func @transform_5(%arg0: i32) -> (i32, i32) {
    %c0_i32 = arith.constant 0 : i32
    %c0_i32_0 = arith.constant 0 : i32
    %c0_i32_1 = arith.constant 0 : i32
    return %c0_i32, %c0_i32_0 : i32, i32
  }
  func.func @transform_6(%arg0: i32) -> (i32, i32) {
    %c0_i32 = arith.constant 0 : i32
    %c0_i32_0 = arith.constant 0 : i32
    %c0_i32_1 = arith.constant 0 : i32
    return %c0_i32, %c0_i32_0 : i32, i32
  }
  func.func @transform_7(%arg0: i32) -> (i32, i32) {
    %c0_i32 = arith.constant 0 : i32
    %c0_i32_0 = arith.constant 0 : i32
    %c0_i32_1 = arith.constant 0 : i32
    return %c0_i32, %c0_i32_0 : i32, i32
  }
  func.func @transform_8(%arg0: i32) -> (i32, i32) {
    %c0_i32 = arith.constant 0 : i32
    %c0_i32_0 = arith.constant 0 : i32
    %c0_i32_1 = arith.constant 0 : i32
    return %c0_i32, %c0_i32_0 : i32, i32
  }
  func.func @transform_9(%arg0: i32) -> (i32, i32) {
    %c0_i32 = arith.constant 0 : i32
    %c0_i32_0 = arith.constant 0 : i32
    %c0_i32_1 = arith.constant 0 : i32
    return %c0_i32, %c0_i32_0 : i32, i32
  }
  func.func @transform_10(%arg0: i32) -> (i32, i32) {
    %c0_i32 = arith.constant 0 : i32
    %c0_i32_0 = arith.constant 0 : i32
    %c0_i32_1 = arith.constant 0 : i32
    return %c0_i32, %c0_i32_0 : i32, i32
  }
}

</mosaic_0001>

<llo_original>
// kernel: _lambda_.2
$region0: #{_lambda_.2}
  #allocation0 [shape = 'u32[]', space=smem, size = 0x4, offset = 0x4, fixed_abs, tag = 'smem constant byte address 0x4 - core index']
  #allocation1 [shape = 'u32[144,128]{1,0:T(1,128)}', space=vmem, size = 0x12000, scoped, tag = 'internal scratch']
  %s0 = inlined_call_operand.vmem [shape: bf16[2,256,384], index: 0, kind: input, shape index: {}]
  %s1 = inlined_call_operand.vmem [shape: bf16[384,256], index: 1, kind: input, shape index: {}]
  %s2 = inlined_call_operand.vmem [shape: f32[1,256], index: 2, kind: input, shape index: {}]
  %s3 = inlined_call_operand.vmem [shape: f32[2,256,256], index: 3, kind: output, shape index: {0}]
  %s4 = inlined_call_operand.vmem [shape: bf16[512,256], index: 4, kind: output, shape index: {1}]
  %5 = xla_tuple %s3, %s4
  %s6 = sld [smem:[#allocation0]]
  $region53: #{_lambda_.2} parent=0
    _
  %s8 = ssub.s32 1, %s6
  %s9 = scalar_select 0, %s8, %s6
  loop: start=0, step=1, limit=4
  $region2: #{_lambda_.2} parent=0 // loop_pre_header
    _
  $region3: #{_lambda_.2} parent=0 // loop_header
    %s11 = sphi 0, %s15
    %p12 = scmp.ge.s32.totalorder %s11, 4
    %s18 = sphi 0, %s30
    %s19 = sphi 0, %s26
    %s20 = sphi 0, %s18
    %s21 = sphi 0, %s19
    %s22 = sphi 0, %s20
    %s23 = sphi 0, %s21
    %s35 = sphi 0, %s37
    %s38 = sphi 0, %s35
    %s39 = sphi 0, %s38
    %s55 = sphi 0, %s39
    %s59 = sphi 0, %s59
    %s61 = sphi 0, %s59
    %s62 = sphi 0, %s61
    %s76 = sphi 0, %s62
    %s80 = sphi 0, %s80
    %s82 = sphi 0, %s80
    %s83 = sphi 0, %s82
    %s97 = sphi 0, %s83
    %s105 = sphi 0, %s107
    %s108 = sphi 0, %s105
    %s109 = sphi 0, %s108
    %s125 = sphi 0, %s109
    %s133 = sphi 0, %s135
    %s136 = sphi 0, %s133
    %s137 = sphi 0, %s136
    %s153 = sphi 0, %s137
  $region4: #{_lambda_.2} parent=0 // loop_header_branch
    %14 = sbr.rel (%p12) target = $region8
  $region5: #{_lambda_.2} parent=0 // loop_body
    %s16 = ssub.s32 %s11, 1
    %s17 = ssub.s32 %s11, 2
    %s24 = sadd.s32 1, %s19
    %p25 = scmp.ge.s32.totalorder %s24, 1
    %s26 = scalar_select %p25, 0, %s24
    %s27 = sadd.s32 1, %s18
    %s28 = scalar_select %p25, %s27, %s18
    %p29 = scmp.ge.s32.totalorder %s28, 2
    %s30 = scalar_select %p29, 0, %s28
    %s31 = ssub.s32 %s18, %s30
    %s32 = ssub.s32 %s19, %s26
    %s33 = sor.u32 %s31, %s32
    %p34 = scmp.eq.s32.totalorder %s33, 0
    %s36 = sadd.s32 %s35, 1
    %s37 = scalar_select %p34, %s35, %s36
    %p40 = pneg %p34
    %p41 = scmp.eq.s32.totalorder %s11, 1
    %p42 = por %p40, %p41
    %p43 = scmp.ne.s32.totalorder %s35, %s38
    %p44 = scmp.eq.s32.totalorder %s11, 0
    %p45 = por %p43, %p44
    %p46 = scmp.ne.s32.totalorder %s35, %s38
    %p47 = scmp.eq.s32.totalorder %s16, 1
    %p48 = por %p46, %p47
    %p49 = scmp.ne.s32.totalorder %s38, %s39
    %p50 = scmp.eq.s32.totalorder %s16, 0
    %p51 = por %p49, %p50
    %p52 = scmp.ne.s32.totalorder %s38, %s39
    %p53 = scmp.eq.s32.totalorder %s17, 1
    %p54 = por %p52, %p53
    %p56 = scmp.ne.s32.totalorder %s39, %s55
    %p57 = scmp.eq.s32.totalorder %s17, 0
    %p58 = por %p56, %p57
    %s60 = sadd.s32 %s59, 1
    %p63 = scmp.eq.s32.totalorder %s11, 1
    %p64 = scmp.ne.s32.totalorder %s59, %s61
    %p65 = scmp.eq.s32.totalorder %s11, 0
    %p66 = por %p64, %p65
    %p67 = scmp.ne.s32.totalorder %s59, %s61
    %p68 = scmp.eq.s32.totalorder %s16, 1
    %p69 = por %p67, %p68
    %p70 = scmp.ne.s32.totalorder %s61, %s62
    %p71 = scmp.eq.s32.totalorder %s16, 0
    %p72 = por %p70, %p71
    %p73 = scmp.ne.s32.totalorder %s61, %s62
    %p74 = scmp.eq.s32.totalorder %s17, 1
    %p75 = por %p73, %p74
    %p77 = scmp.ne.s32.totalorder %s62, %s76
    %p78 = scmp.eq.s32.totalorder %s17, 0
    %p79 = por %p77, %p78
    %s81 = sadd.s32 %s80, 1
    %p84 = scmp.eq.s32.totalorder %s11, 1
    %p85 = scmp.ne.s32.totalorder %s80, %s82
    %p86 = scmp.eq.s32.totalorder %s11, 0
    %p87 = por %p85, %p86
    %p88 = scmp.ne.s32.totalorder %s80, %s82
    %p89 = scmp.eq.s32.totalorder %s16, 1
    %p90 = por %p88, %p89
    %p91 = scmp.ne.s32.totalorder %s82, %s83
    %p92 = scmp.eq.s32.totalorder %s16, 0
    %p93 = por %p91, %p92
    %p94 = scmp.ne.s32.totalorder %s82, %s83
    %p95 = scmp.eq.s32.totalorder %s17, 1
    %p96 = por %p94, %p95
    %p98 = scmp.ne.s32.totalorder %s83, %s97
    %p99 = scmp.eq.s32.totalorder %s17, 0
    %p100 = por %p98, %p99
    %s101 = ssub.s32 %s18, %s30
    %s102 = ssub.s32 %s19, %s26
    %s103 = sor.u32 %s101, %s102
    %p104 = scmp.eq.s32.totalorder %s103, 0
    %s106 = sadd.s32 %s105, 1
    %s107 = scalar_select %p104, %s105, %s106
    %p110 = pneg %p104
    %p111 = scmp.eq.s32.totalorder %s11, 1
    %p112 = por %p110, %p111
    %p113 = scmp.ne.s32.totalorder %s105, %s108
    %p114 = scmp.eq.s32.totalorder %s11, 0
    %p115 = por %p113, %p114
    %p116 = scmp.ne.s32.totalorder %s105, %s108
    %p117 = scmp.eq.s32.totalorder %s16, 1
    %p118 = por %p116, %p117
    %p119 = scmp.ne.s32.totalorder %s108, %s109
    %p120 = scmp.eq.s32.totalorder %s16, 0
    %p121 = por %p119, %p120
    %p122 = scmp.ne.s32.totalorder %s108, %s109
    %p123 = scmp.eq.s32.totalorder %s17, 1
    %p124 = por %p122, %p123
    %p126 = scmp.ne.s32.totalorder %s109, %s125
    %p127 = scmp.eq.s32.totalorder %s17, 0
    %p128 = por %p126, %p127
    %s129 = sadd.s32 %s18, %s19
    %s130 = sadd.s32 %s30, %s26
    %s131 = ssub.s32 %s129, %s130
    %p132 = scmp.eq.s32.totalorder %s131, 0
    %s134 = sadd.s32 %s133, 1
    %s135 = scalar_select %p132, %s133, %s134
    %p138 = pneg %p132
    %p139 = scmp.eq.s32.totalorder %s11, 1
    %p140 = por %p138, %p139
    %p141 = scmp.ne.s32.totalorder %s133, %s136
    %p142 = scmp.eq.s32.totalorder %s11, 0
    %p143 = por %p141, %p142
    %p144 = scmp.ne.s32.totalorder %s133, %s136
    %p145 = scmp.eq.s32.totalorder %s16, 1
    %p146 = por %p144, %p145
    %p147 = scmp.ne.s32.totalorder %s136, %s137
    %p148 = scmp.eq.s32.totalorder %s16, 0
    %p149 = por %p147, %p148
    %p150 = scmp.ne.s32.totalorder %s136, %s137
    %p151 = scmp.eq.s32.totalorder %s17, 1
    %p152 = por %p150, %p151
    %p154 = scmp.ne.s32.totalorder %s137, %s153
    %p155 = scmp.eq.s32.totalorder %s17, 0
    %p156 = por %p154, %p155
    %p157 = scmp.le.s32.totalorder 1, %s11
    %p158 = scmp.lt.s32.totalorder %s11, 3
    %p159 = pnand %p157, %p158
    %p160 = pneg %p159
    // Predicated region
    $region9: #{_lambda_.2} parent=5 // pred_check
      _
    $region10: #{_lambda_.2} parent=5 // pred_check_branch
      %162 = sbr.rel (%p159) target = $region12
    $region11: #{_lambda_.2} parent=5 // pred_region
      %s163 = ssub.s32 %s11, 1
      // Predicated region
      $region13: #{_lambda_.2} parent=11 // pred_check
        %p164 = pneg %p72
      $region14: #{_lambda_.2} parent=11 // pred_check_branch
        %166 = sbr.rel (%p164) target = $region16
      $region15: #{_lambda_.2} parent=11 // pred_region
        _
      $region16: #{_lambda_.2} parent=11 // pred_fallthru
        _
      // Predicated region
      $region17: #{_lambda_.2} parent=11 // pred_check
        %p167 = pneg %p93
      $region18: #{_lambda_.2} parent=11 // pred_check_branch
        %169 = sbr.rel (%p167) target = $region20
      $region19: #{_lambda_.2} parent=11 // pred_region
        _
      $region20: #{_lambda_.2} parent=11 // pred_fallthru
        _
    $region12: #{_lambda_.2} parent=5 // pred_fallthru
      _
    %p170 = scmp.lt.s32.totalorder %s11, 2
    // Predicated region
    $region21: #{_lambda_.2} parent=5 // pred_check
      %p171 = pneg %p170
    $region22: #{_lambda_.2} parent=5 // pred_check_branch
      %173 = sbr.rel (%p171) target = $region24
    $region23: #{_lambda_.2} parent=5 // pred_region
      // Predicated region
      $region25: #{_lambda_.2} parent=23 // pred_check
        %p174 = pneg %p45
      $region26: #{_lambda_.2} parent=23 // pred_check_branch
        %176 = sbr.rel (%p174) target = $region28
      $region27: #{_lambda_.2} parent=23 // pred_region
        %s177 = smul.u32 32, %s19
        %p178 = scmp.lt.s32.totalorder %s18, 1
        %s179 = scalar_select %p178, %s18, 1
        %p180 = scmp.lt.s32.totalorder %s177, 31
        %s181 = scalar_select %p180, %s177, 31
        %s182 = smul.addr %s181, 3
        %s183 = smul.addr %s179, 96
        %s184 = sadd.s32 %s182, %s183
        %s185 = smul.addr %s184, 4
        %s186 = scalar_lea.vmem %s0, %s185
        %s187 = smul.u32 32, %s19
      $region28: #{_lambda_.2} parent=23 // pred_fallthru
        _
    $region24: #{_lambda_.2} parent=5 // pred_fallthru
      _
    %p188 = scmp.le.s32.totalorder 1, %s11
    %p189 = scmp.lt.s32.totalorder %s11, 3
    %p190 = pnand %p188, %p189
    %p191 = pneg %p190
    // Predicated region
    $region29: #{_lambda_.2} parent=5 // pred_check
      _
    $region30: #{_lambda_.2} parent=5 // pred_check_branch
      %193 = sbr.rel (%p190) target = $region32
    $region31: #{_lambda_.2} parent=5 // pred_region
      %s194 = ssub.s32 %s11, 1
      %s195 = smul.u32 32, %s21
      %p196 = scmp.lt.s32.totalorder %s20, 1
      %s197 = scalar_select %p196, %s20, 1
      %p198 = scmp.lt.s32.totalorder %s195, 31
      %s199 = scalar_select %p198, %s195, 31
      %s200 = smul.addr %s199, 3
      %s201 = smul.addr %s197, 96
      %s202 = sadd.s32 %s200, %s201
      %s203 = smul.addr %s202, 4
      %s204 = scalar_lea.vmem %s0, %s203
      %p205 = pneg %p51
      %p206 = pneg %p48
      %p207 = pneg %p72
      %p208 = pneg %p69
      %p209 = pneg %p93
      %p210 = pneg %p90
      %p211 = pneg %p121
      %p212 = pneg %p118
      %s213 = smul.u32 2, %s21
      %p214 = scmp.lt.s32.totalorder %s20, 1
      %s215 = scalar_select %p214, %s20, 1
      %p216 = scmp.lt.s32.totalorder %s213, 1
      %s217 = scalar_select %p216, %s213, 1
      %s218 = smul.addr %s215, 64
      %s219 = sadd.s32 %s217, %s218
      %s220 = smul.addr %s219, 8
      %s221 = scalar_lea.vmem %s3, %s220
      %p222 = pneg %p149
      %p223 = pneg %p146
      %s224 = sadd.s32 %s20, %s21
      %s225 = smul.u32 32, %s224
      %p226 = scmp.lt.s32.totalorder %s225, 63
      %s227 = scalar_select %p226, %s225, 63
      %s228 = smul.addr %s227, 2
      %s229 = smul.addr %s228, 4
      %s230 = scalar_lea.vmem %s4, %s229
      %s231 = smul.u32 32, %s21
      %p232 = scmp.lt.s32.totalorder %s20, 1
      %s233 = scalar_select %p232, %s20, 1
      %p234 = scmp.lt.s32.totalorder %s231, 31
      %s235 = scalar_select %p234, %s231, 31
      %s236 = smul.addr %s235, 3
      %s237 = smul.addr %s233, 96
      %s238 = sadd.s32 %s236, %s237
      %s239 = smul.addr %s238, 4
      %s240 = scalar_lea.vmem %s0, %s239
      %s241 = smul.u32 32, %s21
      %s242 = smul.u32 2, %s21
      %p243 = scmp.lt.s32.totalorder %s20, 1
      %s244 = scalar_select %p243, %s20, 1
      %p245 = scmp.lt.s32.totalorder %s242, 1
      %s246 = scalar_select %p245, %s242, 1
      %s247 = smul.addr %s244, 64
      %s248 = sadd.s32 %s246, %s247
      %s249 = smul.addr %s248, 8
      %s250 = scalar_lea.vmem %s3, %s249
      %s251 = smul.u32 2, %s21
      %s252 = sadd.s32 %s20, %s21
      %s253 = smul.u32 32, %s252
      %p254 = scmp.lt.s32.totalorder %s253, 63
      %s255 = scalar_select %p254, %s253, 63
      %s256 = smul.addr %s255, 2
      %s257 = smul.addr %s256, 4
      %s258 = scalar_lea.vmem %s4, %s257
      %s259 = sadd.s32 %s20, %s21
      %s260 = smul.u32 32, %s259
      %v262 = vld [vmem:[%s240] sm:$0xff]
      %v263 = vld [vmem:[%s240 + $0x8] sm:$0xf]
      %v264 = vld [vmem:[%s240 + $0xc] sm:$0xff]
      %v265 = vld [vmem:[%s240 + $0x14] sm:$0xf]
      %v266 = vld [vmem:[%s240 + $0x18] sm:$0xff]
      %v267 = vld [vmem:[%s240 + $0x20] sm:$0xf]
      %v268 = vld [vmem:[%s240 + $0x24] sm:$0xff]
      %v269 = vld [vmem:[%s240 + $0x2c] sm:$0xf]
      %v270 = vld [vmem:[%s240 + $0x30] sm:$0xff]
      %v271 = vld [vmem:[%s240 + $0x38] sm:$0xf]
      %v272 = vld [vmem:[%s240 + $0x3c] sm:$0xff]
      %v273 = vld [vmem:[%s240 + $0x44] sm:$0xf]
      %v274 = vld [vmem:[%s240 + $0x48] sm:$0xff]
      %v275 = vld [vmem:[%s240 + $0x50] sm:$0xf]
      %v276 = vld [vmem:[%s240 + $0x54] sm:$0xff]
      %v277 = vld [vmem:[%s240 + $0x5c] sm:$0xf]
      %v278 = vld [vmem:[%s240 + $0x60] sm:$0xff]
      %v279 = vld [vmem:[%s240 + $0x68] sm:$0xf]
      %v280 = vld [vmem:[%s240 + $0x6c] sm:$0xff]
      %v281 = vld [vmem:[%s240 + $0x74] sm:$0xf]
      %v282 = vld [vmem:[%s240 + $0x78] sm:$0xff]
      %v283 = vld [vmem:[%s240 + $0x80] sm:$0xf]
      %v284 = vld [vmem:[%s240 + $0x84] sm:$0xff]
      %v285 = vld [vmem:[%s240 + $0x8c] sm:$0xf]
      %v286 = vld [vmem:[%s240 + $0x90] sm:$0xff]
      %v287 = vld [vmem:[%s240 + $0x98] sm:$0xf]
      %v288 = vld [vmem:[%s240 + $0x9c] sm:$0xff]
      %v289 = vld [vmem:[%s240 + $0xa4] sm:$0xf]
      %v290 = vld [vmem:[%s240 + $0xa8] sm:$0xff]
      %v291 = vld [vmem:[%s240 + $0xb0] sm:$0xf]
      %v292 = vld [vmem:[%s240 + $0xb4] sm:$0xff]
      %v293 = vld [vmem:[%s240 + $0xbc] sm:$0xf]
      %v294 = vld [vmem:[%s240 + $0xc0] sm:$0xff]
      %v295 = vld [vmem:[%s240 + $0xc8] sm:$0xf]
      %v296 = vld [vmem:[%s240 + $0xcc] sm:$0xff]
      %v297 = vld [vmem:[%s240 + $0xd4] sm:$0xf]
      %v298 = vld [vmem:[%s240 + $0xd8] sm:$0xff]
      %v299 = vld [vmem:[%s240 + $0xe0] sm:$0xf]
      %v300 = vld [vmem:[%s240 + $0xe4] sm:$0xff]
      %v301 = vld [vmem:[%s240 + $0xec] sm:$0xf]
      %v302 = vld [vmem:[%s240 + $0xf0] sm:$0xff]
      %v303 = vld [vmem:[%s240 + $0xf8] sm:$0xf]
      %v304 = vld [vmem:[%s240 + $0xfc] sm:$0xff]
      %v305 = vld [vmem:[%s240 + $0x104] sm:$0xf]
      %v306 = vld [vmem:[%s240 + $0x108] sm:$0xff]
      %v307 = vld [vmem:[%s240 + $0x110] sm:$0xf]
      %v308 = vld [vmem:[%s240 + $0x114] sm:$0xff]
      %v309 = vld [vmem:[%s240 + $0x11c] sm:$0xf]
      %v310 = vld [vmem:[%s240 + $0x120] sm:$0xff]
      %v311 = vld [vmem:[%s240 + $0x128] sm:$0xf]
      %v312 = vld [vmem:[%s240 + $0x12c] sm:$0xff]
      %v313 = vld [vmem:[%s240 + $0x134] sm:$0xf]
      %v314 = vld [vmem:[%s240 + $0x138] sm:$0xff]
      %v315 = vld [vmem:[%s240 + $0x140] sm:$0xf]
      %v316 = vld [vmem:[%s240 + $0x144] sm:$0xff]
      %v317 = vld [vmem:[%s240 + $0x14c] sm:$0xf]
      %v318 = vld [vmem:[%s240 + $0x150] sm:$0xff]
      %v319 = vld [vmem:[%s240 + $0x158] sm:$0xf]
      %v320 = vld [vmem:[%s240 + $0x15c] sm:$0xff]
      %v321 = vld [vmem:[%s240 + $0x164] sm:$0xf]
      %v322 = vld [vmem:[%s240 + $0x168] sm:$0xff]
      %v323 = vld [vmem:[%s240 + $0x170] sm:$0xf]
      %v324 = vld [vmem:[%s240 + $0x174] sm:$0xff]
      %v325 = vld [vmem:[%s240 + $0x17c] sm:$0xf]
      %v326 = vld [vmem:[%s1] sm:$0xff]
      %v327 = vld [vmem:[%s1 + $0x8] sm:$0xff]
      %v328 = vld [vmem:[%s1 + $0x10] sm:$0xff]
      %v329 = vld [vmem:[%s1 + $0x18] sm:$0xff]
      %v330 = vld [vmem:[%s1 + $0x20] sm:$0xff]
      %v331 = vld [vmem:[%s1 + $0x28] sm:$0xff]
      %v332 = vld [vmem:[%s1 + $0x30] sm:$0xff]
      %v333 = vld [vmem:[%s1 + $0x38] sm:$0xff]
      %v334 = vld [vmem:[%s1 + $0x40] sm:$0xff]
      %v335 = vld [vmem:[%s1 + $0x48] sm:$0xff]
      %v336 = vld [vmem:[%s1 + $0x50] sm:$0xff]
      %v337 = vld [vmem:[%s1 + $0x58] sm:$0xff]
      %v338 = vld [vmem:[%s1 + $0x60] sm:$0xff]
      %v339 = vld [vmem:[%s1 + $0x68] sm:$0xff]
      %v340 = vld [vmem:[%s1 + $0x70] sm:$0xff]
      %v341 = vld [vmem:[%s1 + $0x78] sm:$0xff]
      %v342 = vld [vmem:[%s1 + $0x80] sm:$0xff]
      %v343 = vld [vmem:[%s1 + $0x88] sm:$0xff]
      %v344 = vld [vmem:[%s1 + $0x90] sm:$0xff]
      %v345 = vld [vmem:[%s1 + $0x98] sm:$0xff]
      %v346 = vld [vmem:[%s1 + $0xa0] sm:$0xff]
      %v347 = vld [vmem:[%s1 + $0xa8] sm:$0xff]
      %v348 = vld [vmem:[%s1 + $0xb0] sm:$0xff]
      %v349 = vld [vmem:[%s1 + $0xb8] sm:$0xff]
      %v350 = vld [vmem:[%s1 + $0xc0] sm:$0xff]
      %v351 = vld [vmem:[%s1 + $0xc8] sm:$0xff]
      %v352 = vld [vmem:[%s1 + $0xd0] sm:$0xff]
      %v353 = vld [vmem:[%s1 + $0xd8] sm:$0xff]
      %v354 = vld [vmem:[%s1 + $0xe0] sm:$0xff]
      %v355 = vld [vmem:[%s1 + $0xe8] sm:$0xff]
      %v356 = vld [vmem:[%s1 + $0xf0] sm:$0xff]
      %v357 = vld [vmem:[%s1 + $0xf8] sm:$0xff]
      %v358 = vld [vmem:[%s1 + $0x100] sm:$0xff]
      %v359 = vld [vmem:[%s1 + $0x108] sm:$0xff]
      %v360 = vld [vmem:[%s1 + $0x110] sm:$0xff]
      %v361 = vld [vmem:[%s1 + $0x118] sm:$0xff]
      %v362 = vld [vmem:[%s1 + $0x120] sm:$0xff]
      %v363 = vld [vmem:[%s1 + $0x128] sm:$0xff]
      %v364 = vld [vmem:[%s1 + $0x130] sm:$0xff]
      %v365 = vld [vmem:[%s1 + $0x138] sm:$0xff]
      %v366 = vld [vmem:[%s1 + $0x140] sm:$0xff]
      %v367 = vld [vmem:[%s1 + $0x148] sm:$0xff]
      %v368 = vld [vmem:[%s1 + $0x150] sm:$0xff]
      %v369 = vld [vmem:[%s1 + $0x158] sm:$0xff]
      %v370 = vld [vmem:[%s1 + $0x160] sm:$0xff]
      %v371 = vld [vmem:[%s1 + $0x168] sm:$0xff]
      %v372 = vld [vmem:[%s1 + $0x170] sm:$0xff]
      %v373 = vld [vmem:[%s1 + $0x178] sm:$0xff]
      %v374 = vld [vmem:[%s2] sm:$0x3]
      %v376 = vlaneseq
      %v377 = vshrl.u32 %v376, 7
      %v378 = vsub.s32 0, %v377
      %v379 = vrot.slane %v374, %v378
      %v380 = vlaneseq
      %v381 = vshrl.u32 %v380, 7
      %v382 = vsub.s32 1, %v381
      %v383 = vrot.slane %v374, %v382
      %v450 = vunpack.c.l.b16 %v262
      %v451 = vunpack.c.h.b16 %v262
      %v452 = vunpack.c.l.b16 %v263
      %v453 = vunpack.c.l.b16 %v264
      %v454 = vunpack.c.h.b16 %v264
      %v455 = vunpack.c.l.b16 %v265
      %v456 = vunpack.c.l.b16 %v266
      %v457 = vunpack.c.h.b16 %v266
      %v458 = vunpack.c.l.b16 %v267
      %v459 = vunpack.c.l.b16 %v268
      %v460 = vunpack.c.h.b16 %v268
      %v461 = vunpack.c.l.b16 %v269
      %v462 = vunpack.c.l.b16 %v270
      %v463 = vunpack.c.h.b16 %v270
      %v464 = vunpack.c.l.b16 %v271
      %v465 = vunpack.c.l.b16 %v272
      %v466 = vunpack.c.h.b16 %v272
      %v467 = vunpack.c.l.b16 %v273
      %v468 = vunpack.c.l.b16 %v274
      %v469 = vunpack.c.h.b16 %v274
      %v470 = vunpack.c.l.b16 %v275
      %v471 = vunpack.c.l.b16 %v276
      %v472 = vunpack.c.h.b16 %v276
      %v473 = vunpack.c.l.b16 %v277
      %v474 = vunpack.c.l.b16 %v278
      %v475 = vunpack.c.h.b16 %v278
      %v476 = vunpack.c.l.b16 %v279
      %v477 = vunpack.c.l.b16 %v280
      %v478 = vunpack.c.h.b16 %v280
      %v479 = vunpack.c.l.b16 %v281
      %v480 = vunpack.c.l.b16 %v282
      %v481 = vunpack.c.h.b16 %v282
      %v482 = vunpack.c.l.b16 %v283
      %v483 = vunpack.c.l.b16 %v284
      %v484 = vunpack.c.h.b16 %v284
      %v485 = vunpack.c.l.b16 %v285
      %v486 = vunpack.c.l.b16 %v286
      %v487 = vunpack.c.h.b16 %v286
      %v488 = vunpack.c.l.b16 %v287
      %v489 = vunpack.c.l.b16 %v288
      %v490 = vunpack.c.h.b16 %v288
      %v491 = vunpack.c.l.b16 %v289
      %v492 = vunpack.c.l.b16 %v290
      %v493 = vunpack.c.h.b16 %v290
      %v494 = vunpack.c.l.b16 %v291
      %v495 = vunpack.c.l.b16 %v292
      %v496 = vunpack.c.h.b16 %v292
      %v497 = vunpack.c.l.b16 %v293
      %v498 = vunpack.c.l.b16 %v294
      %v499 = vunpack.c.h.b16 %v294
      %v500 = vunpack.c.l.b16 %v295
      %v501 = vunpack.c.l.b16 %v296
      %v502 = vunpack.c.h.b16 %v296
      %v503 = vunpack.c.l.b16 %v297
      %v504 = vunpack.c.l.b16 %v298
      %v505 = vunpack.c.h.b16 %v298
      %v506 = vunpack.c.l.b16 %v299
      %v507 = vunpack.c.l.b16 %v300
      %v508 = vunpack.c.h.b16 %v300
      %v509 = vunpack.c.l.b16 %v301
      %v510 = vunpack.c.l.b16 %v302
      %v511 = vunpack.c.h.b16 %v302
      %v512 = vunpack.c.l.b16 %v303
      %v513 = vunpack.c.l.b16 %v304
      %v514 = vunpack.c.h.b16 %v304
      %v515 = vunpack.c.l.b16 %v305
      %v516 = vunpack.c.l.b16 %v306
      %v517 = vunpack.c.h.b16 %v306
      %v518 = vunpack.c.l.b16 %v307
      %v519 = vunpack.c.l.b16 %v308
      %v520 = vunpack.c.h.b16 %v308
      %v521 = vunpack.c.l.b16 %v309
      %v522 = vunpack.c.l.b16 %v310
      %v523 = vunpack.c.h.b16 %v310
      %v524 = vunpack.c.l.b16 %v311
      %v525 = vunpack.c.l.b16 %v312
      %v526 = vunpack.c.h.b16 %v312
      %v527 = vunpack.c.l.b16 %v313
      %v528 = vunpack.c.l.b16 %v314
      %v529 = vunpack.c.h.b16 %v314
      %v530 = vunpack.c.l.b16 %v315
      %v531 = vunpack.c.l.b16 %v316
      %v532 = vunpack.c.h.b16 %v316
      %v533 = vunpack.c.l.b16 %v317
      %v534 = vunpack.c.l.b16 %v318
      %v535 = vunpack.c.h.b16 %v318
      %v536 = vunpack.c.l.b16 %v319
      %v537 = vunpack.c.l.b16 %v320
      %v538 = vunpack.c.h.b16 %v320
      %v539 = vunpack.c.l.b16 %v321
      %v540 = vunpack.c.l.b16 %v322
      %v541 = vunpack.c.h.b16 %v322
      %v542 = vunpack.c.l.b16 %v323
      %v543 = vunpack.c.l.b16 %v324
      %v544 = vunpack.c.h.b16 %v324
      %v545 = vunpack.c.l.b16 %v325
      %v546 = vpack.c.b16 %v453, %v450
      %v547 = vpack.c.b16 %v454, %v451
      %v548 = vpack.c.b16 %v455, %v452
      %v549 = vpack.c.b16 %v459, %v456
      %v550 = vpack.c.b16 %v460, %v457
      %v551 = vpack.c.b16 %v461, %v458
      %v552 = vpack.c.b16 %v465, %v462
      %v553 = vpack.c.b16 %v466, %v463
      %v554 = vpack.c.b16 %v467, %v464
      %v555 = vpack.c.b16 %v471, %v468
      %v556 = vpack.c.b16 %v472, %v469
      %v557 = vpack.c.b16 %v473, %v470
      %v558 = vpack.c.b16 %v477, %v474
      %v559 = vpack.c.b16 %v478, %v475
      %v560 = vpack.c.b16 %v479, %v476
      %v561 = vpack.c.b16 %v483, %v480
      %v562 = vpack.c.b16 %v484, %v481
      %v563 = vpack.c.b16 %v485, %v482
      %v564 = vpack.c.b16 %v489, %v486
      %v565 = vpack.c.b16 %v490, %v487
      %v566 = vpack.c.b16 %v491, %v488
      %v567 = vpack.c.b16 %v495, %v492
      %v568 = vpack.c.b16 %v496, %v493
      %v569 = vpack.c.b16 %v497, %v494
      %v570 = vpack.c.b16 %v501, %v498
      %v571 = vpack.c.b16 %v502, %v499
      %v572 = vpack.c.b16 %v503, %v500
      %v573 = vpack.c.b16 %v507, %v504
      %v574 = vpack.c.b16 %v508, %v505
      %v575 = vpack.c.b16 %v509, %v506
      %v576 = vpack.c.b16 %v513, %v510
      %v577 = vpack.c.b16 %v514, %v511
      %v578 = vpack.c.b16 %v515, %v512
      %v579 = vpack.c.b16 %v519, %v516
      %v580 = vpack.c.b16 %v520, %v517
      %v581 = vpack.c.b16 %v521, %v518
      %v582 = vpack.c.b16 %v525, %v522
      %v583 = vpack.c.b16 %v526, %v523
      %v584 = vpack.c.b16 %v527, %v524
      %v585 = vpack.c.b16 %v531, %v528
      %v586 = vpack.c.b16 %v532, %v529
      %v587 = vpack.c.b16 %v533, %v530
      %v588 = vpack.c.b16 %v537, %v534
      %v589 = vpack.c.b16 %v538, %v535
      %v590 = vpack.c.b16 %v539, %v536
      %v591 = vpack.c.b16 %v543, %v540
      %v592 = vpack.c.b16 %v544, %v541
      %v593 = vpack.c.b16 %v545, %v542
      %v690 = vunpack.c.l.b16 %v326
      %v691 = vunpack.c.h.b16 %v326
      %v692 = vunpack.c.l.b16 %v327
      %v693 = vunpack.c.h.b16 %v327
      %v694 = vunpack.c.l.b16 %v328
      %v695 = vunpack.c.h.b16 %v328
      %v696 = vunpack.c.l.b16 %v329
      %v697 = vunpack.c.h.b16 %v329
      %v698 = vunpack.c.l.b16 %v330
      %v699 = vunpack.c.h.b16 %v330
      %v700 = vunpack.c.l.b16 %v331
      %v701 = vunpack.c.h.b16 %v331
      %v702 = vunpack.c.l.b16 %v332
      %v703 = vunpack.c.h.b16 %v332
      %v704 = vunpack.c.l.b16 %v333
      %v705 = vunpack.c.h.b16 %v333
      %v706 = vunpack.c.l.b16 %v334
      %v707 = vunpack.c.h.b16 %v334
      %v708 = vunpack.c.l.b16 %v335
      %v709 = vunpack.c.h.b16 %v335
      %v710 = vunpack.c.l.b16 %v336
      %v711 = vunpack.c.h.b16 %v336
      %v712 = vunpack.c.l.b16 %v337
      %v713 = vunpack.c.h.b16 %v337
      %v714 = vunpack.c.l.b16 %v338
      %v715 = vunpack.c.h.b16 %v338
      %v716 = vunpack.c.l.b16 %v339
      %v717 = vunpack.c.h.b16 %v339
      %v718 = vunpack.c.l.b16 %v340
      %v719 = vunpack.c.h.b16 %v340
      %v720 = vunpack.c.l.b16 %v341
      %v721 = vunpack.c.h.b16 %v341
      %v722 = vunpack.c.l.b16 %v342
      %v723 = vunpack.c.h.b16 %v342
      %v724 = vunpack.c.l.b16 %v343
      %v725 = vunpack.c.h.b16 %v343
      %v726 = vunpack.c.l.b16 %v344
      %v727 = vunpack.c.h.b16 %v344
      %v728 = vunpack.c.l.b16 %v345
      %v729 = vunpack.c.h.b16 %v345
      %v730 = vunpack.c.l.b16 %v346
      %v731 = vunpack.c.h.b16 %v346
      %v732 = vunpack.c.l.b16 %v347
      %v733 = vunpack.c.h.b16 %v347
      %v734 = vunpack.c.l.b16 %v348
      %v735 = vunpack.c.h.b16 %v348
      %v736 = vunpack.c.l.b16 %v349
      %v737 = vunpack.c.h.b16 %v349
      %v738 = vunpack.c.l.b16 %v350
      %v739 = vunpack.c.h.b16 %v350
      %v740 = vunpack.c.l.b16 %v351
      %v741 = vunpack.c.h.b16 %v351
      %v742 = vunpack.c.l.b16 %v352
      %v743 = vunpack.c.h.b16 %v352
      %v744 = vunpack.c.l.b16 %v353
      %v745 = vunpack.c.h.b16 %v353
      %v746 = vunpack.c.l.b16 %v354
      %v747 = vunpack.c.h.b16 %v354
      %v748 = vunpack.c.l.b16 %v355
      %v749 = vunpack.c.h.b16 %v355
      %v750 = vunpack.c.l.b16 %v356
      %v751 = vunpack.c.h.b16 %v356
      %v752 = vunpack.c.l.b16 %v357
      %v753 = vunpack.c.h.b16 %v357
      %v754 = vunpack.c.l.b16 %v358
      %v755 = vunpack.c.h.b16 %v358
      %v756 = vunpack.c.l.b16 %v359
      %v757 = vunpack.c.h.b16 %v359
      %v758 = vunpack.c.l.b16 %v360
      %v759 = vunpack.c.h.b16 %v360
      %v760 = vunpack.c.l.b16 %v361
      %v761 = vunpack.c.h.b16 %v361
      %v762 = vunpack.c.l.b16 %v362
      %v763 = vunpack.c.h.b16 %v362
      %v764 = vunpack.c.l.b16 %v363
      %v765 = vunpack.c.h.b16 %v363
      %v766 = vunpack.c.l.b16 %v364
      %v767 = vunpack.c.h.b16 %v364
      %v768 = vunpack.c.l.b16 %v365
      %v769 = vunpack.c.h.b16 %v365
      %v770 = vunpack.c.l.b16 %v366
      %v771 = vunpack.c.h.b16 %v366
      %v772 = vunpack.c.l.b16 %v367
      %v773 = vunpack.c.h.b16 %v367
      %v774 = vunpack.c.l.b16 %v368
      %v775 = vunpack.c.h.b16 %v368
      %v776 = vunpack.c.l.b16 %v369
      %v777 = vunpack.c.h.b16 %v369
      %v778 = vunpack.c.l.b16 %v370
      %v779 = vunpack.c.h.b16 %v370
      %v780 = vunpack.c.l.b16 %v371
      %v781 = vunpack.c.h.b16 %v371
      %v782 = vunpack.c.l.b16 %v372
      %v783 = vunpack.c.h.b16 %v372
      %v784 = vunpack.c.l.b16 %v373
      %v785 = vunpack.c.h.b16 %v373
      %v786 = vpack.c.b16 %v692, %v690
      %v787 = vpack.c.b16 %v693, %v691
      %v788 = vpack.c.b16 %v696, %v694
      %v789 = vpack.c.b16 %v697, %v695
      %v790 = vpack.c.b16 %v700, %v698
      %v791 = vpack.c.b16 %v701, %v699
      %v792 = vpack.c.b16 %v704, %v702
      %v793 = vpack.c.b16 %v705, %v703
      %v794 = vpack.c.b16 %v708, %v706
      %v795 = vpack.c.b16 %v709, %v707
      %v796 = vpack.c.b16 %v712, %v710
      %v797 = vpack.c.b16 %v713, %v711
      %v798 = vpack.c.b16 %v716, %v714
      %v799 = vpack.c.b16 %v717, %v715
      %v800 = vpack.c.b16 %v720, %v718
      %v801 = vpack.c.b16 %v721, %v719
      %v802 = vpack.c.b16 %v724, %v722
      %v803 = vpack.c.b16 %v725, %v723
      %v804 = vpack.c.b16 %v728, %v726
      %v805 = vpack.c.b16 %v729, %v727
      %v806 = vpack.c.b16 %v732, %v730
      %v807 = vpack.c.b16 %v733, %v731
      %v808 = vpack.c.b16 %v736, %v734
      %v809 = vpack.c.b16 %v737, %v735
      %v810 = vpack.c.b16 %v740, %v738
      %v811 = vpack.c.b16 %v741, %v739
      %v812 = vpack.c.b16 %v744, %v742
      %v813 = vpack.c.b16 %v745, %v743
      %v814 = vpack.c.b16 %v748, %v746
      %v815 = vpack.c.b16 %v749, %v747
      %v816 = vpack.c.b16 %v752, %v750
      %v817 = vpack.c.b16 %v753, %v751
      %v818 = vpack.c.b16 %v756, %v754
      %v819 = vpack.c.b16 %v757, %v755
      %v820 = vpack.c.b16 %v760, %v758
      %v821 = vpack.c.b16 %v761, %v759
      %v822 = vpack.c.b16 %v764, %v762
      %v823 = vpack.c.b16 %v765, %v763
      %v824 = vpack.c.b16 %v768, %v766
      %v825 = vpack.c.b16 %v769, %v767
      %v826 = vpack.c.b16 %v772, %v770
      %v827 = vpack.c.b16 %v773, %v771
      %v828 = vpack.c.b16 %v776, %v774
      %v829 = vpack.c.b16 %v777, %v775
      %v830 = vpack.c.b16 %v780, %v778
      %v831 = vpack.c.b16 %v781, %v779
      %v832 = vpack.c.b16 %v784, %v782
      %v833 = vpack.c.b16 %v785, %v783
      %882 = vmatprep.subr.bf16.mxu0 %v787
      %883 = vmatpush1.bf16.msra.mxu0 %v786
      %884 = vmatprep.subr.bf16.mxu0 %v789
      %885 = vmatpush1.bf16.msra.mxu0 %v788
      %886 = vmatprep.subr.bf16.mxu0 %v791
      %887 = vmatpush1.bf16.msra.mxu0 %v790
      %888 = vmatprep.subr.bf16.mxu0 %v793
      %889 = vmatpush1.bf16.msra.mxu0 %v792
      %890 = vmatprep.subr.bf16.mxu0 %v795
      %891 = vmatpush1.bf16.msra.mxu0 %v794
      %892 = vmatprep.subr.bf16.mxu0 %v797
      %893 = vmatpush1.bf16.msra.mxu0 %v796
      %894 = vmatprep.subr.bf16.mxu0 %v799
      %895 = vmatpush1.bf16.msra.mxu0 %v798
      %896 = vmatprep.subr.bf16.mxu0 %v801
      %897 = vmatpush1.bf16.msra.mxu0 %v800
      %898 = vmatprep.subr.bf16.mxu0 %v803
      %899 = vmatpush1.bf16.msra.mxu0 %v802
      %900 = vmatprep.subr.bf16.mxu0 %v805
      %901 = vmatpush1.bf16.msra.mxu0 %v804
      %902 = vmatprep.subr.bf16.mxu0 %v807
      %903 = vmatpush1.bf16.msra.mxu0 %v806
      %904 = vmatprep.subr.bf16.mxu0 %v809
      %905 = vmatpush1.bf16.msra.mxu0 %v808
      %906 = vmatprep.subr.bf16.mxu0 %v811
      %907 = vmatpush1.bf16.msra.mxu0 %v810
      %908 = vmatprep.subr.bf16.mxu0 %v813
      %909 = vmatpush1.bf16.msra.mxu0 %v812
      %910 = vmatprep.subr.bf16.mxu0 %v815
      %911 = vmatpush1.bf16.msra.mxu0 %v814
      %912 = vmatprep.subr.bf16.mxu0 %v817
      %913 = vmatpush1.bf16.msra.mxu0 %v816
      %914 = vmatprep.mubr.bf16.mxu0 %v547
      %915 = vmatmul.mubr.bf16.gmra.mrb[0].mxu0 %v546
      %v916 = vpop.f32.mrb[0].mxu0
      %v917 = vadd.f32 %v379, %v916
      %v918 = vpop.f32.mrb[0].mxu0
      %v919 = vadd.f32 %v383, %v918
      %v920 = vpop.f32.mrb[0].mxu0
      %v921 = vadd.f32 %v379, %v920
      %v922 = vpop.f32.mrb[0].mxu0
      %v923 = vadd.f32 %v383, %v922
      %924 = vmatprep.mubr.bf16.mxu0 %v550
      %925 = vmatmul.mubr.bf16.gmra.mrb[0].mxu0 %v549
      %v926 = vpop.f32.mrb[0].mxu0
      %v927 = vadd.f32 %v379, %v926
      %v928 = vpop.f32.mrb[0].mxu0
      %v929 = vadd.f32 %v383, %v928
      %v930 = vpop.f32.mrb[0].mxu0
      %v931 = vadd.f32 %v379, %v930
      %v932 = vpop.f32.mrb[0].mxu0
      %v933 = vadd.f32 %v383, %v932
      %934 = vmatprep.mubr.bf16.mxu0 %v553
      %935 = vmatmul.mubr.bf16.gmra.mrb[0].mxu0 %v552
      %v936 = vpop.f32.mrb[0].mxu0
      %v937 = vadd.f32 %v379, %v936
      %v938 = vpop.f32.mrb[0].mxu0
      %v939 = vadd.f32 %v383, %v938
      %v940 = vpop.f32.mrb[0].mxu0
      %v941 = vadd.f32 %v379, %v940
      %v942 = vpop.f32.mrb[0].mxu0
      %v943 = vadd.f32 %v383, %v942
      %944 = vmatprep.mubr.bf16.mxu0 %v556
      %945 = vmatmul.mubr.bf16.gmra.mrb[0].mxu0 %v555
      %v946 = vpop.f32.mrb[0].mxu0
      %v947 = vadd.f32 %v379, %v946
      %v948 = vpop.f32.mrb[0].mxu0
      %v949 = vadd.f32 %v383, %v948
      %v950 = vpop.f32.mrb[0].mxu0
      %v951 = vadd.f32 %v379, %v950
      %v952 = vpop.f32.mrb[0].mxu0
      %v953 = vadd.f32 %v383, %v952
      %954 = vmatprep.mubr.bf16.mxu0 %v559
      %955 = vmatmul.mubr.bf16.gmra.mrb[0].mxu0 %v558
      %v956 = vpop.f32.mrb[0].mxu0
      %v957 = vadd.f32 %v379, %v956
      %v958 = vpop.f32.mrb[0].mxu0
      %v959 = vadd.f32 %v383, %v958
      %v960 = vpop.f32.mrb[0].mxu0
      %v961 = vadd.f32 %v379, %v960
      %v962 = vpop.f32.mrb[0].mxu0
      %v963 = vadd.f32 %v383, %v962
      %964 = vmatprep.mubr.bf16.mxu0 %v562
      %965 = vmatmul.mubr.bf16.gmra.mrb[0].mxu0 %v561
      %v966 = vpop.f32.mrb[0].mxu0
      %v967 = vadd.f32 %v379, %v966
      %v968 = vpop.f32.mrb[0].mxu0
      %v969 = vadd.f32 %v383, %v968
      %v970 = vpop.f32.mrb[0].mxu0
      %v971 = vadd.f32 %v379, %v970
      %v972 = vpop.f32.mrb[0].mxu0
      %v973 = vadd.f32 %v383, %v972
      %974 = vmatprep.mubr.bf16.mxu0 %v565
      %975 = vmatmul.mubr.bf16.gmra.mrb[0].mxu0 %v564
      %v976 = vpop.f32.mrb[0].mxu0
      %v977 = vadd.f32 %v379, %v976
      %v978 = vpop.f32.mrb[0].mxu0
      %v979 = vadd.f32 %v383, %v978
      %v980 = vpop.f32.mrb[0].mxu0
      %v981 = vadd.f32 %v379, %v980
      %v982 = vpop.f32.mrb[0].mxu0
      %v983 = vadd.f32 %v383, %v982
      %984 = vmatprep.mubr.bf16.mxu0 %v568
      %985 = vmatmul.mubr.bf16.gmra.mrb[0].mxu0 %v567
      %v986 = vpop.f32.mrb[0].mxu0
      %v987 = vadd.f32 %v379, %v986
      %v988 = vpop.f32.mrb[0].mxu0
      %v989 = vadd.f32 %v383, %v988
      %v990 = vpop.f32.mrb[0].mxu0
      %v991 = vadd.f32 %v379, %v990
      %v992 = vpop.f32.mrb[0].mxu0
      %v993 = vadd.f32 %v383, %v992
      %994 = vmatprep.mubr.bf16.mxu0 %v571
      %995 = vmatmul.mubr.bf16.gmra.mrb[0].mxu0 %v570
      %v996 = vpop.f32.mrb[0].mxu0
      %v997 = vadd.f32 %v379, %v996
      %v998 = vpop.f32.mrb[0].mxu0
      %v999 = vadd.f32 %v383, %v998
      %v1000 = vpop.f32.mrb[0].mxu0
      %v1001 = vadd.f32 %v379, %v1000
      %v1002 = vpop.f32.mrb[0].mxu0
      %v1003 = vadd.f32 %v383, %v1002
      %1004 = vmatprep.mubr.bf16.mxu0 %v574
      %1005 = vmatmul.mubr.bf16.gmra.mrb[0].mxu0 %v573
      %v1006 = vpop.f32.mrb[0].mxu0
      %v1007 = vadd.f32 %v379, %v1006
      %v1008 = vpop.f32.mrb[0].mxu0
      %v1009 = vadd.f32 %v383, %v1008
      %v1010 = vpop.f32.mrb[0].mxu0
      %v1011 = vadd.f32 %v379, %v1010
      %v1012 = vpop.f32.mrb[0].mxu0
      %v1013 = vadd.f32 %v383, %v1012
      %1014 = vmatprep.mubr.bf16.mxu0 %v577
      %1015 = vmatmul.mubr.bf16.gmra.mrb[0].mxu0 %v576
      %v1016 = vpop.f32.mrb[0].mxu0
      %v1017 = vadd.f32 %v379, %v1016
      %v1018 = vpop.f32.mrb[0].mxu0
      %v1019 = vadd.f32 %v383, %v1018
      %v1020 = vpop.f32.mrb[0].mxu0
      %v1021 = vadd.f32 %v379, %v1020
      %v1022 = vpop.f32.mrb[0].mxu0
      %v1023 = vadd.f32 %v383, %v1022
      %1024 = vmatprep.mubr.bf16.mxu0 %v580
      %1025 = vmatmul.mubr.bf16.gmra.mrb[0].mxu0 %v579
      %v1026 = vpop.f32.mrb[0].mxu0
      %v1027 = vadd.f32 %v379, %v1026
      %v1028 = vpop.f32.mrb[0].mxu0
      %v1029 = vadd.f32 %v383, %v1028
      %v1030 = vpop.f32.mrb[0].mxu0
      %v1031 = vadd.f32 %v379, %v1030
      %v1032 = vpop.f32.mrb[0].mxu0
      %v1033 = vadd.f32 %v383, %v1032
      %1034 = vmatprep.mubr.bf16.mxu0 %v583
      %1035 = vmatmul.mubr.bf16.gmra.mrb[0].mxu0 %v582
      %v1036 = vpop.f32.mrb[0].mxu0
      %v1037 = vadd.f32 %v379, %v1036
      %v1038 = vpop.f32.mrb[0].mxu0
      %v1039 = vadd.f32 %v383, %v1038
      %v1040 = vpop.f32.mrb[0].mxu0
      %v1041 = vadd.f32 %v379, %v1040
      %v1042 = vpop.f32.mrb[0].mxu0
      %v1043 = vadd.f32 %v383, %v1042
      %1044 = vmatprep.mubr.bf16.mxu0 %v586
      %1045 = vmatmul.mubr.bf16.gmra.mrb[0].mxu0 %v585
      %v1046 = vpop.f32.mrb[0].mxu0
      %v1047 = vadd.f32 %v379, %v1046
      %v1048 = vpop.f32.mrb[0].mxu0
      %v1049 = vadd.f32 %v383, %v1048
      %v1050 = vpop.f32.mrb[0].mxu0
      %v1051 = vadd.f32 %v379, %v1050
      %v1052 = vpop.f32.mrb[0].mxu0
      %v1053 = vadd.f32 %v383, %v1052
      %1054 = vmatprep.mubr.bf16.mxu0 %v589
      %1055 = vmatmul.mubr.bf16.gmra.mrb[0].mxu0 %v588
      %v1056 = vpop.f32.mrb[0].mxu0
      %v1057 = vadd.f32 %v379, %v1056
      %v1058 = vpop.f32.mrb[0].mxu0
      %v1059 = vadd.f32 %v383, %v1058
      %v1060 = vpop.f32.mrb[0].mxu0
      %v1061 = vadd.f32 %v379, %v1060
      %v1062 = vpop.f32.mrb[0].mxu0
      %v1063 = vadd.f32 %v383, %v1062
      %1064 = vmatprep.mubr.bf16.mxu0 %v592
      %1065 = vmatmul.mubr.bf16.gmra.mrb[0].mxu0 %v591
      %v1066 = vpop.f32.mrb[0].mxu0
      %v1067 = vadd.f32 %v379, %v1066
      %v1068 = vpop.f32.mrb[0].mxu0
      %v1069 = vadd.f32 %v383, %v1068
      %v1070 = vpop.f32.mrb[0].mxu0
      %v1071 = vadd.f32 %v379, %v1070
      %v1072 = vpop.f32.mrb[0].mxu0
      %v1073 = vadd.f32 %v383, %v1072
      %1074 = vdwg.mxu0
      %1075 = vmatprep.subr.bf16.mxu0 %v819
      %1076 = vmatpush1.bf16.msra.mxu0 %v818
      %1077 = vmatprep.subr.bf16.mxu0 %v821
      %1078 = vmatpush1.bf16.msra.mxu0 %v820
      %1079 = vmatprep.subr.bf16.mxu0 %v823
      %1080 = vmatpush1.bf16.msra.mxu0 %v822
      %1081 = vmatprep.subr.bf16.mxu0 %v825
      %1082 = vmatpush1.bf16.msra.mxu0 %v824
      %1083 = vmatprep.subr.bf16.mxu0 %v827
      %1084 = vmatpush1.bf16.msra.mxu0 %v826
      %1085 = vmatprep.subr.bf16.mxu0 %v829
      %1086 = vmatpush1.bf16.msra.mxu0 %v828
      %1087 = vmatprep.subr.bf16.mxu0 %v831
      %1088 = vmatpush1.bf16.msra.mxu0 %v830
      %1089 = vmatprep.subr.bf16.mxu0 %v833
      %1090 = vmatpush1.bf16.msra.mxu0 %v832
      %1091 = vmatprep.subr.bf16.mxu0 0
      %1092 = vmatpush1.bf16.msra.mxu0 0
      %1093 = vmatprep.subr.bf16.mxu0 0
      %1094 = vmatpush1.bf16.msra.mxu0 0
      %1095 = vmatprep.subr.bf16.mxu0 0
      %1096 = vmatpush1.bf16.msra.mxu0 0
      %1097 = vmatprep.subr.bf16.mxu0 0
      %1098 = vmatpush1.bf16.msra.mxu0 0
      %1099 = vmatprep.subr.bf16.mxu0 0
      %1100 = vmatpush1.bf16.msra.mxu0 0
      %1101 = vmatprep.subr.bf16.mxu0 0
      %1102 = vmatpush1.bf16.msra.mxu0 0
      %1103 = vmatprep.subr.bf16.mxu0 0
      %1104 = vmatpush1.bf16.msra.mxu0 0
      %1105 = vmatprep.subr.bf16.mxu0 0
      %1106 = vmatpush1.bf16.msra.mxu0 0
      %1107 = vmatprep.mubr.bf16.mxu0 0
      %1108 = vmatmul.mubr.bf16.gmra.mrb[0].mxu0 %v548
      %v1109 = vpop.f32.mrb[0].mxu0
      %v1110 = vadd.f32 %v917, %v1109
      %v1111 = vpop.f32.mrb[0].mxu0
      %v1112 = vadd.f32 %v919, %v1111
      %v1113 = vpop.f32.mrb[0].mxu0
      %v1114 = vadd.f32 %v921, %v1113
      %v1115 = vpop.f32.mrb[0].mxu0
      %v1116 = vadd.f32 %v923, %v1115
      %1117 = vmatprep.mubr.bf16.mxu0 0
      %1118 = vmatmul.mubr.bf16.gmra.mrb[0].mxu0 %v551
      %v1119 = vpop.f32.mrb[0].mxu0
      %v1120 = vadd.f32 %v927, %v1119
      %v1121 = vpop.f32.mrb[0].mxu0
      %v1122 = vadd.f32 %v929, %v1121
      %v1123 = vpop.f32.mrb[0].mxu0
      %v1124 = vadd.f32 %v931, %v1123
      %v1125 = vpop.f32.mrb[0].mxu0
      %v1126 = vadd.f32 %v933, %v1125
      %1127 = vmatprep.mubr.bf16.mxu0 0
      %1128 = vmatmul.mubr.bf16.gmra.mrb[0].mxu0 %v554
      %v1129 = vpop.f32.mrb[0].mxu0
      %v1130 = vadd.f32 %v937, %v1129
      %v1131 = vpop.f32.mrb[0].mxu0
      %v1132 = vadd.f32 %v939, %v1131
      %v1133 = vpop.f32.mrb[0].mxu0
      %v1134 = vadd.f32 %v941, %v1133
      %v1135 = vpop.f32.mrb[0].mxu0
      %v1136 = vadd.f32 %v943, %v1135
      %1137 = vmatprep.mubr.bf16.mxu0 0
      %1138 = vmatmul.mubr.bf16.gmra.mrb[0].mxu0 %v557
      %v1139 = vpop.f32.mrb[0].mxu0
      %v1140 = vadd.f32 %v947, %v1139
      %v1141 = vpop.f32.mrb[0].mxu0
      %v1142 = vadd.f32 %v949, %v1141
      %v1143 = vpop.f32.mrb[0].mxu0
      %v1144 = vadd.f32 %v951, %v1143
      %v1145 = vpop.f32.mrb[0].mxu0
      %v1146 = vadd.f32 %v953, %v1145
      %1147 = vmatprep.mubr.bf16.mxu0 0
      %1148 = vmatmul.mubr.bf16.gmra.mrb[0].mxu0 %v560
      %v1149 = vpop.f32.mrb[0].mxu0
      %v1150 = vadd.f32 %v957, %v1149
      %v1151 = vpop.f32.mrb[0].mxu0
      %v1152 = vadd.f32 %v959, %v1151
      %v1153 = vpop.f32.mrb[0].mxu0
      %v1154 = vadd.f32 %v961, %v1153
      %v1155 = vpop.f32.mrb[0].mxu0
      %v1156 = vadd.f32 %v963, %v1155
      %1157 = vmatprep.mubr.bf16.mxu0 0
      %1158 = vmatmul.mubr.bf16.gmra.mrb[0].mxu0 %v563
      %v1159 = vpop.f32.mrb[0].mxu0
      %v1160 = vadd.f32 %v967, %v1159
      %v1161 = vpop.f32.mrb[0].mxu0
      %v1162 = vadd.f32 %v969, %v1161
      %v1163 = vpop.f32.mrb[0].mxu0
      %v1164 = vadd.f32 %v971, %v1163
      %v1165 = vpop.f32.mrb[0].mxu0
      %v1166 = vadd.f32 %v973, %v1165
      %1167 = vmatprep.mubr.bf16.mxu0 0
      %1168 = vmatmul.mubr.bf16.gmra.mrb[0].mxu0 %v566
      %v1169 = vpop.f32.mrb[0].mxu0
      %v1170 = vadd.f32 %v977, %v1169
      %v1171 = vpop.f32.mrb[0].mxu0
      %v1172 = vadd.f32 %v979, %v1171
      %v1173 = vpop.f32.mrb[0].mxu0
      %v1174 = vadd.f32 %v981, %v1173
      %v1175 = vpop.f32.mrb[0].mxu0
      %v1176 = vadd.f32 %v983, %v1175
      %1177 = vmatprep.mubr.bf16.mxu0 0
      %1178 = vmatmul.mubr.bf16.gmra.mrb[0].mxu0 %v569
      %v1179 = vpop.f32.mrb[0].mxu0
      %v1180 = vadd.f32 %v987, %v1179
      %v1181 = vpop.f32.mrb[0].mxu0
      %v1182 = vadd.f32 %v989, %v1181
      %v1183 = vpop.f32.mrb[0].mxu0
      %v1184 = vadd.f32 %v991, %v1183
      %v1185 = vpop.f32.mrb[0].mxu0
      %v1186 = vadd.f32 %v993, %v1185
      %1187 = vmatprep.mubr.bf16.mxu0 0
      %1188 = vmatmul.mubr.bf16.gmra.mrb[0].mxu0 %v572
      %v1189 = vpop.f32.mrb[0].mxu0
      %v1190 = vadd.f32 %v997, %v1189
      %v1191 = vpop.f32.mrb[0].mxu0
      %v1192 = vadd.f32 %v999, %v1191
      %v1193 = vpop.f32.mrb[0].mxu0
      %v1194 = vadd.f32 %v1001, %v1193
      %v1195 = vpop.f32.mrb[0].mxu0
      %v1196 = vadd.f32 %v1003, %v1195
      %1197 = vmatprep.mubr.bf16.mxu0 0
      %1198 = vmatmul.mubr.bf16.gmra.mrb[0].mxu0 %v575
      %v1199 = vpop.f32.mrb[0].mxu0
      %v1200 = vadd.f32 %v1007, %v1199
      %v1201 = vpop.f32.mrb[0].mxu0
      %v1202 = vadd.f32 %v1009, %v1201
      %v1203 = vpop.f32.mrb[0].mxu0
      %v1204 = vadd.f32 %v1011, %v1203
      %v1205 = vpop.f32.mrb[0].mxu0
      %v1206 = vadd.f32 %v1013, %v1205
      %1207 = vmatprep.mubr.bf16.mxu0 0
      %1208 = vmatmul.mubr.bf16.gmra.mrb[0].mxu0 %v578
      %v1209 = vpop.f32.mrb[0].mxu0
      %v1210 = vadd.f32 %v1017, %v1209
      %v1211 = vpop.f32.mrb[0].mxu0
      %v1212 = vadd.f32 %v1019, %v1211
      %v1213 = vpop.f32.mrb[0].mxu0
      %v1214 = vadd.f32 %v1021, %v1213
      %v1215 = vpop.f32.mrb[0].mxu0
      %v1216 = vadd.f32 %v1023, %v1215
      %1217 = vmatprep.mubr.bf16.mxu0 0
      %1218 = vmatmul.mubr.bf16.gmra.mrb[0].mxu0 %v581
      %v1219 = vpop.f32.mrb[0].mxu0
      %v1220 = vadd.f32 %v1027, %v1219
      %v1221 = vpop.f32.mrb[0].mxu0
      %v1222 = vadd.f32 %v1029, %v1221
      %v1223 = vpop.f32.mrb[0].mxu0
      %v1224 = vadd.f32 %v1031, %v1223
      %v1225 = vpop.f32.mrb[0].mxu0
      %v1226 = vadd.f32 %v1033, %v1225
      %1227 = vmatprep.mubr.bf16.mxu0 0
      %1228 = vmatmul.mubr.bf16.gmra.mrb[0].mxu0 %v584
      %v1229 = vpop.f32.mrb[0].mxu0
      %v1230 = vadd.f32 %v1037, %v1229
      %v1231 = vpop.f32.mrb[0].mxu0
      %v1232 = vadd.f32 %v1039, %v1231
      %v1233 = vpop.f32.mrb[0].mxu0
      %v1234 = vadd.f32 %v1041, %v1233
      %v1235 = vpop.f32.mrb[0].mxu0
      %v1236 = vadd.f32 %v1043, %v1235
      %1237 = vmatprep.mubr.bf16.mxu0 0
      %1238 = vmatmul.mubr.bf16.gmra.mrb[0].mxu0 %v587
      %v1239 = vpop.f32.mrb[0].mxu0
      %v1240 = vadd.f32 %v1047, %v1239
      %v1241 = vpop.f32.mrb[0].mxu0
      %v1242 = vadd.f32 %v1049, %v1241
      %v1243 = vpop.f32.mrb[0].mxu0
      %v1244 = vadd.f32 %v1051, %v1243
      %v1245 = vpop.f32.mrb[0].mxu0
      %v1246 = vadd.f32 %v1053, %v1245
      %1247 = vmatprep.mubr.bf16.mxu0 0
      %1248 = vmatmul.mubr.bf16.gmra.mrb[0].mxu0 %v590
      %v1249 = vpop.f32.mrb[0].mxu0
      %v1250 = vadd.f32 %v1057, %v1249
      %v1251 = vpop.f32.mrb[0].mxu0
      %v1252 = vadd.f32 %v1059, %v1251
      %v1253 = vpop.f32.mrb[0].mxu0
      %v1254 = vadd.f32 %v1061, %v1253
      %v1255 = vpop.f32.mrb[0].mxu0
      %v1256 = vadd.f32 %v1063, %v1255
      %1257 = vmatprep.mubr.bf16.mxu0 0
      %1258 = vmatmul.mubr.bf16.gmra.mrb[0].mxu0 %v593
      %v1259 = vpop.f32.mrb[0].mxu0
      %v1260 = vadd.f32 %v1067, %v1259
      %v1261 = vpop.f32.mrb[0].mxu0
      %v1262 = vadd.f32 %v1069, %v1261
      %v1263 = vpop.f32.mrb[0].mxu0
      %v1264 = vadd.f32 %v1071, %v1263
      %v1265 = vpop.f32.mrb[0].mxu0
      %v1266 = vadd.f32 %v1073, %v1265
      %1267 = vdwg.mxu0
      %v1268 = vmax.f32 %v1110, 0.0
      %v1269 = vmax.f32 %v1112, 0.0
      %v1270 = vmax.f32 %v1114, 0.0
      %v1271 = vmax.f32 %v1116, 0.0
      %v1272 = vmax.f32 %v1120, 0.0
      %v1273 = vmax.f32 %v1122, 0.0
      %v1274 = vmax.f32 %v1124, 0.0
      %v1275 = vmax.f32 %v1126, 0.0
      %v1276 = vmax.f32 %v1130, 0.0
      %v1277 = vmax.f32 %v1132, 0.0
      %v1278 = vmax.f32 %v1134, 0.0
      %v1279 = vmax.f32 %v1136, 0.0
      %v1280 = vmax.f32 %v1140, 0.0
      %v1281 = vmax.f32 %v1142, 0.0
      %v1282 = vmax.f32 %v1144, 0.0
      %v1283 = vmax.f32 %v1146, 0.0
      %v1284 = vmax.f32 %v1150, 0.0
      %v1285 = vmax.f32 %v1152, 0.0
      %v1286 = vmax.f32 %v1154, 0.0
      %v1287 = vmax.f32 %v1156, 0.0
      %v1288 = vmax.f32 %v1160, 0.0
      %v1289 = vmax.f32 %v1162, 0.0
      %v1290 = vmax.f32 %v1164, 0.0
      %v1291 = vmax.f32 %v1166, 0.0
      %v1292 = vmax.f32 %v1170, 0.0
      %v1293 = vmax.f32 %v1172, 0.0
      %v1294 = vmax.f32 %v1174, 0.0
      %v1295 = vmax.f32 %v1176, 0.0
      %v1296 = vmax.f32 %v1180, 0.0
      %v1297 = vmax.f32 %v1182, 0.0
      %v1298 = vmax.f32 %v1184, 0.0
      %v1299 = vmax.f32 %v1186, 0.0
      %v1300 = vmax.f32 %v1190, 0.0
      %v1301 = vmax.f32 %v1192, 0.0
      %v1302 = vmax.f32 %v1194, 0.0
      %v1303 = vmax.f32 %v1196, 0.0
      %v1304 = vmax.f32 %v1200, 0.0
      %v1305 = vmax.f32 %v1202, 0.0
      %v1306 = vmax.f32 %v1204, 0.0
      %v1307 = vmax.f32 %v1206, 0.0
      %v1308 = vmax.f32 %v1210, 0.0
      %v1309 = vmax.f32 %v1212, 0.0
      %v1310 = vmax.f32 %v1214, 0.0
      %v1311 = vmax.f32 %v1216, 0.0
      %v1312 = vmax.f32 %v1220, 0.0
      %v1313 = vmax.f32 %v1222, 0.0
      %v1314 = vmax.f32 %v1224, 0.0
      %v1315 = vmax.f32 %v1226, 0.0
      %v1316 = vmax.f32 %v1230, 0.0
      %v1317 = vmax.f32 %v1232, 0.0
      %v1318 = vmax.f32 %v1234, 0.0
      %v1319 = vmax.f32 %v1236, 0.0
      %v1320 = vmax.f32 %v1240, 0.0
      %v1321 = vmax.f32 %v1242, 0.0
      %v1322 = vmax.f32 %v1244, 0.0
      %v1323 = vmax.f32 %v1246, 0.0
      %v1324 = vmax.f32 %v1250, 0.0
      %v1325 = vmax.f32 %v1252, 0.0
      %v1326 = vmax.f32 %v1254, 0.0
      %v1327 = vmax.f32 %v1256, 0.0
      %v1328 = vmax.f32 %v1260, 0.0
      %v1329 = vmax.f32 %v1262, 0.0
      %v1330 = vmax.f32 %v1264, 0.0
      %v1331 = vmax.f32 %v1266, 0.0
      %1332 = vxpose.xlu0.b32.start [1/16] %v1268, 128
      %1333 = vxpose.xlu0.b32.cont [2/16] %v1270, 128
      %1334 = vxpose.xlu0.b32.cont [3/16] %v1272, 128
      %1335 = vxpose.xlu0.b32.cont [4/16] %v1274, 128
      %1336 = vxpose.xlu0.b32.cont [5/16] %v1276, 128
      %1337 = vxpose.xlu0.b32.cont [6/16] %v1278, 128
      %1338 = vxpose.xlu0.b32.cont [7/16] %v1280, 128
      %1339 = vxpose.xlu0.b32.cont [8/16] %v1282, 128
      %1340 = vxpose.xlu0.b32.cont [9/16] %v1284, 128
      %1341 = vxpose.xlu0.b32.cont [10/16] %v1286, 128
      %1342 = vxpose.xlu0.b32.cont [11/16] %v1288, 128
      %1343 = vxpose.xlu0.b32.cont [12/16] %v1290, 128
      %1344 = vxpose.xlu0.b32.cont [13/16] %v1292, 128
      %1345 = vxpose.xlu0.b32.cont [14/16] %v1294, 128
      %1346 = vxpose.xlu0.b32.cont [15/16] %v1296, 128
      %1347 = vxpose.xlu0.b32.end [16/16] %v1298, 128
      %v1348 = vpop.trf.xlu0
      %v1349 = vpop.trf.xlu0
      %v1350 = vpop.trf.xlu0
      %v1351 = vpop.trf.xlu0
      %v1352 = vpop.trf.xlu0
      %v1353 = vpop.trf.xlu0
      %v1354 = vpop.trf.xlu0
      %v1355 = vpop.trf.xlu0
      %v1356 = vpop.trf.xlu0
      %v1357 = vpop.trf.xlu0
      %v1358 = vpop.trf.xlu0
      %v1359 = vpop.trf.xlu0
      %v1360 = vpop.trf.xlu0
      %v1361 = vpop.trf.xlu0
      %v1362 = vpop.trf.xlu0
      %v1363 = vpop.trf.xlu0
      %1364 = vxpose.xlu0.b32.start [1/16] %v1269, 128
      %1365 = vxpose.xlu0.b32.cont [2/16] %v1271, 128
      %1366 = vxpose.xlu0.b32.cont [3/16] %v1273, 128
      %1367 = vxpose.xlu0.b32.cont [4/16] %v1275, 128
      %1368 = vxpose.xlu0.b32.cont [5/16] %v1277, 128
      %1369 = vxpose.xlu0.b32.cont [6/16] %v1279, 128
      %1370 = vxpose.xlu0.b32.cont [7/16] %v1281, 128
      %1371 = vxpose.xlu0.b32.cont [8/16] %v1283, 128
      %1372 = vxpose.xlu0.b32.cont [9/16] %v1285, 128
      %1373 = vxpose.xlu0.b32.cont [10/16] %v1287, 128
      %1374 = vxpose.xlu0.b32.cont [11/16] %v1289, 128
      %1375 = vxpose.xlu0.b32.cont [12/16] %v1291, 128
      %1376 = vxpose.xlu0.b32.cont [13/16] %v1293, 128
      %1377 = vxpose.xlu0.b32.cont [14/16] %v1295, 128
      %1378 = vxpose.xlu0.b32.cont [15/16] %v1297, 128
      %1379 = vxpose.xlu0.b32.end [16/16] %v1299, 128
      %v1380 = vpop.trf.xlu0
      %v1381 = vpop.trf.xlu0
      %v1382 = vpop.trf.xlu0
      %v1383 = vpop.trf.xlu0
      %v1384 = vpop.trf.xlu0
      %v1385 = vpop.trf.xlu0
      %v1386 = vpop.trf.xlu0
      %v1387 = vpop.trf.xlu0
      %v1388 = vpop.trf.xlu0
      %v1389 = vpop.trf.xlu0
      %v1390 = vpop.trf.xlu0
      %v1391 = vpop.trf.xlu0
      %v1392 = vpop.trf.xlu0
      %v1393 = vpop.trf.xlu0
      %v1394 = vpop.trf.xlu0
      %v1395 = vpop.trf.xlu0
      %1396 = vxpose.xlu0.b32.start [1/16] %v1300, 128
      %1397 = vxpose.xlu0.b32.cont [2/16] %v1302, 128
      %1398 = vxpose.xlu0.b32.cont [3/16] %v1304, 128
      %1399 = vxpose.xlu0.b32.cont [4/16] %v1306, 128
      %1400 = vxpose.xlu0.b32.cont [5/16] %v1308, 128
      %1401 = vxpose.xlu0.b32.cont [6/16] %v1310, 128
      %1402 = vxpose.xlu0.b32.cont [7/16] %v1312, 128
      %1403 = vxpose.xlu0.b32.cont [8/16] %v1314, 128
      %1404 = vxpose.xlu0.b32.cont [9/16] %v1316, 128
      %1405 = vxpose.xlu0.b32.cont [10/16] %v1318, 128
      %1406 = vxpose.xlu0.b32.cont [11/16] %v1320, 128
      %1407 = vxpose.xlu0.b32.cont [12/16] %v1322, 128
      %1408 = vxpose.xlu0.b32.cont [13/16] %v1324, 128
      %1409 = vxpose.xlu0.b32.cont [14/16] %v1326, 128
      %1410 = vxpose.xlu0.b32.cont [15/16] %v1328, 128
      %1411 = vxpose.xlu0.b32.end [16/16] %v1330, 128
      %v1412 = vpop.trf.xlu0
      %v1413 = vpop.trf.xlu0
      %v1414 = vpop.trf.xlu0
      %v1415 = vpop.trf.xlu0
      %v1416 = vpop.trf.xlu0
      %v1417 = vpop.trf.xlu0
      %v1418 = vpop.trf.xlu0
      %v1419 = vpop.trf.xlu0
      %v1420 = vpop.trf.xlu0
      %v1421 = vpop.trf.xlu0
      %v1422 = vpop.trf.xlu0
      %v1423 = vpop.trf.xlu0
      %v1424 = vpop.trf.xlu0
      %v1425 = vpop.trf.xlu0
      %v1426 = vpop.trf.xlu0
      %v1427 = vpop.trf.xlu0
      %1428 = vxpose.xlu0.b32.start [1/16] %v1301, 128
      %1429 = vxpose.xlu0.b32.cont [2/16] %v1303, 128
      %1430 = vxpose.xlu0.b32.cont [3/16] %v1305, 128
      %1431 = vxpose.xlu0.b32.cont [4/16] %v1307, 128
      %1432 = vxpose.xlu0.b32.cont [5/16] %v1309, 128
      %1433 = vxpose.xlu0.b32.cont [6/16] %v1311, 128
      %1434 = vxpose.xlu0.b32.cont [7/16] %v1313, 128
      %1435 = vxpose.xlu0.b32.cont [8/16] %v1315, 128
      %1436 = vxpose.xlu0.b32.cont [9/16] %v1317, 128
      %1437 = vxpose.xlu0.b32.cont [10/16] %v1319, 128
      %1438 = vxpose.xlu0.b32.cont [11/16] %v1321, 128
      %1439 = vxpose.xlu0.b32.cont [12/16] %v1323, 128
      %1440 = vxpose.xlu0.b32.cont [13/16] %v1325, 128
      %1441 = vxpose.xlu0.b32.cont [14/16] %v1327, 128
      %1442 = vxpose.xlu0.b32.cont [15/16] %v1329, 128
      %1443 = vxpose.xlu0.b32.end [16/16] %v1331, 128
      %v1444 = vpop.trf.xlu0
      %v1445 = vpop.trf.xlu0
      %v1446 = vpop.trf.xlu0
      %v1447 = vpop.trf.xlu0
      %v1448 = vpop.trf.xlu0
      %v1449 = vpop.trf.xlu0
      %v1450 = vpop.trf.xlu0
      %v1451 = vpop.trf.xlu0
      %v1452 = vpop.trf.xlu0
      %v1453 = vpop.trf.xlu0
      %v1454 = vpop.trf.xlu0
      %v1455 = vpop.trf.xlu0
      %v1456 = vpop.trf.xlu0
      %v1457 = vpop.trf.xlu0
      %v1458 = vpop.trf.xlu0
      %v1459 = vpop.trf.xlu0
      %1460 = vst [vmem:[%s250] sm:$0xff] %v1348
      %1461 = vst [vmem:[%s250 + $0x8] sm:$0xff] %v1412
      %1462 = vst [vmem:[%s250 + $0x10] sm:$0xff] %v1349
      %1463 = vst [vmem:[%s250 + $0x18] sm:$0xff] %v1413
      %1464 = vst [vmem:[%s250 + $0x20] sm:$0xff] %v1350
      %1465 = vst [vmem:[%s250 + $0x28] sm:$0xff] %v1414
      %1466 = vst [vmem:[%s250 + $0x30] sm:$0xff] %v1351
      %1467 = vst [vmem:[%s250 + $0x38] sm:$0xff] %v1415
      %1468 = vst [vmem:[%s250 + $0x40] sm:$0xff] %v1352
      %1469 = vst [vmem:[%s250 + $0x48] sm:$0xff] %v1416
      %1470 = vst [vmem:[%s250 + $0x50] sm:$0xff] %v1353
      %1471 = vst [vmem:[%s250 + $0x58] sm:$0xff] %v1417
      %1472 = vst [vmem:[%s250 + $0x60] sm:$0xff] %v1354
      %1473 = vst [vmem:[%s250 + $0x68] sm:$0xff] %v1418
      %1474 = vst [vmem:[%s250 + $0x70] sm:$0xff] %v1355
      %1475 = vst [vmem:[%s250 + $0x78] sm:$0xff] %v1419
      %1476 = vst [vmem:[%s250 + $0x80] sm:$0xff] %v1356
      %1477 = vst [vmem:[%s250 + $0x88] sm:$0xff] %v1420
      %1478 = vst [vmem:[%s250 + $0x90] sm:$0xff] %v1357
      %1479 = vst [vmem:[%s250 + $0x98] sm:$0xff] %v1421
      %1480 = vst [vmem:[%s250 + $0xa0] sm:$0xff] %v1358
      %1481 = vst [vmem:[%s250 + $0xa8] sm:$0xff] %v1422
      %1482 = vst [vmem:[%s250 + $0xb0] sm:$0xff] %v1359
      %1483 = vst [vmem:[%s250 + $0xb8] sm:$0xff] %v1423
      %1484 = vst [vmem:[%s250 + $0xc0] sm:$0xff] %v1360
      %1485 = vst [vmem:[%s250 + $0xc8] sm:$0xff] %v1424
      %1486 = vst [vmem:[%s250 + $0xd0] sm:$0xff] %v1361
      %1487 = vst [vmem:[%s250 + $0xd8] sm:$0xff] %v1425
      %1488 = vst [vmem:[%s250 + $0xe0] sm:$0xff] %v1362
      %1489 = vst [vmem:[%s250 + $0xe8] sm:$0xff] %v1426
      %1490 = vst [vmem:[%s250 + $0xf0] sm:$0xff] %v1363
      %1491 = vst [vmem:[%s250 + $0xf8] sm:$0xff] %v1427
      %1492 = vst [vmem:[%s250 + $0x100] sm:$0xff] %v1380
      %1493 = vst [vmem:[%s250 + $0x108] sm:$0xff] %v1444
      %1494 = vst [vmem:[%s250 + $0x110] sm:$0xff] %v1381
      %1495 = vst [vmem:[%s250 + $0x118] sm:$0xff] %v1445
      %1496 = vst [vmem:[%s250 + $0x120] sm:$0xff] %v1382
      %1497 = vst [vmem:[%s250 + $0x128] sm:$0xff] %v1446
      %1498 = vst [vmem:[%s250 + $0x130] sm:$0xff] %v1383
      %1499 = vst [vmem:[%s250 + $0x138] sm:$0xff] %v1447
      %1500 = vst [vmem:[%s250 + $0x140] sm:$0xff] %v1384
      %1501 = vst [vmem:[%s250 + $0x148] sm:$0xff] %v1448
      %1502 = vst [vmem:[%s250 + $0x150] sm:$0xff] %v1385
      %1503 = vst [vmem:[%s250 + $0x158] sm:$0xff] %v1449
      %1504 = vst [vmem:[%s250 + $0x160] sm:$0xff] %v1386
      %1505 = vst [vmem:[%s250 + $0x168] sm:$0xff] %v1450
      %1506 = vst [vmem:[%s250 + $0x170] sm:$0xff] %v1387
      %1507 = vst [vmem:[%s250 + $0x178] sm:$0xff] %v1451
      %1508 = vst [vmem:[%s250 + $0x180] sm:$0xff] %v1388
      %1509 = vst [vmem:[%s250 + $0x188] sm:$0xff] %v1452
      %1510 = vst [vmem:[%s250 + $0x190] sm:$0xff] %v1389
      %1511 = vst [vmem:[%s250 + $0x198] sm:$0xff] %v1453
      %1512 = vst [vmem:[%s250 + $0x1a0] sm:$0xff] %v1390
      %1513 = vst [vmem:[%s250 + $0x1a8] sm:$0xff] %v1454
      %1514 = vst [vmem:[%s250 + $0x1b0] sm:$0xff] %v1391
      %1515 = vst [vmem:[%s250 + $0x1b8] sm:$0xff] %v1455
      %1516 = vst [vmem:[%s250 + $0x1c0] sm:$0xff] %v1392
      %1517 = vst [vmem:[%s250 + $0x1c8] sm:$0xff] %v1456
      %1518 = vst [vmem:[%s250 + $0x1d0] sm:$0xff] %v1393
      %1519 = vst [vmem:[%s250 + $0x1d8] sm:$0xff] %v1457
      %1520 = vst [vmem:[%s250 + $0x1e0] sm:$0xff] %v1394
      %1521 = vst [vmem:[%s250 + $0x1e8] sm:$0xff] %v1458
      %1522 = vst [vmem:[%s250 + $0x1f0] sm:$0xff] %v1395
      %1523 = vst [vmem:[%s250 + $0x1f8] sm:$0xff] %v1459
      %v1524 = vpack.c.bf16 %v1270, %v1268
      %v1525 = vpack.c.bf16 %v1271, %v1269
      %v1526 = vpack.c.bf16 %v1274, %v1272
      %v1527 = vpack.c.bf16 %v1275, %v1273
      %v1528 = vpack.c.bf16 %v1278, %v1276
      %v1529 = vpack.c.bf16 %v1279, %v1277
      %v1530 = vpack.c.bf16 %v1282, %v1280
      %v1531 = vpack.c.bf16 %v1283, %v1281
      %v1532 = vpack.c.bf16 %v1286, %v1284
      %v1533 = vpack.c.bf16 %v1287, %v1285
      %v1534 = vpack.c.bf16 %v1290, %v1288
      %v1535 = vpack.c.bf16 %v1291, %v1289
      %v1536 = vpack.c.bf16 %v1294, %v1292
      %v1537 = vpack.c.bf16 %v1295, %v1293
      %v1538 = vpack.c.bf16 %v1298, %v1296
      %v1539 = vpack.c.bf16 %v1299, %v1297
      %v1540 = vpack.c.bf16 %v1302, %v1300
      %v1541 = vpack.c.bf16 %v1303, %v1301
      %v1542 = vpack.c.bf16 %v1306, %v1304
      %v1543 = vpack.c.bf16 %v1307, %v1305
      %v1544 = vpack.c.bf16 %v1310, %v1308
      %v1545 = vpack.c.bf16 %v1311, %v1309
      %v1546 = vpack.c.bf16 %v1314, %v1312
      %v1547 = vpack.c.bf16 %v1315, %v1313
      %v1548 = vpack.c.bf16 %v1318, %v1316
      %v1549 = vpack.c.bf16 %v1319, %v1317
      %v1550 = vpack.c.bf16 %v1322, %v1320
      %v1551 = vpack.c.bf16 %v1323, %v1321
      %v1552 = vpack.c.bf16 %v1326, %v1324
      %v1553 = vpack.c.bf16 %v1327, %v1325
      %v1554 = vpack.c.bf16 %v1330, %v1328
      %v1555 = vpack.c.bf16 %v1331, %v1329
      %v1588 = vunpack.c.l.b16 %v1524
      %v1589 = vunpack.c.l.b16 %v1525
      %v1590 = vunpack.c.h.b16 %v1524
      %v1591 = vunpack.c.h.b16 %v1525
      %v1592 = vunpack.c.l.b16 %v1526
      %v1593 = vunpack.c.l.b16 %v1527
      %v1594 = vunpack.c.h.b16 %v1526
      %v1595 = vunpack.c.h.b16 %v1527
      %v1596 = vunpack.c.l.b16 %v1528
      %v1597 = vunpack.c.l.b16 %v1529
      %v1598 = vunpack.c.h.b16 %v1528
      %v1599 = vunpack.c.h.b16 %v1529
      %v1600 = vunpack.c.l.b16 %v1530
      %v1601 = vunpack.c.l.b16 %v1531
      %v1602 = vunpack.c.h.b16 %v1530
      %v1603 = vunpack.c.h.b16 %v1531
      %v1604 = vunpack.c.l.b16 %v1532
      %v1605 = vunpack.c.l.b16 %v1533
      %v1606 = vunpack.c.h.b16 %v1532
      %v1607 = vunpack.c.h.b16 %v1533
      %v1608 = vunpack.c.l.b16 %v1534
      %v1609 = vunpack.c.l.b16 %v1535
      %v1610 = vunpack.c.h.b16 %v1534
      %v1611 = vunpack.c.h.b16 %v1535
      %v1612 = vunpack.c.l.b16 %v1536
      %v1613 = vunpack.c.l.b16 %v1537
      %v1614 = vunpack.c.h.b16 %v1536
      %v1615 = vunpack.c.h.b16 %v1537
      %v1616 = vunpack.c.l.b16 %v1538
      %v1617 = vunpack.c.l.b16 %v1539
      %v1618 = vunpack.c.h.b16 %v1538
      %v1619 = vunpack.c.h.b16 %v1539
      %v1620 = vunpack.c.l.b16 %v1540
      %v1621 = vunpack.c.l.b16 %v1541
      %v1622 = vunpack.c.h.b16 %v1540
      %v1623 = vunpack.c.h.b16 %v1541
      %v1624 = vunpack.c.l.b16 %v1542
      %v1625 = vunpack.c.l.b16 %v1543
      %v1626 = vunpack.c.h.b16 %v1542
      %v1627 = vunpack.c.h.b16 %v1543
      %v1628 = vunpack.c.l.b16 %v1544
      %v1629 = vunpack.c.l.b16 %v1545
      %v1630 = vunpack.c.h.b16 %v1544
      %v1631 = vunpack.c.h.b16 %v1545
      %v1632 = vunpack.c.l.b16 %v1546
      %v1633 = vunpack.c.l.b16 %v1547
      %v1634 = vunpack.c.h.b16 %v1546
      %v1635 = vunpack.c.h.b16 %v1547
      %v1636 = vunpack.c.l.b16 %v1548
      %v1637 = vunpack.c.l.b16 %v1549
      %v1638 = vunpack.c.h.b16 %v1548
      %v1639 = vunpack.c.h.b16 %v1549
      %v1640 = vunpack.c.l.b16 %v1550
      %v1641 = vunpack.c.l.b16 %v1551
      %v1642 = vunpack.c.h.b16 %v1550
      %v1643 = vunpack.c.h.b16 %v1551
      %v1644 = vunpack.c.l.b16 %v1552
      %v1645 = vunpack.c.l.b16 %v1553
      %v1646 = vunpack.c.h.b16 %v1552
      %v1647 = vunpack.c.h.b16 %v1553
      %v1648 = vunpack.c.l.b16 %v1554
      %v1649 = vunpack.c.l.b16 %v1555
      %v1650 = vunpack.c.h.b16 %v1554
      %v1651 = vunpack.c.h.b16 %v1555
      %v1652 = vpack.c.b16 %v1589, %v1588
      %v1653 = vpack.c.b16 %v1591, %v1590
      %v1654 = vpack.c.b16 %v1593, %v1592
      %v1655 = vpack.c.b16 %v1595, %v1594
      %v1656 = vpack.c.b16 %v1597, %v1596
      %v1657 = vpack.c.b16 %v1599, %v1598
      %v1658 = vpack.c.b16 %v1601, %v1600
      %v1659 = vpack.c.b16 %v1603, %v1602
      %v1660 = vpack.c.b16 %v1605, %v1604
      %v1661 = vpack.c.b16 %v1607, %v1606
      %v1662 = vpack.c.b16 %v1609, %v1608
      %v1663 = vpack.c.b16 %v1611, %v1610
      %v1664 = vpack.c.b16 %v1613, %v1612
      %v1665 = vpack.c.b16 %v1615, %v1614
      %v1666 = vpack.c.b16 %v1617, %v1616
      %v1667 = vpack.c.b16 %v1619, %v1618
      %v1668 = vpack.c.b16 %v1621, %v1620
      %v1669 = vpack.c.b16 %v1623, %v1622
      %v1670 = vpack.c.b16 %v1625, %v1624
      %v1671 = vpack.c.b16 %v1627, %v1626
      %v1672 = vpack.c.b16 %v1629, %v1628
      %v1673 = vpack.c.b16 %v1631, %v1630
      %v1674 = vpack.c.b16 %v1633, %v1632
      %v1675 = vpack.c.b16 %v1635, %v1634
      %v1676 = vpack.c.b16 %v1637, %v1636
      %v1677 = vpack.c.b16 %v1639, %v1638
      %v1678 = vpack.c.b16 %v1641, %v1640
      %v1679 = vpack.c.b16 %v1643, %v1642
      %v1680 = vpack.c.b16 %v1645, %v1644
      %v1681 = vpack.c.b16 %v1647, %v1646
      %v1682 = vpack.c.b16 %v1649, %v1648
      %v1683 = vpack.c.b16 %v1651, %v1650
      %1716 = vst [vmem:[%s258] sm:$0xff] %v1652
      %1717 = vst [vmem:[%s258 + $0x8] sm:$0xff] %v1653
      %1718 = vst [vmem:[%s258 + $0x10] sm:$0xff] %v1654
      %1719 = vst [vmem:[%s258 + $0x18] sm:$0xff] %v1655
      %1720 = vst [vmem:[%s258 + $0x20] sm:$0xff] %v1656
      %1721 = vst [vmem:[%s258 + $0x28] sm:$0xff] %v1657
      %1722 = vst [vmem:[%s258 + $0x30] sm:$0xff] %v1658
      %1723 = vst [vmem:[%s258 + $0x38] sm:$0xff] %v1659
      %1724 = vst [vmem:[%s258 + $0x40] sm:$0xff] %v1660
      %1725 = vst [vmem:[%s258 + $0x48] sm:$0xff] %v1661
      %1726 = vst [vmem:[%s258 + $0x50] sm:$0xff] %v1662
      %1727 = vst [vmem:[%s258 + $0x58] sm:$0xff] %v1663
      %1728 = vst [vmem:[%s258 + $0x60] sm:$0xff] %v1664
      %1729 = vst [vmem:[%s258 + $0x68] sm:$0xff] %v1665
      %1730 = vst [vmem:[%s258 + $0x70] sm:$0xff] %v1666
      %1731 = vst [vmem:[%s258 + $0x78] sm:$0xff] %v1667
      %1732 = vst [vmem:[%s258 + $0x80] sm:$0xff] %v1668
      %1733 = vst [vmem:[%s258 + $0x88] sm:$0xff] %v1669
      %1734 = vst [vmem:[%s258 + $0x90] sm:$0xff] %v1670
      %1735 = vst [vmem:[%s258 + $0x98] sm:$0xff] %v1671
      %1736 = vst [vmem:[%s258 + $0xa0] sm:$0xff] %v1672
      %1737 = vst [vmem:[%s258 + $0xa8] sm:$0xff] %v1673
      %1738 = vst [vmem:[%s258 + $0xb0] sm:$0xff] %v1674
      %1739 = vst [vmem:[%s258 + $0xb8] sm:$0xff] %v1675
      %1740 = vst [vmem:[%s258 + $0xc0] sm:$0xff] %v1676
      %1741 = vst [vmem:[%s258 + $0xc8] sm:$0xff] %v1677
      %1742 = vst [vmem:[%s258 + $0xd0] sm:$0xff] %v1678
      %1743 = vst [vmem:[%s258 + $0xd8] sm:$0xff] %v1679
      %1744 = vst [vmem:[%s258 + $0xe0] sm:$0xff] %v1680
      %1745 = vst [vmem:[%s258 + $0xe8] sm:$0xff] %v1681
      %1746 = vst [vmem:[%s258 + $0xf0] sm:$0xff] %v1682
      %1747 = vst [vmem:[%s258 + $0xf8] sm:$0xff] %v1683
      %s1748 = smul.u32 2, %s21
      %p1749 = scmp.lt.s32.totalorder %s20, 1
      %s1750 = scalar_select %p1749, %s20, 1
      %p1751 = scmp.lt.s32.totalorder %s1748, 1
      %s1752 = scalar_select %p1751, %s1748, 1
      %s1753 = smul.addr %s1750, 64
      %s1754 = sadd.s32 %s1752, %s1753
      %s1755 = smul.addr %s1754, 8
      %s1756 = scalar_lea.vmem %s3, %s1755
      %s1757 = sadd.s32 %s20, %s21
      %s1758 = smul.u32 32, %s1757
      %p1759 = scmp.lt.s32.totalorder %s1758, 63
      %s1760 = scalar_select %p1759, %s1758, 63
      %s1761 = smul.addr %s1760, 2
      %s1762 = smul.addr %s1761, 4
      %s1763 = scalar_lea.vmem %s4, %s1762
      // Predicated region
      $region33: #{_lambda_.2} parent=31 // pred_check
        %p1764 = pneg %p118
      $region34: #{_lambda_.2} parent=31 // pred_check_branch
        %1766 = sbr.rel (%p1764) target = $region36
      $region35: #{_lambda_.2} parent=31 // pred_region
        %s1767 = smul.u32 2, %s21
      $region36: #{_lambda_.2} parent=31 // pred_fallthru
        _
      // Predicated region
      $region37: #{_lambda_.2} parent=31 // pred_check
        %p1768 = pneg %p146
      $region38: #{_lambda_.2} parent=31 // pred_check_branch
        %1770 = sbr.rel (%p1768) target = $region40
      $region39: #{_lambda_.2} parent=31 // pred_region
        %s1771 = sadd.s32 %s20, %s21
        %s1772 = smul.u32 32, %s1771
      $region40: #{_lambda_.2} parent=31 // pred_fallthru
        _
    $region32: #{_lambda_.2} parent=5 // pred_fallthru
      _
    %p1773 = scmp.le.s32.totalorder 2, %s11
    // Predicated region
    $region41: #{_lambda_.2} parent=5 // pred_check
      %p1774 = pneg %p1773
    $region42: #{_lambda_.2} parent=5 // pred_check_branch
      %1776 = sbr.rel (%p1774) target = $region44
    $region43: #{_lambda_.2} parent=5 // pred_region
      %s1777 = ssub.s32 %s11, 2
      // Predicated region
      $region45: #{_lambda_.2} parent=43 // pred_check
        %p1778 = pneg %p124
      $region46: #{_lambda_.2} parent=43 // pred_check_branch
        %1780 = sbr.rel (%p1778) target = $region48
      $region47: #{_lambda_.2} parent=43 // pred_region
        %s1781 = smul.u32 2, %s23
        %p1782 = scmp.lt.s32.totalorder %s22, 1
        %s1783 = scalar_select %p1782, %s22, 1
        %p1784 = scmp.lt.s32.totalorder %s1781, 1
        %s1785 = scalar_select %p1784, %s1781, 1
        %s1786 = smul.addr %s1783, 64
        %s1787 = sadd.s32 %s1785, %s1786
        %s1788 = smul.addr %s1787, 8
        %s1789 = scalar_lea.vmem %s3, %s1788
      $region48: #{_lambda_.2} parent=43 // pred_fallthru
        _
      // Predicated region
      $region49: #{_lambda_.2} parent=43 // pred_check
        %p1790 = pneg %p152
      $region50: #{_lambda_.2} parent=43 // pred_check_branch
        %1792 = sbr.rel (%p1790) target = $region52
      $region51: #{_lambda_.2} parent=43 // pred_region
        %s1793 = sadd.s32 %s22, %s23
        %s1794 = smul.u32 32, %s1793
        %p1795 = scmp.lt.s32.totalorder %s1794, 63
        %s1796 = scalar_select %p1795, %s1794, 63
        %s1797 = smul.addr %s1796, 2
        %s1798 = smul.addr %s1797, 4
        %s1799 = scalar_lea.vmem %s4, %s1798
      $region52: #{_lambda_.2} parent=43 // pred_fallthru
        _
    $region44: #{_lambda_.2} parent=5 // pred_fallthru
      _
  $region6: #{_lambda_.2} parent=0 // loop_footer
    %s15 = sadd.s32 1, %s11
  $region7: #{_lambda_.2} parent=0 // loop_footer_branch
    %10 = sbr.rel target = $region3
  $region8: #{_lambda_.2} parent=0 // loop_exit
    _

// kernel: _lambda_.3
$region0: #{_lambda_.3}
  #allocation0 [shape = 'u32[]', space=smem, size = 0x4, offset = 0x4, fixed_abs, tag = 'smem constant byte address 0x4 - core index']
  #allocation1 [shape = 'u32[144,128]{1,0:T(1,128)}', space=vmem, size = 0x12000, scoped, tag = 'internal scratch']
  #allocation2 [shape = 'f32[32,256]{1,0:T(8,128)}', space=vmem, size = 0x8000, scoped, tag = 'scratch operand']
  %s0 = inlined_call_operand.vmem [shape: bf16[32,512], index: 0, kind: input, shape index: {}]
  %s1 = inlined_call_operand.vmem [shape: bf16[512,256], index: 1, kind: input, shape index: {}]
  %s2 = inlined_call_operand.vmem [shape: f32[8,4], index: 2, kind: input, shape index: {}]
  %s3 = inlined_call_operand.vmem [shape: f32[4,64], index: 3, kind: input, shape index: {}]
  %s4 = inlined_call_operand.vmem [shape: f32[1,64], index: 4, kind: input, shape index: {}]
  %s5 = inlined_call_operand.vmem [shape: bf16[1024,128], index: 5, kind: input, shape index: {}]
  %s6 = inlined_call_operand.vmem [shape: f32[1,128], index: 6, kind: input, shape index: {}, may-alias: {6,9}]
  %s7 = inlined_call_operand.vmem [shape: f32[64,128], index: 7, kind: input, shape index: {}]
  %s8 = inlined_call_operand.vmem [shape: f32[128,128], index: 8, kind: input, shape index: {}]
  %s9 = inlined_call_operand.vmem [shape: f32[1,128], index: 9, kind: input, shape index: {}, may-alias: {6,9}]
  %s10 = inlined_call_operand.vmem [shape: f32[8,128], index: 10, kind: output, shape index: {}]
  %s11 = sld [smem:[#allocation0]]
  $region58: #{_lambda_.3} parent=0
    _
  %s13 = ssub.s32 1, %s11
  %s14 = scalar_select 0, %s13, %s11
  // Predicated region
  $region2: #{_lambda_.3} parent=0 // pred_check
    _
  $region3: #{_lambda_.3} parent=0 // pred_check_branch
    %16 = sbr.rel (0) target = $region5
  $region4: #{_lambda_.3} parent=0 // pred_region
    _
  $region5: #{_lambda_.3} parent=0 // pred_fallthru
    _
  // Predicated region
  $region6: #{_lambda_.3} parent=0 // pred_check
    _
  $region7: #{_lambda_.3} parent=0 // pred_check_branch
    %18 = sbr.rel (0) target = $region9
  $region8: #{_lambda_.3} parent=0 // pred_region
    _
  $region9: #{_lambda_.3} parent=0 // pred_fallthru
    _
  // Predicated region
  $region10: #{_lambda_.3} parent=0 // pred_check
    _
  $region11: #{_lambda_.3} parent=0 // pred_check_branch
    %20 = sbr.rel (0) target = $region13
  $region12: #{_lambda_.3} parent=0 // pred_region
    _
  $region13: #{_lambda_.3} parent=0 // pred_fallthru
    _
  // Predicated region
  $region14: #{_lambda_.3} parent=0 // pred_check
    _
  $region15: #{_lambda_.3} parent=0 // pred_check_branch
    %22 = sbr.rel (0) target = $region17
  $region16: #{_lambda_.3} parent=0 // pred_region
    _
  $region17: #{_lambda_.3} parent=0 // pred_fallthru
    _
  // Predicated region
  $region18: #{_lambda_.3} parent=0 // pred_check
    _
  $region19: #{_lambda_.3} parent=0 // pred_check_branch
    %24 = sbr.rel (0) target = $region21
  $region20: #{_lambda_.3} parent=0 // pred_region
    _
  $region21: #{_lambda_.3} parent=0 // pred_fallthru
    _
  // Predicated region
  $region22: #{_lambda_.3} parent=0 // pred_check
    _
  $region23: #{_lambda_.3} parent=0 // pred_check_branch
    %26 = sbr.rel (0) target = $region25
  $region24: #{_lambda_.3} parent=0 // pred_region
    _
  $region25: #{_lambda_.3} parent=0 // pred_fallthru
    _
  // Predicated region
  $region26: #{_lambda_.3} parent=0 // pred_check
    _
  $region27: #{_lambda_.3} parent=0 // pred_check_branch
    %28 = sbr.rel (0) target = $region29
  $region28: #{_lambda_.3} parent=0 // pred_region
    _
  $region29: #{_lambda_.3} parent=0 // pred_fallthru
    _
  // Predicated region
  $region30: #{_lambda_.3} parent=0 // pred_check
    _
  $region31: #{_lambda_.3} parent=0 // pred_check_branch
    %30 = sbr.rel (0) target = $region33
  $region32: #{_lambda_.3} parent=0 // pred_region
    _
  $region33: #{_lambda_.3} parent=0 // pred_fallthru
    _
  // Predicated region
  $region34: #{_lambda_.3} parent=0 // pred_check
    _
  $region35: #{_lambda_.3} parent=0 // pred_check_branch
    %32 = sbr.rel (0) target = $region37
  $region36: #{_lambda_.3} parent=0 // pred_region
    _
  $region37: #{_lambda_.3} parent=0 // pred_fallthru
    _
  // Predicated region
  $region38: #{_lambda_.3} parent=0 // pred_check
    _
  $region39: #{_lambda_.3} parent=0 // pred_check_branch
    %34 = sbr.rel (0) target = $region41
  $region40: #{_lambda_.3} parent=0 // pred_region
    _
  $region41: #{_lambda_.3} parent=0 // pred_fallthru
    _
  %p36 = scmp.eq.s32.totalorder 0, 0
  // Predicated region
  $region42: #{_lambda_.3} parent=0 // pred_check
    %p37 = pneg %p36
  $region43: #{_lambda_.3} parent=0 // pred_check_branch
    %39 = sbr.rel (%p37) target = $region45
  $region44: #{_lambda_.3} parent=0 // pred_region
    %40 = vst [vmem:[#allocation2] sm:$0xff] 0.0
    %41 = vst [vmem:[#allocation2 + $0x8] sm:$0xff] 0.0
    %42 = vst [vmem:[#allocation2 + $0x10] sm:$0xff] 0.0
    %43 = vst [vmem:[#allocation2 + $0x18] sm:$0xff] 0.0
    %44 = vst [vmem:[#allocation2 + $0x20] sm:$0xff] 0.0
    %45 = vst [vmem:[#allocation2 + $0x28] sm:$0xff] 0.0
    %46 = vst [vmem:[#allocation2 + $0x30] sm:$0xff] 0.0
    %47 = vst [vmem:[#allocation2 + $0x38] sm:$0xff] 0.0
  $region45: #{_lambda_.3} parent=0 // pred_fallthru
    _
  %v48 = vld [vmem:[#allocation2] sm:$0xff]
  %v49 = vld [vmem:[#allocation2 + $0x8] sm:$0xff]
  %v50 = vld [vmem:[#allocation2 + $0x10] sm:$0xff]
  %v51 = vld [vmem:[#allocation2 + $0x18] sm:$0xff]
  %v52 = vld [vmem:[#allocation2 + $0x20] sm:$0xff]
  %v53 = vld [vmem:[#allocation2 + $0x28] sm:$0xff]
  %v54 = vld [vmem:[#allocation2 + $0x30] sm:$0xff]
  %v55 = vld [vmem:[#allocation2 + $0x38] sm:$0xff]
  %v56 = vld [vmem:[%s0] sm:$0xff]
  %v57 = vld [vmem:[%s0 + $0x8] sm:$0xff]
  %v58 = vld [vmem:[%s0 + $0x10] sm:$0xff]
  %v59 = vld [vmem:[%s0 + $0x18] sm:$0xff]
  %v60 = vld [vmem:[%s0 + $0x20] sm:$0xff]
  %v61 = vld [vmem:[%s0 + $0x28] sm:$0xff]
  %v62 = vld [vmem:[%s0 + $0x30] sm:$0xff]
  %v63 = vld [vmem:[%s0 + $0x38] sm:$0xff]
  %v64 = vld [vmem:[%s1] sm:$0xff]
  %v65 = vld [vmem:[%s1 + $0x8] sm:$0xff]
  %v66 = vld [vmem:[%s1 + $0x10] sm:$0xff]
  %v67 = vld [vmem:[%s1 + $0x18] sm:$0xff]
  %v68 = vld [vmem:[%s1 + $0x20] sm:$0xff]
  %v69 = vld [vmem:[%s1 + $0x28] sm:$0xff]
  %v70 = vld [vmem:[%s1 + $0x30] sm:$0xff]
  %v71 = vld [vmem:[%s1 + $0x38] sm:$0xff]
  %v72 = vld [vmem:[%s1 + $0x40] sm:$0xff]
  %v73 = vld [vmem:[%s1 + $0x48] sm:$0xff]
  %v74 = vld [vmem:[%s1 + $0x50] sm:$0xff]
  %v75 = vld [vmem:[%s1 + $0x58] sm:$0xff]
  %v76 = vld [vmem:[%s1 + $0x60] sm:$0xff]
  %v77 = vld [vmem:[%s1 + $0x68] sm:$0xff]
  %v78 = vld [vmem:[%s1 + $0x70] sm:$0xff]
  %v79 = vld [vmem:[%s1 + $0x78] sm:$0xff]
  %v80 = vld [vmem:[%s1 + $0x80] sm:$0xff]
  %v81 = vld [vmem:[%s1 + $0x88] sm:$0xff]
  %v82 = vld [vmem:[%s1 + $0x90] sm:$0xff]
  %v83 = vld [vmem:[%s1 + $0x98] sm:$0xff]
  %v84 = vld [vmem:[%s1 + $0xa0] sm:$0xff]
  %v85 = vld [vmem:[%s1 + $0xa8] sm:$0xff]
  %v86 = vld [vmem:[%s1 + $0xb0] sm:$0xff]
  %v87 = vld [vmem:[%s1 + $0xb8] sm:$0xff]
  %v88 = vld [vmem:[%s1 + $0xc0] sm:$0xff]
  %v89 = vld [vmem:[%s1 + $0xc8] sm:$0xff]
  %v90 = vld [vmem:[%s1 + $0xd0] sm:$0xff]
  %v91 = vld [vmem:[%s1 + $0xd8] sm:$0xff]
  %v92 = vld [vmem:[%s1 + $0xe0] sm:$0xff]
  %v93 = vld [vmem:[%s1 + $0xe8] sm:$0xff]
  %v94 = vld [vmem:[%s1 + $0xf0] sm:$0xff]
  %v95 = vld [vmem:[%s1 + $0xf8] sm:$0xff]
  %v96 = vld [vmem:[%s1 + $0x100] sm:$0xff]
  %v97 = vld [vmem:[%s1 + $0x108] sm:$0xff]
  %v98 = vld [vmem:[%s1 + $0x110] sm:$0xff]
  %v99 = vld [vmem:[%s1 + $0x118] sm:$0xff]
  %v100 = vld [vmem:[%s1 + $0x120] sm:$0xff]
  %v101 = vld [vmem:[%s1 + $0x128] sm:$0xff]
  %v102 = vld [vmem:[%s1 + $0x130] sm:$0xff]
  %v103 = vld [vmem:[%s1 + $0x138] sm:$0xff]
  %v104 = vld [vmem:[%s1 + $0x140] sm:$0xff]
  %v105 = vld [vmem:[%s1 + $0x148] sm:$0xff]
  %v106 = vld [vmem:[%s1 + $0x150] sm:$0xff]
  %v107 = vld [vmem:[%s1 + $0x158] sm:$0xff]
  %v108 = vld [vmem:[%s1 + $0x160] sm:$0xff]
  %v109 = vld [vmem:[%s1 + $0x168] sm:$0xff]
  %v110 = vld [vmem:[%s1 + $0x170] sm:$0xff]
  %v111 = vld [vmem:[%s1 + $0x178] sm:$0xff]
  %v112 = vld [vmem:[%s1 + $0x180] sm:$0xff]
  %v113 = vld [vmem:[%s1 + $0x188] sm:$0xff]
  %v114 = vld [vmem:[%s1 + $0x190] sm:$0xff]
  %v115 = vld [vmem:[%s1 + $0x198] sm:$0xff]
  %v116 = vld [vmem:[%s1 + $0x1a0] sm:$0xff]
  %v117 = vld [vmem:[%s1 + $0x1a8] sm:$0xff]
  %v118 = vld [vmem:[%s1 + $0x1b0] sm:$0xff]
  %v119 = vld [vmem:[%s1 + $0x1b8] sm:$0xff]
  %v120 = vld [vmem:[%s1 + $0x1c0] sm:$0xff]
  %v121 = vld [vmem:[%s1 + $0x1c8] sm:$0xff]
  %v122 = vld [vmem:[%s1 + $0x1d0] sm:$0xff]
  %v123 = vld [vmem:[%s1 + $0x1d8] sm:$0xff]
  %v124 = vld [vmem:[%s1 + $0x1e0] sm:$0xff]
  %v125 = vld [vmem:[%s1 + $0x1e8] sm:$0xff]
  %v126 = vld [vmem:[%s1 + $0x1f0] sm:$0xff]
  %v127 = vld [vmem:[%s1 + $0x1f8] sm:$0xff]
  %v136 = vunpack.c.l.b16 %v56
  %v137 = vunpack.c.h.b16 %v56
  %v138 = vunpack.c.l.b16 %v57
  %v139 = vunpack.c.h.b16 %v57
  %v140 = vunpack.c.l.b16 %v58
  %v141 = vunpack.c.h.b16 %v58
  %v142 = vunpack.c.l.b16 %v59
  %v143 = vunpack.c.h.b16 %v59
  %v144 = vunpack.c.l.b16 %v60
  %v145 = vunpack.c.h.b16 %v60
  %v146 = vunpack.c.l.b16 %v61
  %v147 = vunpack.c.h.b16 %v61
  %v148 = vunpack.c.l.b16 %v62
  %v149 = vunpack.c.h.b16 %v62
  %v150 = vunpack.c.l.b16 %v63
  %v151 = vunpack.c.h.b16 %v63
  %v152 = vpack.c.b16 %v140, %v136
  %v153 = vpack.c.b16 %v141, %v137
  %v154 = vpack.c.b16 %v142, %v138
  %v155 = vpack.c.b16 %v143, %v139
  %v156 = vpack.c.b16 %v148, %v144
  %v157 = vpack.c.b16 %v149, %v145
  %v158 = vpack.c.b16 %v150, %v146
  %v159 = vpack.c.b16 %v151, %v147
  %v232 = vunpack.c.l.b16 %v64
  %v233 = vunpack.c.h.b16 %v64
  %v234 = vunpack.c.l.b16 %v65
  %v235 = vunpack.c.h.b16 %v65
  %v236 = vunpack.c.l.b16 %v66
  %v237 = vunpack.c.h.b16 %v66
  %v238 = vunpack.c.l.b16 %v67
  %v239 = vunpack.c.h.b16 %v67
  %v240 = vunpack.c.l.b16 %v68
  %v241 = vunpack.c.h.b16 %v68
  %v242 = vunpack.c.l.b16 %v69
  %v243 = vunpack.c.h.b16 %v69
  %v244 = vunpack.c.l.b16 %v70
  %v245 = vunpack.c.h.b16 %v70
  %v246 = vunpack.c.l.b16 %v71
  %v247 = vunpack.c.h.b16 %v71
  %v248 = vunpack.c.l.b16 %v72
  %v249 = vunpack.c.h.b16 %v72
  %v250 = vunpack.c.l.b16 %v73
  %v251 = vunpack.c.h.b16 %v73
  %v252 = vunpack.c.l.b16 %v74
  %v253 = vunpack.c.h.b16 %v74
  %v254 = vunpack.c.l.b16 %v75
  %v255 = vunpack.c.h.b16 %v75
  %v256 = vunpack.c.l.b16 %v76
  %v257 = vunpack.c.h.b16 %v76
  %v258 = vunpack.c.l.b16 %v77
  %v259 = vunpack.c.h.b16 %v77
  %v260 = vunpack.c.l.b16 %v78
  %v261 = vunpack.c.h.b16 %v78
  %v262 = vunpack.c.l.b16 %v79
  %v263 = vunpack.c.h.b16 %v79
  %v264 = vunpack.c.l.b16 %v80
  %v265 = vunpack.c.h.b16 %v80
  %v266 = vunpack.c.l.b16 %v81
  %v267 = vunpack.c.h.b16 %v81
  %v268 = vunpack.c.l.b16 %v82
  %v269 = vunpack.c.h.b16 %v82
  %v270 = vunpack.c.l.b16 %v83
  %v271 = vunpack.c.h.b16 %v83
  %v272 = vunpack.c.l.b16 %v84
  %v273 = vunpack.c.h.b16 %v84
  %v274 = vunpack.c.l.b16 %v85
  %v275 = vunpack.c.h.b16 %v85
  %v276 = vunpack.c.l.b16 %v86
  %v277 = vunpack.c.h.b16 %v86
  %v278 = vunpack.c.l.b16 %v87
  %v279 = vunpack.c.h.b16 %v87
  %v280 = vunpack.c.l.b16 %v88
  %v281 = vunpack.c.h.b16 %v88
  %v282 = vunpack.c.l.b16 %v89
  %v283 = vunpack.c.h.b16 %v89
  %v284 = vunpack.c.l.b16 %v90
  %v285 = vunpack.c.h.b16 %v90
  %v286 = vunpack.c.l.b16 %v91
  %v287 = vunpack.c.h.b16 %v91
  %v288 = vunpack.c.l.b16 %v92
  %v289 = vunpack.c.h.b16 %v92
  %v290 = vunpack.c.l.b16 %v93
  %v291 = vunpack.c.h.b16 %v93
  %v292 = vunpack.c.l.b16 %v94
  %v293 = vunpack.c.h.b16 %v94
  %v294 = vunpack.c.l.b16 %v95
  %v295 = vunpack.c.h.b16 %v95
  %v296 = vunpack.c.l.b16 %v96
  %v297 = vunpack.c.h.b16 %v96
  %v298 = vunpack.c.l.b16 %v97
  %v299 = vunpack.c.h.b16 %v97
  %v300 = vunpack.c.l.b16 %v98
  %v301 = vunpack.c.h.b16 %v98
  %v302 = vunpack.c.l.b16 %v99
  %v303 = vunpack.c.h.b16 %v99
  %v304 = vunpack.c.l.b16 %v100
  %v305 = vunpack.c.h.b16 %v100
  %v306 = vunpack.c.l.b16 %v101
  %v307 = vunpack.c.h.b16 %v101
  %v308 = vunpack.c.l.b16 %v102
  %v309 = vunpack.c.h.b16 %v102
  %v310 = vunpack.c.l.b16 %v103
  %v311 = vunpack.c.h.b16 %v103
  %v312 = vunpack.c.l.b16 %v104
  %v313 = vunpack.c.h.b16 %v104
  %v314 = vunpack.c.l.b16 %v105
  %v315 = vunpack.c.h.b16 %v105
  %v316 = vunpack.c.l.b16 %v106
  %v317 = vunpack.c.h.b16 %v106
  %v318 = vunpack.c.l.b16 %v107
  %v319 = vunpack.c.h.b16 %v107
  %v320 = vunpack.c.l.b16 %v108
  %v321 = vunpack.c.h.b16 %v108
  %v322 = vunpack.c.l.b16 %v109
  %v323 = vunpack.c.h.b16 %v109
  %v324 = vunpack.c.l.b16 %v110
  %v325 = vunpack.c.h.b16 %v110
  %v326 = vunpack.c.l.b16 %v111
  %v327 = vunpack.c.h.b16 %v111
  %v328 = vunpack.c.l.b16 %v112
  %v329 = vunpack.c.h.b16 %v112
  %v330 = vunpack.c.l.b16 %v113
  %v331 = vunpack.c.h.b16 %v113
  %v332 = vunpack.c.l.b16 %v114
  %v333 = vunpack.c.h.b16 %v114
  %v334 = vunpack.c.l.b16 %v115
  %v335 = vunpack.c.h.b16 %v115
  %v336 = vunpack.c.l.b16 %v116
  %v337 = vunpack.c.h.b16 %v116
  %v338 = vunpack.c.l.b16 %v117
  %v339 = vunpack.c.h.b16 %v117
  %v340 = vunpack.c.l.b16 %v118
  %v341 = vunpack.c.h.b16 %v118
  %v342 = vunpack.c.l.b16 %v119
  %v343 = vunpack.c.h.b16 %v119
  %v344 = vunpack.c.l.b16 %v120
  %v345 = vunpack.c.h.b16 %v120
  %v346 = vunpack.c.l.b16 %v121
  %v347 = vunpack.c.h.b16 %v121
  %v348 = vunpack.c.l.b16 %v122
  %v349 = vunpack.c.h.b16 %v122
  %v350 = vunpack.c.l.b16 %v123
  %v351 = vunpack.c.h.b16 %v123
  %v352 = vunpack.c.l.b16 %v124
  %v353 = vunpack.c.h.b16 %v124
  %v354 = vunpack.c.l.b16 %v125
  %v355 = vunpack.c.h.b16 %v125
  %v356 = vunpack.c.l.b16 %v126
  %v357 = vunpack.c.h.b16 %v126
  %v358 = vunpack.c.l.b16 %v127
  %v359 = vunpack.c.h.b16 %v127
  %v360 = vpack.c.b16 %v234, %v232
  %v361 = vpack.c.b16 %v235, %v233
  %v362 = vpack.c.b16 %v238, %v236
  %v363 = vpack.c.b16 %v239, %v237
  %v364 = vpack.c.b16 %v242, %v240
  %v365 = vpack.c.b16 %v243, %v241
  %v366 = vpack.c.b16 %v246, %v244
  %v367 = vpack.c.b16 %v247, %v245
  %v368 = vpack.c.b16 %v250, %v248
  %v369 = vpack.c.b16 %v251, %v249
  %v370 = vpack.c.b16 %v254, %v252
  %v371 = vpack.c.b16 %v255, %v253
  %v372 = vpack.c.b16 %v258, %v256
  %v373 = vpack.c.b16 %v259, %v257
  %v374 = vpack.c.b16 %v262, %v260
  %v375 = vpack.c.b16 %v263, %v261
  %v376 = vpack.c.b16 %v266, %v264
  %v377 = vpack.c.b16 %v267, %v265
  %v378 = vpack.c.b16 %v270, %v268
  %v379 = vpack.c.b16 %v271, %v269
  %v380 = vpack.c.b16 %v274, %v272
  %v381 = vpack.c.b16 %v275, %v273
  %v382 = vpack.c.b16 %v278, %v276
  %v383 = vpack.c.b16 %v279, %v277
  %v384 = vpack.c.b16 %v282, %v280
  %v385 = vpack.c.b16 %v283, %v281
  %v386 = vpack.c.b16 %v286, %v284
  %v387 = vpack.c.b16 %v287, %v285
  %v388 = vpack.c.b16 %v290, %v288
  %v389 = vpack.c.b16 %v291, %v289
  %v390 = vpack.c.b16 %v294, %v292
  %v391 = vpack.c.b16 %v295, %v293
  %v392 = vpack.c.b16 %v298, %v296
  %v393 = vpack.c.b16 %v299, %v297
  %v394 = vpack.c.b16 %v302, %v300
  %v395 = vpack.c.b16 %v303, %v301
  %v396 = vpack.c.b16 %v306, %v304
  %v397 = vpack.c.b16 %v307, %v305
  %v398 = vpack.c.b16 %v310, %v308
  %v399 = vpack.c.b16 %v311, %v309
  %v400 = vpack.c.b16 %v314, %v312
  %v401 = vpack.c.b16 %v315, %v313
  %v402 = vpack.c.b16 %v318, %v316
  %v403 = vpack.c.b16 %v319, %v317
  %v404 = vpack.c.b16 %v322, %v320
  %v405 = vpack.c.b16 %v323, %v321
  %v406 = vpack.c.b16 %v326, %v324
  %v407 = vpack.c.b16 %v327, %v325
  %v408 = vpack.c.b16 %v330, %v328
  %v409 = vpack.c.b16 %v331, %v329
  %v410 = vpack.c.b16 %v334, %v332
  %v411 = vpack.c.b16 %v335, %v333
  %v412 = vpack.c.b16 %v338, %v336
  %v413 = vpack.c.b16 %v339, %v337
  %v414 = vpack.c.b16 %v342, %v340
  %v415 = vpack.c.b16 %v343, %v341
  %v416 = vpack.c.b16 %v346, %v344
  %v417 = vpack.c.b16 %v347, %v345
  %v418 = vpack.c.b16 %v350, %v348
  %v419 = vpack.c.b16 %v351, %v349
  %v420 = vpack.c.b16 %v354, %v352
  %v421 = vpack.c.b16 %v355, %v353
  %v422 = vpack.c.b16 %v358, %v356
  %v423 = vpack.c.b16 %v359, %v357
  %488 = vmatprep.subr.bf16.mxu0 %v361
  %489 = vmatpush1.bf16.msra.mxu0 %v360
  %490 = vmatprep.subr.bf16.mxu0 %v363
  %491 = vmatpush1.bf16.msra.mxu0 %v362
  %492 = vmatprep.subr.bf16.mxu0 %v365
  %493 = vmatpush1.bf16.msra.mxu0 %v364
  %494 = vmatprep.subr.bf16.mxu0 %v367
  %495 = vmatpush1.bf16.msra.mxu0 %v366
  %496 = vmatprep.subr.bf16.mxu0 %v369
  %497 = vmatpush1.bf16.msra.mxu0 %v368
  %498 = vmatprep.subr.bf16.mxu0 %v371
  %499 = vmatpush1.bf16.msra.mxu0 %v370
  %500 = vmatprep.subr.bf16.mxu0 %v373
  %501 = vmatpush1.bf16.msra.mxu0 %v372
  %502 = vmatprep.subr.bf16.mxu0 %v375
  %503 = vmatpush1.bf16.msra.mxu0 %v374
  %504 = vmatprep.subr.bf16.mxu0 %v377
  %505 = vmatpush1.bf16.msra.mxu0 %v376
  %506 = vmatprep.subr.bf16.mxu0 %v379
  %507 = vmatpush1.bf16.msra.mxu0 %v378
  %508 = vmatprep.subr.bf16.mxu0 %v381
  %509 = vmatpush1.bf16.msra.mxu0 %v380
  %510 = vmatprep.subr.bf16.mxu0 %v383
  %511 = vmatpush1.bf16.msra.mxu0 %v382
  %512 = vmatprep.subr.bf16.mxu0 %v385
  %513 = vmatpush1.bf16.msra.mxu0 %v384
  %514 = vmatprep.subr.bf16.mxu0 %v387
  %515 = vmatpush1.bf16.msra.mxu0 %v386
  %516 = vmatprep.subr.bf16.mxu0 %v389
  %517 = vmatpush1.bf16.msra.mxu0 %v388
  %518 = vmatprep.subr.bf16.mxu0 %v391
  %519 = vmatpush1.bf16.msra.mxu0 %v390
  %520 = vmatprep.mubr.bf16.mxu0 %v153
  %521 = vmatmul.mubr.bf16.gmra.mrb[0].mxu0 %v152
  %v522 = vpop.f32.mrb[0].mxu0
  %v523 = vadd.f32 0.0, %v522
  %v524 = vpop.f32.mrb[0].mxu0
  %v525 = vadd.f32 0.0, %v524
  %v526 = vpop.f32.mrb[0].mxu0
  %v527 = vadd.f32 0.0, %v526
  %v528 = vpop.f32.mrb[0].mxu0
  %v529 = vadd.f32 0.0, %v528
  %530 = vmatprep.mubr.bf16.mxu0 %v157
  %531 = vmatmul.mubr.bf16.gmra.mrb[0].mxu0 %v156
  %v532 = vpop.f32.mrb[0].mxu0
  %v533 = vadd.f32 0.0, %v532
  %v534 = vpop.f32.mrb[0].mxu0
  %v535 = vadd.f32 0.0, %v534
  %v536 = vpop.f32.mrb[0].mxu0
  %v537 = vadd.f32 0.0, %v536
  %v538 = vpop.f32.mrb[0].mxu0
  %v539 = vadd.f32 0.0, %v538
  %540 = vdwg.mxu0
  %541 = vmatprep.subr.bf16.mxu0 %v393
  %542 = vmatpush1.bf16.msra.mxu0 %v392
  %543 = vmatprep.subr.bf16.mxu0 %v395
  %544 = vmatpush1.bf16.msra.mxu0 %v394
  %545 = vmatprep.subr.bf16.mxu0 %v397
  %546 = vmatpush1.bf16.msra.mxu0 %v396
  %547 = vmatprep.subr.bf16.mxu0 %v399
  %548 = vmatpush1.bf16.msra.mxu0 %v398
  %549 = vmatprep.subr.bf16.mxu0 %v401
  %550 = vmatpush1.bf16.msra.mxu0 %v400
  %551 = vmatprep.subr.bf16.mxu0 %v403
  %552 = vmatpush1.bf16.msra.mxu0 %v402
  %553 = vmatprep.subr.bf16.mxu0 %v405
  %554 = vmatpush1.bf16.msra.mxu0 %v404
  %555 = vmatprep.subr.bf16.mxu0 %v407
  %556 = vmatpush1.bf16.msra.mxu0 %v406
  %557 = vmatprep.subr.bf16.mxu0 %v409
  %558 = vmatpush1.bf16.msra.mxu0 %v408
  %559 = vmatprep.subr.bf16.mxu0 %v411
  %560 = vmatpush1.bf16.msra.mxu0 %v410
  %561 = vmatprep.subr.bf16.mxu0 %v413
  %562 = vmatpush1.bf16.msra.mxu0 %v412
  %563 = vmatprep.subr.bf16.mxu0 %v415
  %564 = vmatpush1.bf16.msra.mxu0 %v414
  %565 = vmatprep.subr.bf16.mxu0 %v417
  %566 = vmatpush1.bf16.msra.mxu0 %v416
  %567 = vmatprep.subr.bf16.mxu0 %v419
  %568 = vmatpush1.bf16.msra.mxu0 %v418
  %569 = vmatprep.subr.bf16.mxu0 %v421
  %570 = vmatpush1.bf16.msra.mxu0 %v420
  %571 = vmatprep.subr.bf16.mxu0 %v423
  %572 = vmatpush1.bf16.msra.mxu0 %v422
  %573 = vmatprep.mubr.bf16.mxu0 %v155
  %574 = vmatmul.mubr.bf16.gmra.mrb[0].mxu0 %v154
  %v575 = vpop.f32.mrb[0].mxu0
  %v576 = vadd.f32 %v523, %v575
  %v577 = vpop.f32.mrb[0].mxu0
  %v578 = vadd.f32 %v525, %v577
  %v579 = vpop.f32.mrb[0].mxu0
  %v580 = vadd.f32 %v527, %v579
  %v581 = vpop.f32.mrb[0].mxu0
  %v582 = vadd.f32 %v529, %v581
  %583 = vmatprep.mubr.bf16.mxu0 %v159
  %584 = vmatmul.mubr.bf16.gmra.mrb[0].mxu0 %v158
  %v585 = vpop.f32.mrb[0].mxu0
  %v586 = vadd.f32 %v533, %v585
  %v587 = vpop.f32.mrb[0].mxu0
  %v588 = vadd.f32 %v535, %v587
  %v589 = vpop.f32.mrb[0].mxu0
  %v590 = vadd.f32 %v537, %v589
  %v591 = vpop.f32.mrb[0].mxu0
  %v592 = vadd.f32 %v539, %v591
  %593 = vdwg.mxu0
  %v594 = vadd.f32 %v48, %v576
  %v595 = vadd.f32 %v49, %v578
  %v596 = vadd.f32 %v50, %v580
  %v597 = vadd.f32 %v51, %v582
  %v598 = vadd.f32 %v52, %v586
  %v599 = vadd.f32 %v53, %v588
  %v600 = vadd.f32 %v54, %v590
  %v601 = vadd.f32 %v55, %v592
  %602 = vst [vmem:[#allocation2] sm:$0xff] %v594
  %603 = vst [vmem:[#allocation2 + $0x8] sm:$0xff] %v595
  %604 = vst [vmem:[#allocation2 + $0x10] sm:$0xff] %v596
  %605 = vst [vmem:[#allocation2 + $0x18] sm:$0xff] %v597
  %606 = vst [vmem:[#allocation2 + $0x20] sm:$0xff] %v598
  %607 = vst [vmem:[#allocation2 + $0x28] sm:$0xff] %v599
  %608 = vst [vmem:[#allocation2 + $0x30] sm:$0xff] %v600
  %609 = vst [vmem:[#allocation2 + $0x38] sm:$0xff] %v601
  // Predicated region
  $region46: #{_lambda_.3} parent=0 // pred_check
    %p610 = pneg %p36
  $region47: #{_lambda_.3} parent=0 // pred_check_branch
    %612 = sbr.rel (%p610) target = $region49
  $region48: #{_lambda_.3} parent=0 // pred_region
    %v613 = vld [vmem:[#allocation2] sm:$0xff]
    %v614 = vld [vmem:[#allocation2 + $0x8] sm:$0xff]
    %v615 = vld [vmem:[#allocation2 + $0x10] sm:$0xff]
    %v616 = vld [vmem:[#allocation2 + $0x18] sm:$0xff]
    %v617 = vld [vmem:[#allocation2 + $0x20] sm:$0xff]
    %v618 = vld [vmem:[#allocation2 + $0x28] sm:$0xff]
    %v619 = vld [vmem:[#allocation2 + $0x30] sm:$0xff]
    %v620 = vld [vmem:[#allocation2 + $0x38] sm:$0xff]
    %v621 = vpack.c.bf16 %v613, %v613
    %v622 = vpack.c.bf16 %v614, %v614
    %v623 = vpack.c.bf16 %v615, %v615
    %v624 = vpack.c.bf16 %v616, %v616
    %v625 = vpack.c.bf16 %v617, %v617
    %v626 = vpack.c.bf16 %v618, %v618
    %v627 = vpack.c.bf16 %v619, %v619
    %v628 = vpack.c.bf16 %v620, %v620
    %v629 = vld [vmem:[%s5] sm:$0xf]
    %v630 = vld [vmem:[%s5 + $0x4] sm:$0xf]
    %v631 = vld [vmem:[%s5 + $0x8] sm:$0xf]
    %v632 = vld [vmem:[%s5 + $0xc] sm:$0xf]
    %v633 = vld [vmem:[%s5 + $0x10] sm:$0xf]
    %v634 = vld [vmem:[%s5 + $0x14] sm:$0xf]
    %v635 = vld [vmem:[%s5 + $0x18] sm:$0xf]
    %v636 = vld [vmem:[%s5 + $0x1c] sm:$0xf]
    %v637 = vld [vmem:[%s5 + $0x20] sm:$0xf]
    %v638 = vld [vmem:[%s5 + $0x24] sm:$0xf]
    %v639 = vld [vmem:[%s5 + $0x28] sm:$0xf]
    %v640 = vld [vmem:[%s5 + $0x2c] sm:$0xf]
    %v641 = vld [vmem:[%s5 + $0x30] sm:$0xf]
    %v642 = vld [vmem:[%s5 + $0x34] sm:$0xf]
    %v643 = vld [vmem:[%s5 + $0x38] sm:$0xf]
    %v644 = vld [vmem:[%s5 + $0x3c] sm:$0xf]
    %v645 = vld [vmem:[%s5 + $0x40] sm:$0xf]
    %v646 = vld [vmem:[%s5 + $0x44] sm:$0xf]
    %v647 = vld [vmem:[%s5 + $0x48] sm:$0xf]
    %v648 = vld [vmem:[%s5 + $0x4c] sm:$0xf]
    %v649 = vld [vmem:[%s5 + $0x50] sm:$0xf]
    %v650 = vld [vmem:[%s5 + $0x54] sm:$0xf]
    %v651 = vld [vmem:[%s5 + $0x58] sm:$0xf]
    %v652 = vld [vmem:[%s5 + $0x5c] sm:$0xf]
    %v653 = vld [vmem:[%s5 + $0x60] sm:$0xf]
    %v654 = vld [vmem:[%s5 + $0x64] sm:$0xf]
    %v655 = vld [vmem:[%s5 + $0x68] sm:$0xf]
    %v656 = vld [vmem:[%s5 + $0x6c] sm:$0xf]
    %v657 = vld [vmem:[%s5 + $0x70] sm:$0xf]
    %v658 = vld [vmem:[%s5 + $0x74] sm:$0xf]
    %v659 = vld [vmem:[%s5 + $0x78] sm:$0xf]
    %v660 = vld [vmem:[%s5 + $0x7c] sm:$0xf]
    %v661 = vld [vmem:[%s5 + $0x80] sm:$0xf]
    %v662 = vld [vmem:[%s5 + $0x84] sm:$0xf]
    %v663 = vld [vmem:[%s5 + $0x88] sm:$0xf]
    %v664 = vld [vmem:[%s5 + $0x8c] sm:$0xf]
    %v665 = vld [vmem:[%s5 + $0x90] sm:$0xf]
    %v666 = vld [vmem:[%s5 + $0x94] sm:$0xf]
    %v667 = vld [vmem:[%s5 + $0x98] sm:$0xf]
    %v668 = vld [vmem:[%s5 + $0x9c] sm:$0xf]
    %v669 = vld [vmem:[%s5 + $0xa0] sm:$0xf]
    %v670 = vld [vmem:[%s5 + $0xa4] sm:$0xf]
    %v671 = vld [vmem:[%s5 + $0xa8] sm:$0xf]
    %v672 = vld [vmem:[%s5 + $0xac] sm:$0xf]
    %v673 = vld [vmem:[%s5 + $0xb0] sm:$0xf]
    %v674 = vld [vmem:[%s5 + $0xb4] sm:$0xf]
    %v675 = vld [vmem:[%s5 + $0xb8] sm:$0xf]
    %v676 = vld [vmem:[%s5 + $0xbc] sm:$0xf]
    %v677 = vld [vmem:[%s5 + $0xc0] sm:$0xf]
    %v678 = vld [vmem:[%s5 + $0xc4] sm:$0xf]
    %v679 = vld [vmem:[%s5 + $0xc8] sm:$0xf]
    %v680 = vld [vmem:[%s5 + $0xcc] sm:$0xf]
    %v681 = vld [vmem:[%s5 + $0xd0] sm:$0xf]
    %v682 = vld [vmem:[%s5 + $0xd4] sm:$0xf]
    %v683 = vld [vmem:[%s5 + $0xd8] sm:$0xf]
    %v684 = vld [vmem:[%s5 + $0xdc] sm:$0xf]
    %v685 = vld [vmem:[%s5 + $0xe0] sm:$0xf]
    %v686 = vld [vmem:[%s5 + $0xe4] sm:$0xf]
    %v687 = vld [vmem:[%s5 + $0xe8] sm:$0xf]
    %v688 = vld [vmem:[%s5 + $0xec] sm:$0xf]
    %v689 = vld [vmem:[%s5 + $0xf0] sm:$0xf]
    %v690 = vld [vmem:[%s5 + $0xf4] sm:$0xf]
    %v691 = vld [vmem:[%s5 + $0xf8] sm:$0xf]
    %v692 = vld [vmem:[%s5 + $0xfc] sm:$0xf]
    %v693 = vld [vmem:[%s5 + $0x100] sm:$0xf]
    %v694 = vld [vmem:[%s5 + $0x104] sm:$0xf]
    %v695 = vld [vmem:[%s5 + $0x108] sm:$0xf]
    %v696 = vld [vmem:[%s5 + $0x10c] sm:$0xf]
    %v697 = vld [vmem:[%s5 + $0x110] sm:$0xf]
    %v698 = vld [vmem:[%s5 + $0x114] sm:$0xf]
    %v699 = vld [vmem:[%s5 + $0x118] sm:$0xf]
    %v700 = vld [vmem:[%s5 + $0x11c] sm:$0xf]
    %v701 = vld [vmem:[%s5 + $0x120] sm:$0xf]
    %v702 = vld [vmem:[%s5 + $0x124] sm:$0xf]
    %v703 = vld [vmem:[%s5 + $0x128] sm:$0xf]
    %v704 = vld [vmem:[%s5 + $0x12c] sm:$0xf]
    %v705 = vld [vmem:[%s5 + $0x130] sm:$0xf]
    %v706 = vld [vmem:[%s5 + $0x134] sm:$0xf]
    %v707 = vld [vmem:[%s5 + $0x138] sm:$0xf]
    %v708 = vld [vmem:[%s5 + $0x13c] sm:$0xf]
    %v709 = vld [vmem:[%s5 + $0x140] sm:$0xf]
    %v710 = vld [vmem:[%s5 + $0x144] sm:$0xf]
    %v711 = vld [vmem:[%s5 + $0x148] sm:$0xf]
    %v712 = vld [vmem:[%s5 + $0x14c] sm:$0xf]
    %v713 = vld [vmem:[%s5 + $0x150] sm:$0xf]
    %v714 = vld [vmem:[%s5 + $0x154] sm:$0xf]
    %v715 = vld [vmem:[%s5 + $0x158] sm:$0xf]
    %v716 = vld [vmem:[%s5 + $0x15c] sm:$0xf]
    %v717 = vld [vmem:[%s5 + $0x160] sm:$0xf]
    %v718 = vld [vmem:[%s5 + $0x164] sm:$0xf]
    %v719 = vld [vmem:[%s5 + $0x168] sm:$0xf]
    %v720 = vld [vmem:[%s5 + $0x16c] sm:$0xf]
    %v721 = vld [vmem:[%s5 + $0x170] sm:$0xf]
    %v722 = vld [vmem:[%s5 + $0x174] sm:$0xf]
    %v723 = vld [vmem:[%s5 + $0x178] sm:$0xf]
    %v724 = vld [vmem:[%s5 + $0x17c] sm:$0xf]
    %v725 = vld [vmem:[%s5 + $0x180] sm:$0xf]
    %v726 = vld [vmem:[%s5 + $0x184] sm:$0xf]
    %v727 = vld [vmem:[%s5 + $0x188] sm:$0xf]
    %v728 = vld [vmem:[%s5 + $0x18c] sm:$0xf]
    %v729 = vld [vmem:[%s5 + $0x190] sm:$0xf]
    %v730 = vld [vmem:[%s5 + $0x194] sm:$0xf]
    %v731 = vld [vmem:[%s5 + $0x198] sm:$0xf]
    %v732 = vld [vmem:[%s5 + $0x19c] sm:$0xf]
    %v733 = vld [vmem:[%s5 + $0x1a0] sm:$0xf]
    %v734 = vld [vmem:[%s5 + $0x1a4] sm:$0xf]
    %v735 = vld [vmem:[%s5 + $0x1a8] sm:$0xf]
    %v736 = vld [vmem:[%s5 + $0x1ac] sm:$0xf]
    %v737 = vld [vmem:[%s5 + $0x1b0] sm:$0xf]
    %v738 = vld [vmem:[%s5 + $0x1b4] sm:$0xf]
    %v739 = vld [vmem:[%s5 + $0x1b8] sm:$0xf]
    %v740 = vld [vmem:[%s5 + $0x1bc] sm:$0xf]
    %v741 = vld [vmem:[%s5 + $0x1c0] sm:$0xf]
    %v742 = vld [vmem:[%s5 + $0x1c4] sm:$0xf]
    %v743 = vld [vmem:[%s5 + $0x1c8] sm:$0xf]
    %v744 = vld [vmem:[%s5 + $0x1cc] sm:$0xf]
    %v745 = vld [vmem:[%s5 + $0x1d0] sm:$0xf]
    %v746 = vld [vmem:[%s5 + $0x1d4] sm:$0xf]
    %v747 = vld [vmem:[%s5 + $0x1d8] sm:$0xf]
    %v748 = vld [vmem:[%s5 + $0x1dc] sm:$0xf]
    %v749 = vld [vmem:[%s5 + $0x1e0] sm:$0xf]
    %v750 = vld [vmem:[%s5 + $0x1e4] sm:$0xf]
    %v751 = vld [vmem:[%s5 + $0x1e8] sm:$0xf]
    %v752 = vld [vmem:[%s5 + $0x1ec] sm:$0xf]
    %v753 = vld [vmem:[%s5 + $0x1f0] sm:$0xf]
    %v754 = vld [vmem:[%s5 + $0x1f4] sm:$0xf]
    %v755 = vld [vmem:[%s5 + $0x1f8] sm:$0xf]
    %v756 = vld [vmem:[%s5 + $0x1fc] sm:$0xf]
    %v757 = vld [vmem:[%s6] sm:$0x1]
    %v759 = vlaneseq
    %v760 = vshrl.u32 %v759, 7
    %v761 = vsub.s32 0, %v760
    %v762 = vrot.slane %v757, %v761
    %v892 = vunpack.c.l.b16 %v629
    %v893 = vunpack.c.l.b16 %v630
    %v894 = vunpack.c.l.b16 %v631
    %v895 = vunpack.c.l.b16 %v632
    %v896 = vunpack.c.l.b16 %v633
    %v897 = vunpack.c.l.b16 %v634
    %v898 = vunpack.c.l.b16 %v635
    %v899 = vunpack.c.l.b16 %v636
    %v900 = vunpack.c.l.b16 %v637
    %v901 = vunpack.c.l.b16 %v638
    %v902 = vunpack.c.l.b16 %v639
    %v903 = vunpack.c.l.b16 %v640
    %v904 = vunpack.c.l.b16 %v641
    %v905 = vunpack.c.l.b16 %v642
    %v906 = vunpack.c.l.b16 %v643
    %v907 = vunpack.c.l.b16 %v644
    %v908 = vunpack.c.l.b16 %v645
    %v909 = vunpack.c.l.b16 %v646
    %v910 = vunpack.c.l.b16 %v647
    %v911 = vunpack.c.l.b16 %v648
    %v912 = vunpack.c.l.b16 %v649
    %v913 = vunpack.c.l.b16 %v650
    %v914 = vunpack.c.l.b16 %v651
    %v915 = vunpack.c.l.b16 %v652
    %v916 = vunpack.c.l.b16 %v653
    %v917 = vunpack.c.l.b16 %v654
    %v918 = vunpack.c.l.b16 %v655
    %v919 = vunpack.c.l.b16 %v656
    %v920 = vunpack.c.l.b16 %v657
    %v921 = vunpack.c.l.b16 %v658
    %v922 = vunpack.c.l.b16 %v659
    %v923 = vunpack.c.l.b16 %v660
    %v924 = vunpack.c.l.b16 %v661
    %v925 = vunpack.c.l.b16 %v662
    %v926 = vunpack.c.l.b16 %v663
    %v927 = vunpack.c.l.b16 %v664
    %v928 = vunpack.c.l.b16 %v665
    %v929 = vunpack.c.l.b16 %v666
    %v930 = vunpack.c.l.b16 %v667
    %v931 = vunpack.c.l.b16 %v668
    %v932 = vunpack.c.l.b16 %v669
    %v933 = vunpack.c.l.b16 %v670
    %v934 = vunpack.c.l.b16 %v671
    %v935 = vunpack.c.l.b16 %v672
    %v936 = vunpack.c.l.b16 %v673
    %v937 = vunpack.c.l.b16 %v674
    %v938 = vunpack.c.l.b16 %v675
    %v939 = vunpack.c.l.b16 %v676
    %v940 = vunpack.c.l.b16 %v677
    %v941 = vunpack.c.l.b16 %v678
    %v942 = vunpack.c.l.b16 %v679
    %v943 = vunpack.c.l.b16 %v680
    %v944 = vunpack.c.l.b16 %v681
    %v945 = vunpack.c.l.b16 %v682
    %v946 = vunpack.c.l.b16 %v683
    %v947 = vunpack.c.l.b16 %v684
    %v948 = vunpack.c.l.b16 %v685
    %v949 = vunpack.c.l.b16 %v686
    %v950 = vunpack.c.l.b16 %v687
    %v951 = vunpack.c.l.b16 %v688
    %v952 = vunpack.c.l.b16 %v689
    %v953 = vunpack.c.l.b16 %v690
    %v954 = vunpack.c.l.b16 %v691
    %v955 = vunpack.c.l.b16 %v692
    %v956 = vunpack.c.l.b16 %v693
    %v957 = vunpack.c.l.b16 %v694
    %v958 = vunpack.c.l.b16 %v695
    %v959 = vunpack.c.l.b16 %v696
    %v960 = vunpack.c.l.b16 %v697
    %v961 = vunpack.c.l.b16 %v698
    %v962 = vunpack.c.l.b16 %v699
    %v963 = vunpack.c.l.b16 %v700
    %v964 = vunpack.c.l.b16 %v701
    %v965 = vunpack.c.l.b16 %v702
    %v966 = vunpack.c.l.b16 %v703
    %v967 = vunpack.c.l.b16 %v704
    %v968 = vunpack.c.l.b16 %v705
    %v969 = vunpack.c.l.b16 %v706
    %v970 = vunpack.c.l.b16 %v707
    %v971 = vunpack.c.l.b16 %v708
    %v972 = vunpack.c.l.b16 %v709
    %v973 = vunpack.c.l.b16 %v710
    %v974 = vunpack.c.l.b16 %v711
    %v975 = vunpack.c.l.b16 %v712
    %v976 = vunpack.c.l.b16 %v713
    %v977 = vunpack.c.l.b16 %v714
    %v978 = vunpack.c.l.b16 %v715
    %v979 = vunpack.c.l.b16 %v716
    %v980 = vunpack.c.l.b16 %v717
    %v981 = vunpack.c.l.b16 %v718
    %v982 = vunpack.c.l.b16 %v719
    %v983 = vunpack.c.l.b16 %v720
    %v984 = vunpack.c.l.b16 %v721
    %v985 = vunpack.c.l.b16 %v722
    %v986 = vunpack.c.l.b16 %v723
    %v987 = vunpack.c.l.b16 %v724
    %v988 = vunpack.c.l.b16 %v725
    %v989 = vunpack.c.l.b16 %v726
    %v990 = vunpack.c.l.b16 %v727
    %v991 = vunpack.c.l.b16 %v728
    %v992 = vunpack.c.l.b16 %v729
    %v993 = vunpack.c.l.b16 %v730
    %v994 = vunpack.c.l.b16 %v731
    %v995 = vunpack.c.l.b16 %v732
    %v996 = vunpack.c.l.b16 %v733
    %v997 = vunpack.c.l.b16 %v734
    %v998 = vunpack.c.l.b16 %v735
    %v999 = vunpack.c.l.b16 %v736
    %v1000 = vunpack.c.l.b16 %v737
    %v1001 = vunpack.c.l.b16 %v738
    %v1002 = vunpack.c.l.b16 %v739
    %v1003 = vunpack.c.l.b16 %v740
    %v1004 = vunpack.c.l.b16 %v741
    %v1005 = vunpack.c.l.b16 %v742
    %v1006 = vunpack.c.l.b16 %v743
    %v1007 = vunpack.c.l.b16 %v744
    %v1008 = vunpack.c.l.b16 %v745
    %v1009 = vunpack.c.l.b16 %v746
    %v1010 = vunpack.c.l.b16 %v747
    %v1011 = vunpack.c.l.b16 %v748
    %v1012 = vunpack.c.l.b16 %v749
    %v1013 = vunpack.c.l.b16 %v750
    %v1014 = vunpack.c.l.b16 %v751
    %v1015 = vunpack.c.l.b16 %v752
    %v1016 = vunpack.c.l.b16 %v753
    %v1017 = vunpack.c.l.b16 %v754
    %v1018 = vunpack.c.l.b16 %v755
    %v1019 = vunpack.c.l.b16 %v756
    %v1020 = vpack.c.b16 %v893, %v892
    %v1021 = vpack.c.b16 %v895, %v894
    %v1022 = vpack.c.b16 %v897, %v896
    %v1023 = vpack.c.b16 %v899, %v898
    %v1024 = vpack.c.b16 %v901, %v900
    %v1025 = vpack.c.b16 %v903, %v902
    %v1026 = vpack.c.b16 %v905, %v904
    %v1027 = vpack.c.b16 %v907, %v906
    %v1028 = vpack.c.b16 %v909, %v908
    %v1029 = vpack.c.b16 %v911, %v910
    %v1030 = vpack.c.b16 %v913, %v912
    %v1031 = vpack.c.b16 %v915, %v914
    %v1032 = vpack.c.b16 %v917, %v916
    %v1033 = vpack.c.b16 %v919, %v918
    %v1034 = vpack.c.b16 %v921, %v920
    %v1035 = vpack.c.b16 %v923, %v922
    %v1036 = vpack.c.b16 %v925, %v924
    %v1037 = vpack.c.b16 %v927, %v926
    %v1038 = vpack.c.b16 %v929, %v928
    %v1039 = vpack.c.b16 %v931, %v930
    %v1040 = vpack.c.b16 %v933, %v932
    %v1041 = vpack.c.b16 %v935, %v934
    %v1042 = vpack.c.b16 %v937, %v936
    %v1043 = vpack.c.b16 %v939, %v938
    %v1044 = vpack.c.b16 %v941, %v940
    %v1045 = vpack.c.b16 %v943, %v942
    %v1046 = vpack.c.b16 %v945, %v944
    %v1047 = vpack.c.b16 %v947, %v946
    %v1048 = vpack.c.b16 %v949, %v948
    %v1049 = vpack.c.b16 %v951, %v950
    %v1050 = vpack.c.b16 %v953, %v952
    %v1051 = vpack.c.b16 %v955, %v954
    %v1052 = vpack.c.b16 %v957, %v956
    %v1053 = vpack.c.b16 %v959, %v958
    %v1054 = vpack.c.b16 %v961, %v960
    %v1055 = vpack.c.b16 %v963, %v962
    %v1056 = vpack.c.b16 %v965, %v964
    %v1057 = vpack.c.b16 %v967, %v966
    %v1058 = vpack.c.b16 %v969, %v968
    %v1059 = vpack.c.b16 %v971, %v970
    %v1060 = vpack.c.b16 %v973, %v972
    %v1061 = vpack.c.b16 %v975, %v974
    %v1062 = vpack.c.b16 %v977, %v976
    %v1063 = vpack.c.b16 %v979, %v978
    %v1064 = vpack.c.b16 %v981, %v980
    %v1065 = vpack.c.b16 %v983, %v982
    %v1066 = vpack.c.b16 %v985, %v984
    %v1067 = vpack.c.b16 %v987, %v986
    %v1068 = vpack.c.b16 %v989, %v988
    %v1069 = vpack.c.b16 %v991, %v990
    %v1070 = vpack.c.b16 %v993, %v992
    %v1071 = vpack.c.b16 %v995, %v994
    %v1072 = vpack.c.b16 %v997, %v996
    %v1073 = vpack.c.b16 %v999, %v998
    %v1074 = vpack.c.b16 %v1001, %v1000
    %v1075 = vpack.c.b16 %v1003, %v1002
    %v1076 = vpack.c.b16 %v1005, %v1004
    %v1077 = vpack.c.b16 %v1007, %v1006
    %v1078 = vpack.c.b16 %v1009, %v1008
    %v1079 = vpack.c.b16 %v1011, %v1010
    %v1080 = vpack.c.b16 %v1013, %v1012
    %v1081 = vpack.c.b16 %v1015, %v1014
    %v1082 = vpack.c.b16 %v1017, %v1016
    %v1083 = vpack.c.b16 %v1019, %v1018
    %1148 = vmatprep.subr.bf16.mxu0 0
    %1149 = vmatpush1.bf16.msra.mxu0 %v1020
    %1150 = vmatprep.subr.bf16.mxu0 0
    %1151 = vmatpush1.bf16.msra.mxu0 %v1021
    %1152 = vmatprep.subr.bf16.mxu0 0
    %1153 = vmatpush1.bf16.msra.mxu0 %v1022
    %1154 = vmatprep.subr.bf16.mxu0 0
    %1155 = vmatpush1.bf16.msra.mxu0 %v1023
    %1156 = vmatprep.subr.bf16.mxu0 0
    %1157 = vmatpush1.bf16.msra.mxu0 %v1024
    %1158 = vmatprep.subr.bf16.mxu0 0
    %1159 = vmatpush1.bf16.msra.mxu0 %v1025
    %1160 = vmatprep.subr.bf16.mxu0 0
    %1161 = vmatpush1.bf16.msra.mxu0 %v1026
    %1162 = vmatprep.subr.bf16.mxu0 0
    %1163 = vmatpush1.bf16.msra.mxu0 %v1027
    %1164 = vmatprep.subr.bf16.mxu0 0
    %1165 = vmatpush1.bf16.msra.mxu0 %v1028
    %1166 = vmatprep.subr.bf16.mxu0 0
    %1167 = vmatpush1.bf16.msra.mxu0 %v1029
    %1168 = vmatprep.subr.bf16.mxu0 0
    %1169 = vmatpush1.bf16.msra.mxu0 %v1030
    %1170 = vmatprep.subr.bf16.mxu0 0
    %1171 = vmatpush1.bf16.msra.mxu0 %v1031
    %1172 = vmatprep.subr.bf16.mxu0 0
    %1173 = vmatpush1.bf16.msra.mxu0 %v1032
    %1174 = vmatprep.subr.bf16.mxu0 0
    %1175 = vmatpush1.bf16.msra.mxu0 %v1033
    %1176 = vmatprep.subr.bf16.mxu0 0
    %1177 = vmatpush1.bf16.msra.mxu0 %v1034
    %1178 = vmatprep.subr.bf16.mxu0 0
    %1179 = vmatpush1.bf16.msra.mxu0 %v1035
    %1180 = vmatprep.mubr.bf16.mxu0 %v622
    %1181 = vmatmul.mubr.bf16.gmra.mrb[0].mxu0 %v621
    %v1182 = vpop.f32.mrb[0].mxu0
    %v1183 = vadd.f32 %v762, %v1182
    %v1184 = vpop.f32.mrb[0].mxu0
    %v1185 = vpop.f32.mrb[0].mxu0
    %v1186 = vpop.f32.mrb[0].mxu0
    %1187 = vdwg.mxu0
    %1188 = vmatprep.subr.bf16.mxu0 0
    %1189 = vmatpush1.bf16.msra.mxu0 %v1036
    %1190 = vmatprep.subr.bf16.mxu0 0
    %1191 = vmatpush1.bf16.msra.mxu0 %v1037
    %1192 = vmatprep.subr.bf16.mxu0 0
    %1193 = vmatpush1.bf16.msra.mxu0 %v1038
    %1194 = vmatprep.subr.bf16.mxu0 0
    %1195 = vmatpush1.bf16.msra.mxu0 %v1039
    %1196 = vmatprep.subr.bf16.mxu0 0
    %1197 = vmatpush1.bf16.msra.mxu0 %v1040
    %1198 = vmatprep.subr.bf16.mxu0 0
    %1199 = vmatpush1.bf16.msra.mxu0 %v1041
    %1200 = vmatprep.subr.bf16.mxu0 0
    %1201 = vmatpush1.bf16.msra.mxu0 %v1042
    %1202 = vmatprep.subr.bf16.mxu0 0
    %1203 = vmatpush1.bf16.msra.mxu0 %v1043
    %1204 = vmatprep.subr.bf16.mxu0 0
    %1205 = vmatpush1.bf16.msra.mxu0 %v1044
    %1206 = vmatprep.subr.bf16.mxu0 0
    %1207 = vmatpush1.bf16.msra.mxu0 %v1045
    %1208 = vmatprep.subr.bf16.mxu0 0
    %1209 = vmatpush1.bf16.msra.mxu0 %v1046
    %1210 = vmatprep.subr.bf16.mxu0 0
    %1211 = vmatpush1.bf16.msra.mxu0 %v1047
    %1212 = vmatprep.subr.bf16.mxu0 0
    %1213 = vmatpush1.bf16.msra.mxu0 %v1048
    %1214 = vmatprep.subr.bf16.mxu0 0
    %1215 = vmatpush1.bf16.msra.mxu0 %v1049
    %1216 = vmatprep.subr.bf16.mxu0 0
    %1217 = vmatpush1.bf16.msra.mxu0 %v1050
    %1218 = vmatprep.subr.bf16.mxu0 0
    %1219 = vmatpush1.bf16.msra.mxu0 %v1051
    %1220 = vmatprep.mubr.bf16.mxu0 %v624
    %1221 = vmatmul.mubr.bf16.gmra.mrb[0].mxu0 %v623
    %v1222 = vpop.f32.mrb[0].mxu0
    %v1223 = vadd.f32 %v1183, %v1222
    %v1224 = vpop.f32.mrb[0].mxu0
    %v1225 = vpop.f32.mrb[0].mxu0
    %v1226 = vpop.f32.mrb[0].mxu0
    %1227 = vdwg.mxu0
    %1228 = vmatprep.subr.bf16.mxu0 0
    %1229 = vmatpush1.bf16.msra.mxu0 %v1052
    %1230 = vmatprep.subr.bf16.mxu0 0
    %1231 = vmatpush1.bf16.msra.mxu0 %v1053
    %1232 = vmatprep.subr.bf16.mxu0 0
    %1233 = vmatpush1.bf16.msra.mxu0 %v1054
    %1234 = vmatprep.subr.bf16.mxu0 0
    %1235 = vmatpush1.bf16.msra.mxu0 %v1055
    %1236 = vmatprep.subr.bf16.mxu0 0
    %1237 = vmatpush1.bf16.msra.mxu0 %v1056
    %1238 = vmatprep.subr.bf16.mxu0 0
    %1239 = vmatpush1.bf16.msra.mxu0 %v1057
    %1240 = vmatprep.subr.bf16.mxu0 0
    %1241 = vmatpush1.bf16.msra.mxu0 %v1058
    %1242 = vmatprep.subr.bf16.mxu0 0
    %1243 = vmatpush1.bf16.msra.mxu0 %v1059
    %1244 = vmatprep.subr.bf16.mxu0 0
    %1245 = vmatpush1.bf16.msra.mxu0 %v1060
    %1246 = vmatprep.subr.bf16.mxu0 0
    %1247 = vmatpush1.bf16.msra.mxu0 %v1061
    %1248 = vmatprep.subr.bf16.mxu0 0
    %1249 = vmatpush1.bf16.msra.mxu0 %v1062
    %1250 = vmatprep.subr.bf16.mxu0 0
    %1251 = vmatpush1.bf16.msra.mxu0 %v1063
    %1252 = vmatprep.subr.bf16.mxu0 0
    %1253 = vmatpush1.bf16.msra.mxu0 %v1064
    %1254 = vmatprep.subr.bf16.mxu0 0
    %1255 = vmatpush1.bf16.msra.mxu0 %v1065
    %1256 = vmatprep.subr.bf16.mxu0 0
    %1257 = vmatpush1.bf16.msra.mxu0 %v1066
    %1258 = vmatprep.subr.bf16.mxu0 0
    %1259 = vmatpush1.bf16.msra.mxu0 %v1067
    %1260 = vmatprep.mubr.bf16.mxu0 %v626
    %1261 = vmatmul.mubr.bf16.gmra.mrb[0].mxu0 %v625
    %v1262 = vpop.f32.mrb[0].mxu0
    %v1263 = vadd.f32 %v1223, %v1262
    %v1264 = vpop.f32.mrb[0].mxu0
    %v1265 = vpop.f32.mrb[0].mxu0
    %v1266 = vpop.f32.mrb[0].mxu0
    %1267 = vdwg.mxu0
    %1268 = vmatprep.subr.bf16.mxu0 0
    %1269 = vmatpush1.bf16.msra.mxu0 %v1068
    %1270 = vmatprep.subr.bf16.mxu0 0
    %1271 = vmatpush1.bf16.msra.mxu0 %v1069
    %1272 = vmatprep.subr.bf16.mxu0 0
    %1273 = vmatpush1.bf16.msra.mxu0 %v1070
    %1274 = vmatprep.subr.bf16.mxu0 0
    %1275 = vmatpush1.bf16.msra.mxu0 %v1071
    %1276 = vmatprep.subr.bf16.mxu0 0
    %1277 = vmatpush1.bf16.msra.mxu0 %v1072
    %1278 = vmatprep.subr.bf16.mxu0 0
    %1279 = vmatpush1.bf16.msra.mxu0 %v1073
    %1280 = vmatprep.subr.bf16.mxu0 0
    %1281 = vmatpush1.bf16.msra.mxu0 %v1074
    %1282 = vmatprep.subr.bf16.mxu0 0
    %1283 = vmatpush1.bf16.msra.mxu0 %v1075
    %1284 = vmatprep.subr.bf16.mxu0 0
    %1285 = vmatpush1.bf16.msra.mxu0 %v1076
    %1286 = vmatprep.subr.bf16.mxu0 0
    %1287 = vmatpush1.bf16.msra.mxu0 %v1077
    %1288 = vmatprep.subr.bf16.mxu0 0
    %1289 = vmatpush1.bf16.msra.mxu0 %v1078
    %1290 = vmatprep.subr.bf16.mxu0 0
    %1291 = vmatpush1.bf16.msra.mxu0 %v1079
    %1292 = vmatprep.subr.bf16.mxu0 0
    %1293 = vmatpush1.bf16.msra.mxu0 %v1080
    %1294 = vmatprep.subr.bf16.mxu0 0
    %1295 = vmatpush1.bf16.msra.mxu0 %v1081
    %1296 = vmatprep.subr.bf16.mxu0 0
    %1297 = vmatpush1.bf16.msra.mxu0 %v1082
    %1298 = vmatprep.subr.bf16.mxu0 0
    %1299 = vmatpush1.bf16.msra.mxu0 %v1083
    %1300 = vmatprep.mubr.bf16.mxu0 %v628
    %1301 = vmatmul.mubr.bf16.gmra.mrb[0].mxu0 %v627
    %v1302 = vpop.f32.mrb[0].mxu0
    %v1303 = vadd.f32 %v1263, %v1302
    %v1304 = vpop.f32.mrb[0].mxu0
    %v1305 = vpop.f32.mrb[0].mxu0
    %v1306 = vpop.f32.mrb[0].mxu0
    %1307 = vdwg.mxu0
    %v1308 = vmax.f32 %v1303, 0.0
    %v1309 = vld [vmem:[%s2] sm:$0xff]
    %v1310 = vld [vmem:[%s3] sm:$0xf]
    %v1311 = vld [vmem:[%s4] sm:$0x1]
    %v1313 = vlaneseq
    %v1314 = vshrl.u32 %v1313, 7
    %v1315 = vsub.s32 0, %v1314
    %v1316 = vrot.slane %v1311, %v1315
    %vm1318 = vcmask 31744
    %v1320 = vsel %vm1318, %v1309, 0
    %vm1322 = vcmask 1043456
    %v1324 = vsel %vm1322, %v1310, 0
    %1326 = vmatprep.subr.mxu0 0.0
    %1327 = vmatpush1.msra.mxu0 %v1324
    %1328 = vmatprep.subr.mxu0 0.0
    %1329 = vmatpush1.msra.mxu0 0.0
    %1330 = vmatprep.subr.mxu0 0.0
    %1331 = vmatpush1.msra.mxu0 0.0
    %1332 = vmatprep.subr.mxu0 0.0
    %1333 = vmatpush1.msra.mxu0 0.0
    %1334 = vmatprep.subr.mxu0 0.0
    %1335 = vmatpush1.msra.mxu0 0.0
    %1336 = vmatprep.subr.mxu0 0.0
    %1337 = vmatpush1.msra.mxu0 0.0
    %1338 = vmatprep.subr.mxu0 0.0
    %1339 = vmatpush1.msra.mxu0 0.0
    %1340 = vmatprep.subr.mxu0 0.0
    %1341 = vmatpush1.msra.mxu0 0.0
    %1342 = vmatprep.subr.mxu0 0.0
    %1343 = vmatpush1.msra.mxu0 0.0
    %1344 = vmatprep.subr.mxu0 0.0
    %1345 = vmatpush1.msra.mxu0 0.0
    %1346 = vmatprep.subr.mxu0 0.0
    %1347 = vmatpush1.msra.mxu0 0.0
    %1348 = vmatprep.subr.mxu0 0.0
    %1349 = vmatpush1.msra.mxu0 0.0
    %1350 = vmatprep.subr.mxu0 0.0
    %1351 = vmatpush1.msra.mxu0 0.0
    %1352 = vmatprep.subr.mxu0 0.0
    %1353 = vmatpush1.msra.mxu0 0.0
    %1354 = vmatprep.subr.mxu0 0.0
    %1355 = vmatpush1.msra.mxu0 0.0
    %1356 = vmatprep.subr.mxu0 0.0
    %1357 = vmatpush1.msra.mxu0 0.0
    %1358 = vmatprep.subr.mxu0 0.0
    %1359 = vmatpush1.msra.mxu0 0.0
    %1360 = vmatprep.subr.mxu0 0.0
    %1361 = vmatpush1.msra.mxu0 0.0
    %1362 = vmatprep.subr.mxu0 0.0
    %1363 = vmatpush1.msra.mxu0 0.0
    %1364 = vmatprep.subr.mxu0 0.0
    %1365 = vmatpush1.msra.mxu0 0.0
    %1366 = vmatprep.subr.mxu0 0.0
    %1367 = vmatpush1.msra.mxu0 0.0
    %1368 = vmatprep.subr.mxu0 0.0
    %1369 = vmatpush1.msra.mxu0 0.0
    %1370 = vmatprep.subr.mxu0 0.0
    %1371 = vmatpush1.msra.mxu0 0.0
    %1372 = vmatprep.subr.mxu0 0.0
    %1373 = vmatpush1.msra.mxu0 0.0
    %1374 = vmatprep.subr.mxu0 0.0
    %1375 = vmatpush1.msra.mxu0 0.0
    %1376 = vmatprep.subr.mxu0 0.0
    %1377 = vmatpush1.msra.mxu0 0.0
    %1378 = vmatprep.subr.mxu0 0.0
    %1379 = vmatpush1.msra.mxu0 0.0
    %1380 = vmatprep.subr.mxu0 0.0
    %1381 = vmatpush1.msra.mxu0 0.0
    %1382 = vmatprep.subr.mxu0 0.0
    %1383 = vmatpush1.msra.mxu0 0.0
    %1384 = vmatprep.subr.mxu0 0.0
    %1385 = vmatpush1.msra.mxu0 0.0
    %1386 = vmatprep.subr.mxu0 0.0
    %1387 = vmatpush1.msra.mxu0 0.0
    %1388 = vmatprep.subr.mxu0 0.0
    %1389 = vmatpush1.msra.mxu0 0.0
    %1390 = vmatprep.mubr.f32.mxu0 0.0
    %1391 = vmatmul.mubr.f32.gmra.mrb[0].mxu0 %v1320
    %v1392 = vpop.f32.mrb[0].mxu0
    %v1393 = vadd.f32 %v1316, %v1392
    %v1394 = vpop.f32.mrb[0].mxu0
    %1395 = vdwg.mxu0
    %v1396 = vmax.f32 %v1393, 0.0
    %v1397 = vld [vmem:[%s7] sm:$0xff]
    %v1398 = vld [vmem:[%s7 + $0x8] sm:$0xff]
    %v1399 = vld [vmem:[%s7 + $0x10] sm:$0xff]
    %v1400 = vld [vmem:[%s7 + $0x18] sm:$0xff]
    %v1401 = vld [vmem:[%s7 + $0x20] sm:$0xff]
    %v1402 = vld [vmem:[%s7 + $0x28] sm:$0xff]
    %v1403 = vld [vmem:[%s7 + $0x30] sm:$0xff]
    %v1404 = vld [vmem:[%s7 + $0x38] sm:$0xff]
    %v1405 = vld [vmem:[%s8] sm:$0xff]
    %v1406 = vld [vmem:[%s8 + $0x8] sm:$0xff]
    %v1407 = vld [vmem:[%s8 + $0x10] sm:$0xff]
    %v1408 = vld [vmem:[%s8 + $0x18] sm:$0xff]
    %v1409 = vld [vmem:[%s8 + $0x20] sm:$0xff]
    %v1410 = vld [vmem:[%s8 + $0x28] sm:$0xff]
    %v1411 = vld [vmem:[%s8 + $0x30] sm:$0xff]
    %v1412 = vld [vmem:[%s8 + $0x38] sm:$0xff]
    %v1413 = vld [vmem:[%s8 + $0x40] sm:$0xff]
    %v1414 = vld [vmem:[%s8 + $0x48] sm:$0xff]
    %v1415 = vld [vmem:[%s8 + $0x50] sm:$0xff]
    %v1416 = vld [vmem:[%s8 + $0x58] sm:$0xff]
    %v1417 = vld [vmem:[%s8 + $0x60] sm:$0xff]
    %v1418 = vld [vmem:[%s8 + $0x68] sm:$0xff]
    %v1419 = vld [vmem:[%s8 + $0x70] sm:$0xff]
    %v1420 = vld [vmem:[%s8 + $0x78] sm:$0xff]
    %1421 = vmatprep.subr.mxu0 0.0
    %1422 = vmatpush1.msra.mxu0 %v1405
    %1423 = vmatprep.subr.mxu0 0.0
    %1424 = vmatpush1.msra.mxu0 %v1406
    %1425 = vmatprep.subr.mxu0 0.0
    %1426 = vmatpush1.msra.mxu0 %v1407
    %1427 = vmatprep.subr.mxu0 0.0
    %1428 = vmatpush1.msra.mxu0 %v1408
    %1429 = vmatprep.subr.mxu0 0.0
    %1430 = vmatpush1.msra.mxu0 %v1409
    %1431 = vmatprep.subr.mxu0 0.0
    %1432 = vmatpush1.msra.mxu0 %v1410
    %1433 = vmatprep.subr.mxu0 0.0
    %1434 = vmatpush1.msra.mxu0 %v1411
    %1435 = vmatprep.subr.mxu0 0.0
    %1436 = vmatpush1.msra.mxu0 %v1412
    %1437 = vmatprep.subr.mxu0 0.0
    %1438 = vmatpush1.msra.mxu0 %v1413
    %1439 = vmatprep.subr.mxu0 0.0
    %1440 = vmatpush1.msra.mxu0 %v1414
    %1441 = vmatprep.subr.mxu0 0.0
    %1442 = vmatpush1.msra.mxu0 %v1415
    %1443 = vmatprep.subr.mxu0 0.0
    %1444 = vmatpush1.msra.mxu0 %v1416
    %1445 = vmatprep.subr.mxu0 0.0
    %1446 = vmatpush1.msra.mxu0 %v1417
    %1447 = vmatprep.subr.mxu0 0.0
    %1448 = vmatpush1.msra.mxu0 %v1418
    %1449 = vmatprep.subr.mxu0 0.0
    %1450 = vmatpush1.msra.mxu0 %v1419
    %1451 = vmatprep.subr.mxu0 0.0
    %1452 = vmatpush1.msra.mxu0 %v1420
    %1453 = vmatprep.subr.mxu0 0.0
    %1454 = vmatpush1.msra.mxu0 0.0
    %1455 = vmatprep.subr.mxu0 0.0
    %1456 = vmatpush1.msra.mxu0 0.0
    %1457 = vmatprep.subr.mxu0 0.0
    %1458 = vmatpush1.msra.mxu0 0.0
    %1459 = vmatprep.subr.mxu0 0.0
    %1460 = vmatpush1.msra.mxu0 0.0
    %1461 = vmatprep.subr.mxu0 0.0
    %1462 = vmatpush1.msra.mxu0 0.0
    %1463 = vmatprep.subr.mxu0 0.0
    %1464 = vmatpush1.msra.mxu0 0.0
    %1465 = vmatprep.subr.mxu0 0.0
    %1466 = vmatpush1.msra.mxu0 0.0
    %1467 = vmatprep.subr.mxu0 0.0
    %1468 = vmatpush1.msra.mxu0 0.0
    %1469 = vmatprep.subr.mxu0 0.0
    %1470 = vmatpush1.msra.mxu0 0.0
    %1471 = vmatprep.subr.mxu0 0.0
    %1472 = vmatpush1.msra.mxu0 0.0
    %1473 = vmatprep.subr.mxu0 0.0
    %1474 = vmatpush1.msra.mxu0 0.0
    %1475 = vmatprep.subr.mxu0 0.0
    %1476 = vmatpush1.msra.mxu0 0.0
    %1477 = vmatprep.subr.mxu0 0.0
    %1478 = vmatpush1.msra.mxu0 0.0
    %1479 = vmatprep.subr.mxu0 0.0
    %1480 = vmatpush1.msra.mxu0 0.0
    %1481 = vmatprep.subr.mxu0 0.0
    %1482 = vmatpush1.msra.mxu0 0.0
    %1483 = vmatprep.subr.mxu0 0.0
    %1484 = vmatpush1.msra.mxu0 0.0
    %1485 = vmatprep.mubr.f32.mxu0 0.0
    %1486 = vmatmul.mubr.f32.gmra.mrb[0].mxu0 %v1308
    %v1487 = vpop.f32.mrb[0].mxu0
    %v1488 = vadd.f32 0.0, %v1487
    %v1489 = vpop.f32.mrb[0].mxu0
    %1490 = vdwg.mxu0
    %vm1491 = vcmask 523264
    %v1493 = vsel %vm1491, %v1396, 0
    %1495 = vmatprep.subr.mxu0 0.0
    %1496 = vmatpush1.msra.mxu0 %v1397
    %1497 = vmatprep.subr.mxu0 0.0
    %1498 = vmatpush1.msra.mxu0 %v1398
    %1499 = vmatprep.subr.mxu0 0.0
    %1500 = vmatpush1.msra.mxu0 %v1399
    %1501 = vmatprep.subr.mxu0 0.0
    %1502 = vmatpush1.msra.mxu0 %v1400
    %1503 = vmatprep.subr.mxu0 0.0
    %1504 = vmatpush1.msra.mxu0 %v1401
    %1505 = vmatprep.subr.mxu0 0.0
    %1506 = vmatpush1.msra.mxu0 %v1402
    %1507 = vmatprep.subr.mxu0 0.0
    %1508 = vmatpush1.msra.mxu0 %v1403
    %1509 = vmatprep.subr.mxu0 0.0
    %1510 = vmatpush1.msra.mxu0 %v1404
    %1511 = vmatprep.subr.mxu0 0.0
    %1512 = vmatpush1.msra.mxu0 0.0
    %1513 = vmatprep.subr.mxu0 0.0
    %1514 = vmatpush1.msra.mxu0 0.0
    %1515 = vmatprep.subr.mxu0 0.0
    %1516 = vmatpush1.msra.mxu0 0.0
    %1517 = vmatprep.subr.mxu0 0.0
    %1518 = vmatpush1.msra.mxu0 0.0
    %1519 = vmatprep.subr.mxu0 0.0
    %1520 = vmatpush1.msra.mxu0 0.0
    %1521 = vmatprep.subr.mxu0 0.0
    %1522 = vmatpush1.msra.mxu0 0.0
    %1523 = vmatprep.subr.mxu0 0.0
    %1524 = vmatpush1.msra.mxu0 0.0
    %1525 = vmatprep.subr.mxu0 0.0
    %1526 = vmatpush1.msra.mxu0 0.0
    %1527 = vmatprep.subr.mxu0 0.0
    %1528 = vmatpush1.msra.mxu0 0.0
    %1529 = vmatprep.subr.mxu0 0.0
    %1530 = vmatpush1.msra.mxu0 0.0
    %1531 = vmatprep.subr.mxu0 0.0
    %1532 = vmatpush1.msra.mxu0 0.0
    %1533 = vmatprep.subr.mxu0 0.0
    %1534 = vmatpush1.msra.mxu0 0.0
    %1535 = vmatprep.subr.mxu0 0.0
    %1536 = vmatpush1.msra.mxu0 0.0
    %1537 = vmatprep.subr.mxu0 0.0
    %1538 = vmatpush1.msra.mxu0 0.0
    %1539 = vmatprep.subr.mxu0 0.0
    %1540 = vmatpush1.msra.mxu0 0.0
    %1541 = vmatprep.subr.mxu0 0.0
    %1542 = vmatpush1.msra.mxu0 0.0
    %1543 = vmatprep.subr.mxu0 0.0
    %1544 = vmatpush1.msra.mxu0 0.0
    %1545 = vmatprep.subr.mxu0 0.0
    %1546 = vmatpush1.msra.mxu0 0.0
    %1547 = vmatprep.subr.mxu0 0.0
    %1548 = vmatpush1.msra.mxu0 0.0
    %1549 = vmatprep.subr.mxu0 0.0
    %1550 = vmatpush1.msra.mxu0 0.0
    %1551 = vmatprep.subr.mxu0 0.0
    %1552 = vmatpush1.msra.mxu0 0.0
    %1553 = vmatprep.subr.mxu0 0.0
    %1554 = vmatpush1.msra.mxu0 0.0
    %1555 = vmatprep.subr.mxu0 0.0
    %1556 = vmatpush1.msra.mxu0 0.0
    %1557 = vmatprep.subr.mxu0 0.0
    %1558 = vmatpush1.msra.mxu0 0.0
    %1559 = vmatprep.mubr.f32.mxu0 0.0
    %1560 = vmatmul.mubr.f32.gmra.mrb[0].mxu0 %v1493
    %v1561 = vpop.f32.mrb[0].mxu0
    %v1562 = vadd.f32 %v1488, %v1561
    %v1563 = vpop.f32.mrb[0].mxu0
    %1564 = vdwg.mxu0
    %v1565 = vld [vmem:[%s9] sm:$0x1]
    %v1567 = vlaneseq
    %v1568 = vshrl.u32 %v1567, 7
    %v1569 = vsub.s32 0, %v1568
    %v1570 = vrot.slane %v1565, %v1569
    %v1572 = vadd.f32 %v1562, %v1570
    %1573 = vst [vmem:[%s10] sm:$0xff] %v1572
  $region49: #{_lambda_.3} parent=0 // pred_fallthru
    _
  // Predicated region
  $region50: #{_lambda_.3} parent=0 // pred_check
    _
  $region51: #{_lambda_.3} parent=0 // pred_check_branch
    %1575 = sbr.rel (0) target = $region53
  $region52: #{_lambda_.3} parent=0 // pred_region
    _
  $region53: #{_lambda_.3} parent=0 // pred_fallthru
    _
  // Predicated region
  $region54: #{_lambda_.3} parent=0 // pred_check
    _
  $region55: #{_lambda_.3} parent=0 // pred_check_branch
    %1577 = sbr.rel (0) target = $region57
  $region56: #{_lambda_.3} parent=0 // pred_region
    _
  $region57: #{_lambda_.3} parent=0 // pred_fallthru
    _

</llo_original>
